<compile_context>
chip_gen: v5e
topology: v5e:2x2
jax: 0.10.0
libtpu: 0.0.40
codegen_flags: <defaults>
</compile_context>

<pallas_src>
import jax
import jax.numpy as jnp
from jax import lax
from jax.experimental import pallas as pl
from jax.experimental.pallas import tpu as pltpu


def _ceil_half(n):
    return -(-n // 2)


def _pool_once(x, h, w):
    """One 2x2/stride-2 avg pool (count_include_pad=False, ceil_mode=True).

    x: (tc, h, w) float32 value. Returns (tc, ceil(h/2), ceil(w/2)) float32.
    The reduction is done as two batched matmuls against constant pooling
    matrices with the reciprocal window counts (0.5 or 1.0, exact powers of
    two) folded in, so odd H/W edges need no padding, masking, or divide.
    """
    tc = x.shape[0]
    ho, wo = _ceil_half(h), _ceil_half(w)

    # Column (W) pooling matrix, shape (w, wo): column j sums input cols
    # 2j and 2j+1 (the latter only exists if 2j+1 < w), scaled by 1/count.
    s_idx = lax.broadcasted_iota(jnp.int32, (w, wo), 0)
    j_idx = lax.broadcasted_iota(jnp.int32, (w, wo), 1)
    c_scale = jnp.where(2 * j_idx + 1 < w, 0.5, 1.0).astype(jnp.float32)
    pw = jnp.where((s_idx == 2 * j_idx) | (s_idx == 2 * j_idx + 1), c_scale, 0.0)

    # Row (H) pooling matrix, shape (ho, h): row i sums input rows 2i, 2i+1.
    i_idx = lax.broadcasted_iota(jnp.int32, (ho, h), 0)
    r_idx = lax.broadcasted_iota(jnp.int32, (ho, h), 1)
    r_scale = jnp.where(2 * i_idx + 1 < h, 0.5, 1.0).astype(jnp.float32)
    ph = jnp.where((r_idx == 2 * i_idx) | (r_idx == 2 * i_idx + 1), r_scale, 0.0)

    pw_b = jnp.broadcast_to(pw, (tc, w, wo))
    ph_b = jnp.broadcast_to(ph, (tc, ho, h))

    # W reduction on the MXU: (tc, h, w) x (tc, w, wo) -> (tc, h, wo)
    t = lax.dot_general(
        x, pw_b, (((2,), (1,)), ((0,), (0,))),
        precision=lax.Precision.HIGHEST,
        preferred_element_type=jnp.float32)
    # H reduction on the MXU: (tc, ho, h) x (tc, h, wo) -> (tc, ho, wo)
    y = lax.dot_general(
        ph_b, t, (((2,), (1,)), ((0,), (0,))),
        precision=lax.Precision.HIGHEST,
        preferred_element_type=jnp.float32)
    return y


def _fused_avgpool3_kernel(x_ref, s1_ref, s2_ref, s3_ref):
    """x_ref: (tc, H, W); s_k_ref: (tc, ceil(H/2^k), ceil(W/2^k))."""
    tc, h, w = x_ref.shape
    x = x_ref[...].astype(jnp.float32)

    y1 = _pool_once(x, h, w)
    s1_ref[...] = y1.astype(s1_ref.dtype)

    y2 = _pool_once(y1, y1.shape[1], y1.shape[2])
    s2_ref[...] = y2.astype(s2_ref.dtype)

    y3 = _pool_once(y2, y2.shape[1], y2.shape[2])
    s3_ref[...] = y3.astype(s3_ref.dtype)


def avgpool_module(x, *, max_block_bytes=2 * 1024 * 1024):
    """Forward pass of `AvgPool`: three cascaded 2x2 ceil-mode avg pools,
    fused into a single Pallas call returning (s1, s2, s3)."""
    n, c, h, w = x.shape
    h1, w1 = _ceil_half(h), _ceil_half(w)
    h2, w2 = _ceil_half(h1), _ceil_half(w1)
    h3, w3 = _ceil_half(h2), _ceil_half(w2)

    # Channel tile: largest divisor of C whose input block fits the budget
    # (keeps double-buffered blocks well under the v5e 16 MiB scoped VMEM).
    itemsize = jnp.dtype(x.dtype).itemsize
    per_channel_bytes = h * w * itemsize
    tc = 1
    for d in range(1, c + 1):
        if c % d == 0 and d * per_channel_bytes <= max_block_bytes:
            tc = d

    imap = lambda i, j: (i, j, 0, 0)
    out_shapes = (
        jax.ShapeDtypeStruct((n, c, h1, w1), x.dtype),
        jax.ShapeDtypeStruct((n, c, h2, w2), x.dtype),
        jax.ShapeDtypeStruct((n, c, h3, w3), x.dtype),
    )

    return pl.pallas_call(
        _fused_avgpool3_kernel,
        out_shape=out_shapes,
        grid=(n, c // tc),
        in_specs=[pl.BlockSpec((None, tc, h, w), imap)],
        out_specs=(
            pl.BlockSpec((None, tc, h1, w1), imap),
            pl.BlockSpec((None, tc, h2, w2), imap),
            pl.BlockSpec((None, tc, h3, w3), imap),
        ),
        compiler_params=pltpu.CompilerParams(
            dimension_semantics=("parallel", "parallel")),
    )(x)


def _ref_avgpool2x2(x):
    """Pure-JAX reference (count_include_pad=False, ceil_mode=True)."""
    n, c, h, w = x.shape
    ho, wo = _ceil_half(h), _ceil_half(w)
    xp = jnp.pad(x, ((0, 0), (0, 0), (0, 2 * ho - h), (0, 2 * wo - w)))
    xr = xp.reshape(n, c, ho, 2, wo, 2)
    ssum = xr.sum(axis=(3, 5))
    rcnt = jnp.where(2 * jnp.arange(ho) + 1 < h, 2, 1)[:, None]
    ccnt = jnp.where(2 * jnp.arange(wo) + 1 < w, 2, 1)[None, :]
    return ssum / (rcnt * ccnt).astype(x.dtype)


if __name__ == "__main__":
    key = jax.random.PRNGKey(0)
    # Small NCHW input consistent with the module's forward.
    x = jax.random.normal(key, (2, 4, 16, 16), dtype=jnp.float32)

    s1, s2, s3 = jax.block_until_ready(avgpool_module(x))

    # Shape checks (ceil_mode halving).
    assert s1.shape == (2, 4, 8, 8)
    assert s2.shape == (2, 4, 4, 4)
    assert s3.shape == (2, 4, 2, 2)

    # Numerical check against pure-JAX reference.
    r1 = _ref_avgpool2x2(x)
    r2 = _ref_avgpool2x2(r1)
    r3 = _ref_avgpool2x2(r2)
    assert jnp.allclose(s1, r1, atol=1e-5, rtol=1e-5)
    assert jnp.allclose(s2, r2, atol=1e-5, rtol=1e-5)
    assert jnp.allclose(s3, r3, atol=1e-5, rtol=1e-5)

    print("KERNEL_OK")
</pallas_src>

<mosaic_0001>
module attributes {stable_mosaic.version = 11 : i64} {
  func.func @_fused_avgpool3_kernel(%arg0: i32, %arg1: i32, %arg2: memref<1x4x16x16xf32, #tpu.memory_space<vmem>>, %arg3: memref<1x4x8x8xf32, #tpu.memory_space<vmem>>, %arg4: memref<1x4x4x4xf32, #tpu.memory_space<vmem>>, %arg5: memref<1x4x2x2xf32, #tpu.memory_space<vmem>>) attributes {dimension_semantics = [#tpu.dimension_semantics<parallel>, #tpu.dimension_semantics<parallel>], iteration_bounds = array<i64: 2, 1>, scalar_prefetch = 0 : i64, scratch_operands = 0 : i64, tpu.core_type = #tpu.core_type<tc>, window_params = [{transform_indices = @transform_0, window_bounds = array<i64: 1, 4, 16, 16>}, {transform_indices = @transform_1, window_bounds = array<i64: 1, 4, 8, 8>}, {transform_indices = @transform_2, window_bounds = array<i64: 1, 4, 4, 4>}, {transform_indices = @transform_3, window_bounds = array<i64: 1, 4, 2, 2>}]} {
    %c0 = arith.constant 0 : index
    %c0_0 = arith.constant 0 : index
    %c0_1 = arith.constant 0 : index
    %c0_2 = arith.constant 0 : index
    %0 = vector.load %arg2[%c0, %c0_0, %c0_1, %c0_2] : memref<1x4x16x16xf32, #tpu.memory_space<vmem>>, vector<1x4x16x16xf32>
    %1 = vector.shape_cast %0 : vector<1x4x16x16xf32> to vector<4x16x16xf32>
    %2 = tpu.iota {dimensions = array<i32: 0>} : vector<16x8xi32>
    %3 = tpu.iota {dimensions = array<i32: 1>} : vector<16x8xi32>
    %c2_i32 = arith.constant 2 : i32
    %4 = vector.broadcast %c2_i32 : i32 to vector<16x8xi32>
    %5 = arith.muli %4, %3 : vector<16x8xi32>
    %c1_i32 = arith.constant 1 : i32
    %6 = vector.broadcast %c1_i32 : i32 to vector<16x8xi32>
    %7 = arith.addi %5, %6 : vector<16x8xi32>
    %c16_i32 = arith.constant 16 : i32
    %8 = vector.broadcast %c16_i32 : i32 to vector<16x8xi32>
    %9 = arith.cmpi slt, %7, %8 : vector<16x8xi32>
    %cst = arith.constant 5.000000e-01 : f32
    %cst_3 = arith.constant 1.000000e+00 : f32
    %10 = vector.broadcast %cst : f32 to vector<16x8xf32>
    %11 = vector.broadcast %cst_3 : f32 to vector<16x8xf32>
    %12 = arith.select %9, %10, %11 : vector<16x8xi1>, vector<16x8xf32>
    %c2_i32_4 = arith.constant 2 : i32
    %13 = vector.broadcast %c2_i32_4 : i32 to vector<16x8xi32>
    %14 = arith.muli %13, %3 : vector<16x8xi32>
    %15 = arith.cmpi eq, %2, %14 : vector<16x8xi32>
    %c2_i32_5 = arith.constant 2 : i32
    %16 = vector.broadcast %c2_i32_5 : i32 to vector<16x8xi32>
    %17 = arith.muli %16, %3 : vector<16x8xi32>
    %c1_i32_6 = arith.constant 1 : i32
    %18 = vector.broadcast %c1_i32_6 : i32 to vector<16x8xi32>
    %19 = arith.addi %17, %18 : vector<16x8xi32>
    %20 = arith.cmpi eq, %2, %19 : vector<16x8xi32>
    %21 = arith.ori %15, %20 : vector<16x8xi1>
    %cst_7 = arith.constant 0.000000e+00 : f32
    %22 = vector.broadcast %cst_7 : f32 to vector<16x8xf32>
    %23 = arith.select %21, %12, %22 : vector<16x8xi1>, vector<16x8xf32>
    %24 = tpu.iota {dimensions = array<i32: 0>} : vector<8x16xi32>
    %25 = tpu.iota {dimensions = array<i32: 1>} : vector<8x16xi32>
    %c2_i32_8 = arith.constant 2 : i32
    %26 = vector.broadcast %c2_i32_8 : i32 to vector<8x16xi32>
    %27 = arith.muli %26, %24 : vector<8x16xi32>
    %c1_i32_9 = arith.constant 1 : i32
    %28 = vector.broadcast %c1_i32_9 : i32 to vector<8x16xi32>
    %29 = arith.addi %27, %28 : vector<8x16xi32>
    %c16_i32_10 = arith.constant 16 : i32
    %30 = vector.broadcast %c16_i32_10 : i32 to vector<8x16xi32>
    %31 = arith.cmpi slt, %29, %30 : vector<8x16xi32>
    %cst_11 = arith.constant 5.000000e-01 : f32
    %cst_12 = arith.constant 1.000000e+00 : f32
    %32 = vector.broadcast %cst_11 : f32 to vector<8x16xf32>
    %33 = vector.broadcast %cst_12 : f32 to vector<8x16xf32>
    %34 = arith.select %31, %32, %33 : vector<8x16xi1>, vector<8x16xf32>
    %c2_i32_13 = arith.constant 2 : i32
    %35 = vector.broadcast %c2_i32_13 : i32 to vector<8x16xi32>
    %36 = arith.muli %35, %24 : vector<8x16xi32>
    %37 = arith.cmpi eq, %25, %36 : vector<8x16xi32>
    %c2_i32_14 = arith.constant 2 : i32
    %38 = vector.broadcast %c2_i32_14 : i32 to vector<8x16xi32>
    %39 = arith.muli %38, %24 : vector<8x16xi32>
    %c1_i32_15 = arith.constant 1 : i32
    %40 = vector.broadcast %c1_i32_15 : i32 to vector<8x16xi32>
    %41 = arith.addi %39, %40 : vector<8x16xi32>
    %42 = arith.cmpi eq, %25, %41 : vector<8x16xi32>
    %43 = arith.ori %37, %42 : vector<8x16xi1>
    %cst_16 = arith.constant 0.000000e+00 : f32
    %44 = vector.broadcast %cst_16 : f32 to vector<8x16xf32>
    %45 = arith.select %43, %34, %44 : vector<8x16xi1>, vector<8x16xf32>
    %46 = vector.shape_cast %23 : vector<16x8xf32> to vector<1x16x8xf32>
    %47 = vector.broadcast %46 : vector<1x16x8xf32> to vector<4x16x8xf32>
    %48 = vector.shape_cast %45 : vector<8x16xf32> to vector<1x8x16xf32>
    %49 = vector.broadcast %48 : vector<1x8x16xf32> to vector<4x8x16xf32>
    %cst_17 = arith.constant dense<0.000000e+00> : vector<4x16x8xf32>
    %50 = tpu.matmul %1, %47, %cst_17 {dimension_numbers = #tpu.dot_dimension_numbers<[2], [1], [1], [2], [0, 0, 0, 1, 1, 2], [0], [0]>, precision = #tpu.contract_precision<fp32>} : vector<4x16x16xf32>, vector<4x16x8xf32>, vector<4x16x8xf32> -> vector<4x16x8xf32>
    %cst_18 = arith.constant dense<0.000000e+00> : vector<4x8x8xf32>
    %51 = tpu.matmul %49, %50, %cst_18 {dimension_numbers = #tpu.dot_dimension_numbers<[2], [1], [1], [2], [0, 0, 0, 1, 1, 2], [0], [0]>, precision = #tpu.contract_precision<fp32>} : vector<4x8x16xf32>, vector<4x16x8xf32>, vector<4x8x8xf32> -> vector<4x8x8xf32>
    %c0_19 = arith.constant 0 : index
    %c0_20 = arith.constant 0 : index
    %c0_21 = arith.constant 0 : index
    %c0_22 = arith.constant 0 : index
    %52 = vector.load %arg3[%c0_19, %c0_20, %c0_21, %c0_22] : memref<1x4x8x8xf32, #tpu.memory_space<vmem>>, vector<1x4x8x8xf32>
    %53 = vector.shape_cast %52 : vector<1x4x8x8xf32> to vector<4x8x8xf32>
    %54 = vector.shape_cast %51 : vector<4x8x8xf32> to vector<1x4x8x8xf32>
    tpu.vector_store %arg3[%c0_19, %c0_20, %c0_21, %c0_22], %54 {strides = array<i32>} : memref<1x4x8x8xf32, #tpu.memory_space<vmem>>, vector<1x4x8x8xf32>,
    %55 = tpu.iota {dimensions = array<i32: 0>} : vector<8x4xi32>
    %56 = tpu.iota {dimensions = array<i32: 1>} : vector<8x4xi32>
    %c2_i32_23 = arith.constant 2 : i32
    %57 = vector.broadcast %c2_i32_23 : i32 to vector<8x4xi32>
    %58 = arith.muli %57, %56 : vector<8x4xi32>
    %c1_i32_24 = arith.constant 1 : i32
    %59 = vector.broadcast %c1_i32_24 : i32 to vector<8x4xi32>
    %60 = arith.addi %58, %59 : vector<8x4xi32>
    %c8_i32 = arith.constant 8 : i32
    %61 = vector.broadcast %c8_i32 : i32 to vector<8x4xi32>
    %62 = arith.cmpi slt, %60, %61 : vector<8x4xi32>
    %cst_25 = arith.constant 5.000000e-01 : f32
    %cst_26 = arith.constant 1.000000e+00 : f32
    %63 = vector.broadcast %cst_25 : f32 to vector<8x4xf32>
    %64 = vector.broadcast %cst_26 : f32 to vector<8x4xf32>
    %65 = arith.select %62, %63, %64 : vector<8x4xi1>, vector<8x4xf32>
    %c2_i32_27 = arith.constant 2 : i32
    %66 = vector.broadcast %c2_i32_27 : i32 to vector<8x4xi32>
    %67 = arith.muli %66, %56 : vector<8x4xi32>
    %68 = arith.cmpi eq, %55, %67 : vector<8x4xi32>
    %c2_i32_28 = arith.constant 2 : i32
    %69 = vector.broadcast %c2_i32_28 : i32 to vector<8x4xi32>
    %70 = arith.muli %69, %56 : vector<8x4xi32>
    %c1_i32_29 = arith.constant 1 : i32
    %71 = vector.broadcast %c1_i32_29 : i32 to vector<8x4xi32>
    %72 = arith.addi %70, %71 : vector<8x4xi32>
    %73 = arith.cmpi eq, %55, %72 : vector<8x4xi32>
    %74 = arith.ori %68, %73 : vector<8x4xi1>
    %cst_30 = arith.constant 0.000000e+00 : f32
    %75 = vector.broadcast %cst_30 : f32 to vector<8x4xf32>
    %76 = arith.select %74, %65, %75 : vector<8x4xi1>, vector<8x4xf32>
    %77 = tpu.iota {dimensions = array<i32: 0>} : vector<4x8xi32>
    %78 = tpu.iota {dimensions = array<i32: 1>} : vector<4x8xi32>
    %c2_i32_31 = arith.constant 2 : i32
    %79 = vector.broadcast %c2_i32_31 : i32 to vector<4x8xi32>
    %80 = arith.muli %79, %77 : vector<4x8xi32>
    %c1_i32_32 = arith.constant 1 : i32
    %81 = vector.broadcast %c1_i32_32 : i32 to vector<4x8xi32>
    %82 = arith.addi %80, %81 : vector<4x8xi32>
    %c8_i32_33 = arith.constant 8 : i32
    %83 = vector.broadcast %c8_i32_33 : i32 to vector<4x8xi32>
    %84 = arith.cmpi slt, %82, %83 : vector<4x8xi32>
    %cst_34 = arith.constant 5.000000e-01 : f32
    %cst_35 = arith.constant 1.000000e+00 : f32
    %85 = vector.broadcast %cst_34 : f32 to vector<4x8xf32>
    %86 = vector.broadcast %cst_35 : f32 to vector<4x8xf32>
    %87 = arith.select %84, %85, %86 : vector<4x8xi1>, vector<4x8xf32>
    %c2_i32_36 = arith.constant 2 : i32
    %88 = vector.broadcast %c2_i32_36 : i32 to vector<4x8xi32>
    %89 = arith.muli %88, %77 : vector<4x8xi32>
    %90 = arith.cmpi eq, %78, %89 : vector<4x8xi32>
    %c2_i32_37 = arith.constant 2 : i32
    %91 = vector.broadcast %c2_i32_37 : i32 to vector<4x8xi32>
    %92 = arith.muli %91, %77 : vector<4x8xi32>
    %c1_i32_38 = arith.constant 1 : i32
    %93 = vector.broadcast %c1_i32_38 : i32 to vector<4x8xi32>
    %94 = arith.addi %92, %93 : vector<4x8xi32>
    %95 = arith.cmpi eq, %78, %94 : vector<4x8xi32>
    %96 = arith.ori %90, %95 : vector<4x8xi1>
    %cst_39 = arith.constant 0.000000e+00 : f32
    %97 = vector.broadcast %cst_39 : f32 to vector<4x8xf32>
    %98 = arith.select %96, %87, %97 : vector<4x8xi1>, vector<4x8xf32>
    %99 = vector.shape_cast %76 : vector<8x4xf32> to vector<1x8x4xf32>
    %100 = vector.broadcast %99 : vector<1x8x4xf32> to vector<4x8x4xf32>
    %101 = vector.shape_cast %98 : vector<4x8xf32> to vector<1x4x8xf32>
    %102 = vector.broadcast %101 : vector<1x4x8xf32> to vector<4x4x8xf32>
    %cst_40 = arith.constant dense<0.000000e+00> : vector<4x8x4xf32>
    %103 = tpu.matmul %51, %100, %cst_40 {dimension_numbers = #tpu.dot_dimension_numbers<[2], [1], [1], [2], [0, 0, 0, 1, 1, 2], [0], [0]>, precision = #tpu.contract_precision<fp32>} : vector<4x8x8xf32>, vector<4x8x4xf32>, vector<4x8x4xf32> -> vector<4x8x4xf32>
    %cst_41 = arith.constant dense<0.000000e+00> : vector<4x4x4xf32>
    %104 = tpu.matmul %102, %103, %cst_41 {dimension_numbers = #tpu.dot_dimension_numbers<[2], [1], [1], [2], [0, 0, 0, 1, 1, 2], [0], [0]>, precision = #tpu.contract_precision<fp32>} : vector<4x4x8xf32>, vector<4x8x4xf32>, vector<4x4x4xf32> -> vector<4x4x4xf32>
    %c0_42 = arith.constant 0 : index
    %c0_43 = arith.constant 0 : index
    %c0_44 = arith.constant 0 : index
    %c0_45 = arith.constant 0 : index
    %105 = vector.load %arg4[%c0_42, %c0_43, %c0_44, %c0_45] : memref<1x4x4x4xf32, #tpu.memory_space<vmem>>, vector<1x4x4x4xf32>
    %106 = vector.shape_cast %105 : vector<1x4x4x4xf32> to vector<4x4x4xf32>
    %107 = vector.shape_cast %104 : vector<4x4x4xf32> to vector<1x4x4x4xf32>
    tpu.vector_store %arg4[%c0_42, %c0_43, %c0_44, %c0_45], %107 {strides = array<i32>} : memref<1x4x4x4xf32, #tpu.memory_space<vmem>>, vector<1x4x4x4xf32>,
    %108 = tpu.iota {dimensions = array<i32: 0>} : vector<4x2xi32>
    %109 = tpu.iota {dimensions = array<i32: 1>} : vector<4x2xi32>
    %c2_i32_46 = arith.constant 2 : i32
    %110 = vector.broadcast %c2_i32_46 : i32 to vector<4x2xi32>
    %111 = arith.muli %110, %109 : vector<4x2xi32>
    %c1_i32_47 = arith.constant 1 : i32
    %112 = vector.broadcast %c1_i32_47 : i32 to vector<4x2xi32>
    %113 = arith.addi %111, %112 : vector<4x2xi32>
    %c4_i32 = arith.constant 4 : i32
    %114 = vector.broadcast %c4_i32 : i32 to vector<4x2xi32>
    %115 = arith.cmpi slt, %113, %114 : vector<4x2xi32>
    %cst_48 = arith.constant 5.000000e-01 : f32
    %cst_49 = arith.constant 1.000000e+00 : f32
    %116 = vector.broadcast %cst_48 : f32 to vector<4x2xf32>
    %117 = vector.broadcast %cst_49 : f32 to vector<4x2xf32>
    %118 = arith.select %115, %116, %117 : vector<4x2xi1>, vector<4x2xf32>
    %c2_i32_50 = arith.constant 2 : i32
    %119 = vector.broadcast %c2_i32_50 : i32 to vector<4x2xi32>
    %120 = arith.muli %119, %109 : vector<4x2xi32>
    %121 = arith.cmpi eq, %108, %120 : vector<4x2xi32>
    %c2_i32_51 = arith.constant 2 : i32
    %122 = vector.broadcast %c2_i32_51 : i32 to vector<4x2xi32>
    %123 = arith.muli %122, %109 : vector<4x2xi32>
    %c1_i32_52 = arith.constant 1 : i32
    %124 = vector.broadcast %c1_i32_52 : i32 to vector<4x2xi32>
    %125 = arith.addi %123, %124 : vector<4x2xi32>
    %126 = arith.cmpi eq, %108, %125 : vector<4x2xi32>
    %127 = arith.ori %121, %126 : vector<4x2xi1>
    %cst_53 = arith.constant 0.000000e+00 : f32
    %128 = vector.broadcast %cst_53 : f32 to vector<4x2xf32>
    %129 = arith.select %127, %118, %128 : vector<4x2xi1>, vector<4x2xf32>
    %130 = tpu.iota {dimensions = array<i32: 0>} : vector<2x4xi32>
    %131 = tpu.iota {dimensions = array<i32: 1>} : vector<2x4xi32>
    %c2_i32_54 = arith.constant 2 : i32
    %132 = vector.broadcast %c2_i32_54 : i32 to vector<2x4xi32>
    %133 = arith.muli %132, %130 : vector<2x4xi32>
    %c1_i32_55 = arith.constant 1 : i32
    %134 = vector.broadcast %c1_i32_55 : i32 to vector<2x4xi32>
    %135 = arith.addi %133, %134 : vector<2x4xi32>
    %c4_i32_56 = arith.constant 4 : i32
    %136 = vector.broadcast %c4_i32_56 : i32 to vector<2x4xi32>
    %137 = arith.cmpi slt, %135, %136 : vector<2x4xi32>
    %cst_57 = arith.constant 5.000000e-01 : f32
    %cst_58 = arith.constant 1.000000e+00 : f32
    %138 = vector.broadcast %cst_57 : f32 to vector<2x4xf32>
    %139 = vector.broadcast %cst_58 : f32 to vector<2x4xf32>
    %140 = arith.select %137, %138, %139 : vector<2x4xi1>, vector<2x4xf32>
    %c2_i32_59 = arith.constant 2 : i32
    %141 = vector.broadcast %c2_i32_59 : i32 to vector<2x4xi32>
    %142 = arith.muli %141, %130 : vector<2x4xi32>
    %143 = arith.cmpi eq, %131, %142 : vector<2x4xi32>
    %c2_i32_60 = arith.constant 2 : i32
    %144 = vector.broadcast %c2_i32_60 : i32 to vector<2x4xi32>
    %145 = arith.muli %144, %130 : vector<2x4xi32>
    %c1_i32_61 = arith.constant 1 : i32
    %146 = vector.broadcast %c1_i32_61 : i32 to vector<2x4xi32>
    %147 = arith.addi %145, %146 : vector<2x4xi32>
    %148 = arith.cmpi eq, %131, %147 : vector<2x4xi32>
    %149 = arith.ori %143, %148 : vector<2x4xi1>
    %cst_62 = arith.constant 0.000000e+00 : f32
    %150 = vector.broadcast %cst_62 : f32 to vector<2x4xf32>
    %151 = arith.select %149, %140, %150 : vector<2x4xi1>, vector<2x4xf32>
    %152 = vector.shape_cast %129 : vector<4x2xf32> to vector<1x4x2xf32>
    %153 = vector.broadcast %152 : vector<1x4x2xf32> to vector<4x4x2xf32>
    %154 = vector.shape_cast %151 : vector<2x4xf32> to vector<1x2x4xf32>
    %155 = vector.broadcast %154 : vector<1x2x4xf32> to vector<4x2x4xf32>
    %cst_63 = arith.constant dense<0.000000e+00> : vector<4x4x2xf32>
    %156 = tpu.matmul %104, %153, %cst_63 {dimension_numbers = #tpu.dot_dimension_numbers<[2], [1], [1], [2], [0, 0, 0, 1, 1, 2], [0], [0]>, precision = #tpu.contract_precision<fp32>} : vector<4x4x4xf32>, vector<4x4x2xf32>, vector<4x4x2xf32> -> vector<4x4x2xf32>
    %cst_64 = arith.constant dense<0.000000e+00> : vector<4x2x2xf32>
    %157 = tpu.matmul %155, %156, %cst_64 {dimension_numbers = #tpu.dot_dimension_numbers<[2], [1], [1], [2], [0, 0, 0, 1, 1, 2], [0], [0]>, precision = #tpu.contract_precision<fp32>} : vector<4x2x4xf32>, vector<4x4x2xf32>, vector<4x2x2xf32> -> vector<4x2x2xf32>
    %c0_65 = arith.constant 0 : index
    %c0_66 = arith.constant 0 : index
    %c0_67 = arith.constant 0 : index
    %c0_68 = arith.constant 0 : index
    %158 = vector.load %arg5[%c0_65, %c0_66, %c0_67, %c0_68] : memref<1x4x2x2xf32, #tpu.memory_space<vmem>>, vector<1x4x2x2xf32>
    %159 = vector.shape_cast %158 : vector<1x4x2x2xf32> to vector<4x2x2xf32>
    %160 = vector.shape_cast %157 : vector<4x2x2xf32> to vector<1x4x2x2xf32>
    tpu.vector_store %arg5[%c0_65, %c0_66, %c0_67, %c0_68], %160 {strides = array<i32>} : memref<1x4x2x2xf32, #tpu.memory_space<vmem>>, vector<1x4x2x2xf32>,
    return
  }
  func.func @transform_0(%arg0: i32, %arg1: i32) -> (i32, i32, i32, i32) {
    %c0_i32 = arith.constant 0 : i32
    %c0_i32_0 = arith.constant 0 : i32
    %c0_i32_1 = arith.constant 0 : i32
    return %arg0, %arg1, %c0_i32, %c0_i32_0 : i32, i32, i32, i32
  }
  func.func @transform_1(%arg0: i32, %arg1: i32) -> (i32, i32, i32, i32) {
    %c0_i32 = arith.constant 0 : i32
    %c0_i32_0 = arith.constant 0 : i32
    %c0_i32_1 = arith.constant 0 : i32
    return %arg0, %arg1, %c0_i32, %c0_i32_0 : i32, i32, i32, i32
  }
  func.func @transform_2(%arg0: i32, %arg1: i32) -> (i32, i32, i32, i32) {
    %c0_i32 = arith.constant 0 : i32
    %c0_i32_0 = arith.constant 0 : i32
    %c0_i32_1 = arith.constant 0 : i32
    return %arg0, %arg1, %c0_i32, %c0_i32_0 : i32, i32, i32, i32
  }
  func.func @transform_3(%arg0: i32, %arg1: i32) -> (i32, i32, i32, i32) {
    %c0_i32 = arith.constant 0 : i32
    %c0_i32_0 = arith.constant 0 : i32
    %c0_i32_1 = arith.constant 0 : i32
    return %arg0, %arg1, %c0_i32, %c0_i32_0 : i32, i32, i32, i32
  }
}

</mosaic_0001>

<llo_original>
// kernel: tpu_custom_call.1
$region0: #{tpu_custom_call.1}
  #allocation0 [shape = 'u32[]', space=smem, size = 0x4, offset = 0x4, fixed_abs, tag = 'smem constant byte address 0x4 - core index']
  #allocation1 [shape = 'u32[72,128]{1,0:T(1,128)}', space=vmem, size = 0x9000, scoped, tag = 'internal scratch']
  %s0 = inlined_call_operand.hbm [shape: f32[2,4,16,16], index: 0, kind: input, shape index: {}]
  %s1 = inlined_call_operand.hbm [shape: f32[2,4,8,8], index: 1, kind: output, shape index: {0}]
  %s2 = inlined_call_operand.hbm [shape: f32[2,4,4,4], index: 2, kind: output, shape index: {1}]
  %s3 = inlined_call_operand.vmem [shape: f32[2,4,2,2], index: 3, kind: output, shape index: {2}]
  %4 = xla_tuple %s1, %s2, %s3
  %s5 = sld [smem:[#allocation0]]
  $region57: #{tpu_custom_call.1} parent=0
    _
  %s7 = ssub.s32 1, %s5
  %s8 = scalar_select 0, %s7, %s5
  $region1: #{tpu_custom_call.1} parent=0
    #allocation2 [shape = 'u8[65536]{0}', space=vmem, size = 0x10000, scoped, tag = 'input window, operand 0']
    #allocation3 [shape = 's32[2]{0}', space=sflag, size = 0x8, scoped, tag = 'scoped memory for tpu_custom_call.1']
    #allocation4 [shape = 's32[2]{0}', space=sflag, size = 0x8, scoped, tag = 'scoped memory for tpu_custom_call.1']
    #allocation5 [shape = 'u8[32768]{0}', space=vmem, size = 0x8000, scoped, tag = 'output window, operand 0']
    #allocation6 [shape = 'u8[16384]{0}', space=vmem, size = 0x4000, scoped, tag = 'output window, operand 1']
    #allocation7 [shape = 's32[2]{0}', space=sflag, size = 0x8, scoped, tag = 'scoped memory for tpu_custom_call.1']
    %9 = vsyncpa [#allocation3], 0
    %s10 = scalar_lea.sflag [#allocation3], 1
    %11 = vsyncpa %s10, 0
    %12 = vsyncpa [#allocation4], 0
    %s13 = scalar_lea.sflag [#allocation4], 1
    %14 = vsyncpa %s13, 0
    %15 = vsyncpa [#allocation7], 0
    %s16 = scalar_lea.sflag [#allocation7], 1
    %17 = vsyncpa %s16, 0
    loop: start=0, step=1, limit=4
    $region2: #{tpu_custom_call.1} parent=1 // loop_pre_header
      _
    $region3: #{tpu_custom_call.1} parent=1 // loop_header
      %s19 = sphi 0, %s23
      %p20 = scmp.ge.s32.totalorder %s19, 4
      %s26 = sphi 0, %s38
      %s27 = sphi 0, %s34
      %s28 = sphi 0, %s26
      %s29 = sphi 0, %s27
      %s30 = sphi 0, %s28
      %s31 = sphi 0, %s29
      %s43 = sphi 0, %s45
      %s46 = sphi 0, %s43
      %s47 = sphi 0, %s46
      %s63 = sphi 0, %s47
      %s71 = sphi 0, %s73
      %s74 = sphi 0, %s71
      %s75 = sphi 0, %s74
      %s91 = sphi 0, %s75
      %s99 = sphi 0, %s101
      %s102 = sphi 0, %s99
      %s103 = sphi 0, %s102
      %s119 = sphi 0, %s103
      %s127 = sphi 0, %s129
      %s130 = sphi 0, %s127
      %s131 = sphi 0, %s130
      %s147 = sphi 0, %s131
    $region4: #{tpu_custom_call.1} parent=1 // loop_header_branch
      %22 = sbr.rel (%p20) target = $region8
    $region5: #{tpu_custom_call.1} parent=1 // loop_body
      %s24 = ssub.s32 %s19, 1
      %s25 = ssub.s32 %s19, 2
      %s32 = sadd.s32 1, %s27
      %p33 = scmp.ge.s32.totalorder %s32, 1
      %s34 = scalar_select %p33, 0, %s32
      %s35 = sadd.s32 1, %s26
      %s36 = scalar_select %p33, %s35, %s26
      %p37 = scmp.ge.s32.totalorder %s36, 2
      %s38 = scalar_select %p37, 0, %s36
      %s39 = ssub.s32 %s26, %s38
      %s40 = ssub.s32 %s27, %s34
      %s41 = sor.u32 %s39, %s40
      %p42 = scmp.eq.s32.totalorder %s41, 0
      %s44 = sadd.s32 %s43, 1
      %s45 = scalar_select %p42, %s43, %s44
      %p48 = pneg %p42
      %p49 = scmp.eq.s32.totalorder %s19, 1
      %p50 = por %p48, %p49
      %p51 = scmp.ne.s32.totalorder %s43, %s46
      %p52 = scmp.eq.s32.totalorder %s19, 0
      %p53 = por %p51, %p52
      %p54 = scmp.ne.s32.totalorder %s43, %s46
      %p55 = scmp.eq.s32.totalorder %s24, 1
      %p56 = por %p54, %p55
      %p57 = scmp.ne.s32.totalorder %s46, %s47
      %p58 = scmp.eq.s32.totalorder %s24, 0
      %p59 = por %p57, %p58
      %p60 = scmp.ne.s32.totalorder %s46, %s47
      %p61 = scmp.eq.s32.totalorder %s25, 1
      %p62 = por %p60, %p61
      %p64 = scmp.ne.s32.totalorder %s47, %s63
      %p65 = scmp.eq.s32.totalorder %s25, 0
      %p66 = por %p64, %p65
      %s67 = ssub.s32 %s26, %s38
      %s68 = ssub.s32 %s27, %s34
      %s69 = sor.u32 %s67, %s68
      %p70 = scmp.eq.s32.totalorder %s69, 0
      %s72 = sadd.s32 %s71, 1
      %s73 = scalar_select %p70, %s71, %s72
      %p76 = pneg %p70
      %p77 = scmp.eq.s32.totalorder %s19, 1
      %p78 = por %p76, %p77
      %p79 = scmp.ne.s32.totalorder %s71, %s74
      %p80 = scmp.eq.s32.totalorder %s19, 0
      %p81 = por %p79, %p80
      %p82 = scmp.ne.s32.totalorder %s71, %s74
      %p83 = scmp.eq.s32.totalorder %s24, 1
      %p84 = por %p82, %p83
      %p85 = scmp.ne.s32.totalorder %s74, %s75
      %p86 = scmp.eq.s32.totalorder %s24, 0
      %p87 = por %p85, %p86
      %p88 = scmp.ne.s32.totalorder %s74, %s75
      %p89 = scmp.eq.s32.totalorder %s25, 1
      %p90 = por %p88, %p89
      %p92 = scmp.ne.s32.totalorder %s75, %s91
      %p93 = scmp.eq.s32.totalorder %s25, 0
      %p94 = por %p92, %p93
      %s95 = ssub.s32 %s26, %s38
      %s96 = ssub.s32 %s27, %s34
      %s97 = sor.u32 %s95, %s96
      %p98 = scmp.eq.s32.totalorder %s97, 0
      %s100 = sadd.s32 %s99, 1
      %s101 = scalar_select %p98, %s99, %s100
      %p104 = pneg %p98
      %p105 = scmp.eq.s32.totalorder %s19, 1
      %p106 = por %p104, %p105
      %p107 = scmp.ne.s32.totalorder %s99, %s102
      %p108 = scmp.eq.s32.totalorder %s19, 0
      %p109 = por %p107, %p108
      %p110 = scmp.ne.s32.totalorder %s99, %s102
      %p111 = scmp.eq.s32.totalorder %s24, 1
      %p112 = por %p110, %p111
      %p113 = scmp.ne.s32.totalorder %s102, %s103
      %p114 = scmp.eq.s32.totalorder %s24, 0
      %p115 = por %p113, %p114
      %p116 = scmp.ne.s32.totalorder %s102, %s103
      %p117 = scmp.eq.s32.totalorder %s25, 1
      %p118 = por %p116, %p117
      %p120 = scmp.ne.s32.totalorder %s103, %s119
      %p121 = scmp.eq.s32.totalorder %s25, 0
      %p122 = por %p120, %p121
      %s123 = ssub.s32 %s26, %s38
      %s124 = ssub.s32 %s27, %s34
      %s125 = sor.u32 %s123, %s124
      %p126 = scmp.eq.s32.totalorder %s125, 0
      %s128 = sadd.s32 %s127, 1
      %s129 = scalar_select %p126, %s127, %s128
      %p132 = pneg %p126
      %p133 = scmp.eq.s32.totalorder %s19, 1
      %p134 = por %p132, %p133
      %p135 = scmp.ne.s32.totalorder %s127, %s130
      %p136 = scmp.eq.s32.totalorder %s19, 0
      %p137 = por %p135, %p136
      %p138 = scmp.ne.s32.totalorder %s127, %s130
      %p139 = scmp.eq.s32.totalorder %s24, 1
      %p140 = por %p138, %p139
      %p141 = scmp.ne.s32.totalorder %s130, %s131
      %p142 = scmp.eq.s32.totalorder %s24, 0
      %p143 = por %p141, %p142
      %p144 = scmp.ne.s32.totalorder %s130, %s131
      %p145 = scmp.eq.s32.totalorder %s25, 1
      %p146 = por %p144, %p145
      %p148 = scmp.ne.s32.totalorder %s131, %s147
      %p149 = scmp.eq.s32.totalorder %s25, 0
      %p150 = por %p148, %p149
      %p151 = scmp.le.s32.totalorder 1, %s19
      %p152 = scmp.lt.s32.totalorder %s19, 3
      %p153 = pnand %p151, %p152
      %p154 = pneg %p153
      // Predicated region
      $region9: #{tpu_custom_call.1} parent=5 // pred_check
        _
      $region10: #{tpu_custom_call.1} parent=5 // pred_check_branch
        %156 = sbr.rel (%p153) target = $region12
      $region11: #{tpu_custom_call.1} parent=5 // pred_region
        %s157 = ssub.s32 %s19, 1
      $region12: #{tpu_custom_call.1} parent=5 // pred_fallthru
        _
      %p158 = scmp.lt.s32.totalorder %s19, 2
      // Predicated region
      $region13: #{tpu_custom_call.1} parent=5 // pred_check
        %p159 = pneg %p158
      $region14: #{tpu_custom_call.1} parent=5 // pred_check_branch
        %161 = sbr.rel (%p159) target = $region16
      $region15: #{tpu_custom_call.1} parent=5 // pred_region
        // Predicated region
        $region17: #{tpu_custom_call.1} parent=15 // pred_check
          %p162 = pneg %p53
        $region18: #{tpu_custom_call.1} parent=15 // pred_check_branch
          %164 = sbr.rel (%p162) target = $region20
        $region19: #{tpu_custom_call.1} parent=15 // pred_region
          %s165 = sand.u32 %s43, 1
          %s166 = scalar_lea.sflag [#allocation3], %s165
          %s167 = sand.u32 %s43, 1
          %s168 = smul.addr %s167, 64
          %s169 = scalar_lea.vmem [#allocation2], %s168
          %s170 = smul.u32 4, %s27
          %172 = vsyncadd %s166, 0
          %s173 = smul.addr %s170, 2
          %s174 = smul.addr %s26, 8
          %s175 = sadd.s32 %s173, %s174
          %s176 = smul.addr %s175, 8
          %s177 = scalar_lea.hbm %s0, %s176
          %s178 = sshll.u32 %s177, 4
          %s179 = int_to_ptr.hbm [resolvable:$true] %s178
          %s180 = sshll.u32 %s169, 4
          %s181 = int_to_ptr.vmem [resolvable:$true] %s180
          %186 = dma.hbm_to_vmem [thread:$0]  %s179, 1024, %s181, %s166, 128, 128, 8
        $region20: #{tpu_custom_call.1} parent=15 // pred_fallthru
          _
      $region16: #{tpu_custom_call.1} parent=5 // pred_fallthru
        _
      %p187 = scmp.le.s32.totalorder 1, %s19
      %p188 = scmp.lt.s32.totalorder %s19, 3
      %p189 = pnand %p187, %p188
      %p190 = pneg %p189
      // Predicated region
      $region21: #{tpu_custom_call.1} parent=5 // pred_check
        _
      $region22: #{tpu_custom_call.1} parent=5 // pred_check_branch
        %192 = sbr.rel (%p189) target = $region24
      $region23: #{tpu_custom_call.1} parent=5 // pred_region
        %s193 = ssub.s32 %s19, 1
        %s194 = sand.u32 %s46, 1
        %s195 = scalar_lea.sflag [#allocation3], %s194
        %s196 = sand.u32 %s46, 1
        %s197 = smul.addr %s196, 64
        %s198 = scalar_lea.vmem [#allocation2], %s197
        // Predicated region
        $region25: #{tpu_custom_call.1} parent=23 // pred_check
          %p199 = pneg %p59
        $region26: #{tpu_custom_call.1} parent=23 // pred_check_branch
          %201 = sbr.rel (%p199) target = $region28
        $region27: #{tpu_custom_call.1} parent=23 // pred_region
          %203 = dma.done %s195, 1024
        $region28: #{tpu_custom_call.1} parent=23 // pred_fallthru
          _
        %s204 = sand.u32 %s46, 1
        %s205 = scalar_lea.sflag [#allocation3], %s204
        %s206 = sand.u32 %s46, 1
        %s207 = smul.addr %s206, 64
        %s208 = scalar_lea.vmem [#allocation2], %s207
        %p209 = pneg %p59
        %p210 = pneg %p56
        %p211 = pneg %p87
        %p212 = pneg %p84
        %s213 = sand.u32 %s74, 1
        %s214 = scalar_lea.sflag [#allocation4], %s213
        %s215 = sand.u32 %s74, 1
        %s216 = smul.addr %s215, 32
        %s217 = scalar_lea.vmem [#allocation5], %s216
        %p218 = pneg %p115
        %p219 = pneg %p112
        %s220 = sand.u32 %s102, 1
        %s221 = scalar_lea.sflag [#allocation7], %s220
        %s222 = sand.u32 %s102, 1
        %s223 = smul.addr %s222, 16
        %s224 = scalar_lea.vmem [#allocation6], %s223
        %p225 = pneg %p143
        %p226 = pneg %p140
        %s227 = smul.u32 4, %s29
        %p228 = scmp.lt.s32.totalorder %s28, 1
        %s229 = scalar_select %p228, %s28, 1
        %p230 = scmp.lt.s32.totalorder %s227, 3
        %s231 = scalar_select %p230, %s227, 3
        %s232 = smul.addr %s229, 4
        %s233 = sadd.s32 %s231, %s232
        %s234 = smul.addr %s233, 2
        %s235 = scalar_lea.vmem %s3, %s234
        %s236 = smul.u32 4, %s29
        %s237 = smul.u32 4, %s29
        %s238 = smul.u32 4, %s29
        %s239 = smul.u32 4, %s29
        %p240 = scmp.lt.s32.totalorder %s28, 1
        %s241 = scalar_select %p240, %s28, 1
        %p242 = scmp.lt.s32.totalorder %s239, 3
        %s243 = scalar_select %p242, %s239, 3
        %s244 = smul.addr %s241, 4
        %s245 = sadd.s32 %s243, %s244
        %s246 = smul.addr %s245, 2
        %s247 = scalar_lea.vmem %s3, %s246
        %s248 = smul.u32 4, %s29
        %v249 = vld [vmem:[%s198] sm:$0xff]
        %v250 = vld [vmem:[%s198 + $0x8] sm:$0xff]
        %v251 = vld [vmem:[%s198 + $0x10] sm:$0xff]
        %v252 = vld [vmem:[%s198 + $0x18] sm:$0xff]
        %v253 = vld [vmem:[%s198 + $0x20] sm:$0xff]
        %v254 = vld [vmem:[%s198 + $0x28] sm:$0xff]
        %v255 = vld [vmem:[%s198 + $0x30] sm:$0xff]
        %v256 = vld [vmem:[%s198 + $0x38] sm:$0xff]
        %v257 = vlaneseq
        %v258 = vshrl.u32 %v257, 7
        %v259 = vadd.s32 %v258, 8
        %v260 = vlaneseq
        %v261 = vand.u32 %v260, 127
        %v262 = vmul.u32 %v261, 2
        %v263 = vadd.s32 %v262, 1
        %vm264 = vcmp.lt.s32.totalorder %v263, 16
        %v265 = vsel %vm264, 0.5, 1.0
        %vm266 = vcmp.eq.s32.totalorder %v258, %v262
        %vm267 = vcmp.eq.s32.totalorder %v259, %v262
        %vm268 = vcmp.eq.s32.totalorder %v258, %v263
        %vm269 = vcmp.eq.s32.totalorder %v259, %v263
        %vm270 = vmor %vm266, %vm268
        %vm271 = vmor %vm267, %vm269
        %v272 = vsel %vm270, %v265, 0.0
        %v273 = vsel %vm271, %v265, 0.0
        %v274 = vmul.u32 %v258, 2
        %v275 = vadd.s32 %v274, 1
        %vm276 = vcmp.lt.s32.totalorder %v275, 16
        %v277 = vsel %vm276, 0.5, 1.0
        %vm278 = vcmp.eq.s32.totalorder %v261, %v274
        %vm279 = vcmp.eq.s32.totalorder %v261, %v275
        %vm280 = vmor %vm278, %vm279
        %v281 = vsel %vm280, %v277, 0.0
        %vm282 = vcmask 130048
        %v284 = vsel %vm282, %v249, 0
        %v287 = vsel %vm282, %v250, 0
        %289 = vmatpush.msra.mxu0 0.0
        %290 = vmatpush.msra.mxu0 0.0
        %291 = vmatpush.msra.mxu0 0.0
        %292 = vmatpush.msra.mxu0 0.0
        %293 = vmatpush.msra.mxu0 0.0
        %294 = vmatpush.msra.mxu0 0.0
        %295 = vmatpush.msra.mxu0 0.0
        %296 = vmatpush.msra.mxu0 0.0
        %297 = vmatpush.msra.mxu0 0.0
        %298 = vmatpush.msra.mxu0 0.0
        %299 = vmatpush.msra.mxu0 0.0
        %300 = vmatpush.msra.mxu0 0.0
        %301 = vmatpush.msra.mxu0 0.0
        %302 = vmatpush.msra.mxu0 0.0
        %303 = vmatpush.msra.mxu0 %v273
        %304 = vmatpush.msra.mxu0 %v272
        %v305 = vand.u32 %v284, 4294901760
        %v306 = vsub.f32 %v284, %v305
        %v307 = vand.u32 %v306, 4294901760
        %v308 = vsub.f32 %v306, %v307
        %v309 = vand.u32 %v308, 4294901760
        %310 = vmatmul.f32.gmra.mxu0 %v309
        %v311 = vpop.f32.mrf.mxu0
        %v312 = vadd.f32 0.0, %v311
        %v313 = vand.u32 %v287, 4294901760
        %v314 = vsub.f32 %v287, %v313
        %v315 = vand.u32 %v314, 4294901760
        %v316 = vsub.f32 %v314, %v315
        %v317 = vand.u32 %v316, 4294901760
        %318 = vmatmul.f32.gmra.mxu0 %v317
        %v319 = vpop.f32.mrf.mxu0
        %v320 = vadd.f32 0.0, %v319
        %321 = vdwg.mxu0
        %322 = vmatpush.msra.mxu0 0.0
        %323 = vmatpush.msra.mxu0 0.0
        %324 = vmatpush.msra.mxu0 0.0
        %325 = vmatpush.msra.mxu0 0.0
        %326 = vmatpush.msra.mxu0 0.0
        %327 = vmatpush.msra.mxu0 0.0
        %328 = vmatpush.msra.mxu0 0.0
        %329 = vmatpush.msra.mxu0 0.0
        %330 = vmatpush.msra.mxu0 0.0
        %331 = vmatpush.msra.mxu0 0.0
        %332 = vmatpush.msra.mxu0 0.0
        %333 = vmatpush.msra.mxu0 0.0
        %334 = vmatpush.msra.mxu0 0.0
        %335 = vmatpush.msra.mxu0 0.0
        %v336 = vsub.f32 %v273, %v273
        %v337 = vand.u32 %v336, 4294901760
        %v338 = vsub.f32 %v336, %v337
        %v339 = vand.u32 %v338, 4294901760
        %340 = vmatpush.msra.mxu0 %v339
        %v341 = vsub.f32 %v272, %v272
        %v342 = vand.u32 %v341, 4294901760
        %v343 = vsub.f32 %v341, %v342
        %v344 = vand.u32 %v343, 4294901760
        %345 = vmatpush.msra.mxu0 %v344
        %v346 = vand.u32 %v284, 4294901760
        %347 = vmatmul.f32.gmra.mxu0 %v346
        %v348 = vpop.f32.mrf.mxu0
        %v349 = vadd.f32 %v312, %v348
        %v350 = vand.u32 %v287, 4294901760
        %351 = vmatmul.f32.gmra.mxu0 %v350
        %v352 = vpop.f32.mrf.mxu0
        %v353 = vadd.f32 %v320, %v352
        %354 = vdwg.mxu0
        %355 = vmatpush.msra.mxu0 0.0
        %356 = vmatpush.msra.mxu0 0.0
        %357 = vmatpush.msra.mxu0 0.0
        %358 = vmatpush.msra.mxu0 0.0
        %359 = vmatpush.msra.mxu0 0.0
        %360 = vmatpush.msra.mxu0 0.0
        %361 = vmatpush.msra.mxu0 0.0
        %362 = vmatpush.msra.mxu0 0.0
        %363 = vmatpush.msra.mxu0 0.0
        %364 = vmatpush.msra.mxu0 0.0
        %365 = vmatpush.msra.mxu0 0.0
        %366 = vmatpush.msra.mxu0 0.0
        %367 = vmatpush.msra.mxu0 0.0
        %368 = vmatpush.msra.mxu0 0.0
        %v369 = vsub.f32 %v273, %v273
        %370 = vmatpush.msra.mxu0 %v369
        %v371 = vsub.f32 %v272, %v272
        %372 = vmatpush.msra.mxu0 %v371
        %v373 = vand.u32 %v284, 4294901760
        %v374 = vsub.f32 %v284, %v373
        %375 = vmatmul.f32.gmra.mxu0 %v374
        %v376 = vpop.f32.mrf.mxu0
        %v377 = vadd.f32 %v349, %v376
        %v378 = vand.u32 %v287, 4294901760
        %v379 = vsub.f32 %v287, %v378
        %380 = vmatmul.f32.gmra.mxu0 %v379
        %v381 = vpop.f32.mrf.mxu0
        %v382 = vadd.f32 %v353, %v381
        %383 = vdwg.mxu0
        %384 = vmatpush.msra.mxu0 0.0
        %385 = vmatpush.msra.mxu0 0.0
        %386 = vmatpush.msra.mxu0 0.0
        %387 = vmatpush.msra.mxu0 0.0
        %388 = vmatpush.msra.mxu0 0.0
        %389 = vmatpush.msra.mxu0 0.0
        %390 = vmatpush.msra.mxu0 0.0
        %391 = vmatpush.msra.mxu0 0.0
        %392 = vmatpush.msra.mxu0 0.0
        %393 = vmatpush.msra.mxu0 0.0
        %394 = vmatpush.msra.mxu0 0.0
        %395 = vmatpush.msra.mxu0 0.0
        %396 = vmatpush.msra.mxu0 0.0
        %397 = vmatpush.msra.mxu0 0.0
        %398 = vmatpush.msra.mxu0 %v273
        %399 = vmatpush.msra.mxu0 %v272
        %v400 = vand.u32 %v284, 4294901760
        %v401 = vsub.f32 %v284, %v400
        %v402 = vand.u32 %v401, 4294901760
        %403 = vmatmul.f32.gmra.mxu0 %v402
        %v404 = vpop.f32.mrf.mxu0
        %v405 = vadd.f32 %v377, %v404
        %v406 = vand.u32 %v287, 4294901760
        %v407 = vsub.f32 %v287, %v406
        %v408 = vand.u32 %v407, 4294901760
        %409 = vmatmul.f32.gmra.mxu0 %v408
        %v410 = vpop.f32.mrf.mxu0
        %v411 = vadd.f32 %v382, %v410
        %412 = vdwg.mxu0
        %413 = vmatpush.msra.mxu0 0.0
        %414 = vmatpush.msra.mxu0 0.0
        %415 = vmatpush.msra.mxu0 0.0
        %416 = vmatpush.msra.mxu0 0.0
        %417 = vmatpush.msra.mxu0 0.0
        %418 = vmatpush.msra.mxu0 0.0
        %419 = vmatpush.msra.mxu0 0.0
        %420 = vmatpush.msra.mxu0 0.0
        %421 = vmatpush.msra.mxu0 0.0
        %422 = vmatpush.msra.mxu0 0.0
        %423 = vmatpush.msra.mxu0 0.0
        %424 = vmatpush.msra.mxu0 0.0
        %425 = vmatpush.msra.mxu0 0.0
        %426 = vmatpush.msra.mxu0 0.0
        %v427 = vsub.f32 %v273, %v273
        %v428 = vand.u32 %v427, 4294901760
        %429 = vmatpush.msra.mxu0 %v428
        %v430 = vsub.f32 %v272, %v272
        %v431 = vand.u32 %v430, 4294901760
        %432 = vmatpush.msra.mxu0 %v431
        %v433 = vand.u32 %v284, 4294901760
        %434 = vmatmul.f32.gmra.mxu0 %v433
        %v435 = vpop.f32.mrf.mxu0
        %v436 = vadd.f32 %v405, %v435
        %v437 = vand.u32 %v287, 4294901760
        %438 = vmatmul.f32.gmra.mxu0 %v437
        %v439 = vpop.f32.mrf.mxu0
        %v440 = vadd.f32 %v411, %v439
        %441 = vdwg.mxu0
        %442 = vmatpush.msra.mxu0 0.0
        %443 = vmatpush.msra.mxu0 0.0
        %444 = vmatpush.msra.mxu0 0.0
        %445 = vmatpush.msra.mxu0 0.0
        %446 = vmatpush.msra.mxu0 0.0
        %447 = vmatpush.msra.mxu0 0.0
        %448 = vmatpush.msra.mxu0 0.0
        %449 = vmatpush.msra.mxu0 0.0
        %450 = vmatpush.msra.mxu0 0.0
        %451 = vmatpush.msra.mxu0 0.0
        %452 = vmatpush.msra.mxu0 0.0
        %453 = vmatpush.msra.mxu0 0.0
        %454 = vmatpush.msra.mxu0 0.0
        %455 = vmatpush.msra.mxu0 0.0
        %456 = vmatpush.msra.mxu0 %v273
        %457 = vmatpush.msra.mxu0 %v272
        %v458 = vand.u32 %v284, 4294901760
        %459 = vmatmul.f32.gmra.mxu0 %v458
        %v460 = vpop.f32.mrf.mxu0
        %v461 = vadd.f32 %v436, %v460
        %v462 = vand.u32 %v287, 4294901760
        %463 = vmatmul.f32.gmra.mxu0 %v462
        %v464 = vpop.f32.mrf.mxu0
        %v465 = vadd.f32 %v440, %v464
        %466 = vdwg.mxu0
        %v468 = vsel %vm282, %v251, 0
        %v471 = vsel %vm282, %v252, 0
        %473 = vmatpush.msra.mxu0 0.0
        %474 = vmatpush.msra.mxu0 0.0
        %475 = vmatpush.msra.mxu0 0.0
        %476 = vmatpush.msra.mxu0 0.0
        %477 = vmatpush.msra.mxu0 0.0
        %478 = vmatpush.msra.mxu0 0.0
        %479 = vmatpush.msra.mxu0 0.0
        %480 = vmatpush.msra.mxu0 0.0
        %481 = vmatpush.msra.mxu0 0.0
        %482 = vmatpush.msra.mxu0 0.0
        %483 = vmatpush.msra.mxu0 0.0
        %484 = vmatpush.msra.mxu0 0.0
        %485 = vmatpush.msra.mxu0 0.0
        %486 = vmatpush.msra.mxu0 0.0
        %487 = vmatpush.msra.mxu0 %v273
        %488 = vmatpush.msra.mxu0 %v272
        %v489 = vand.u32 %v468, 4294901760
        %v490 = vsub.f32 %v468, %v489
        %v491 = vand.u32 %v490, 4294901760
        %v492 = vsub.f32 %v490, %v491
        %v493 = vand.u32 %v492, 4294901760
        %494 = vmatmul.f32.gmra.mxu0 %v493
        %v495 = vpop.f32.mrf.mxu0
        %v496 = vadd.f32 0.0, %v495
        %v497 = vand.u32 %v471, 4294901760
        %v498 = vsub.f32 %v471, %v497
        %v499 = vand.u32 %v498, 4294901760
        %v500 = vsub.f32 %v498, %v499
        %v501 = vand.u32 %v500, 4294901760
        %502 = vmatmul.f32.gmra.mxu0 %v501
        %v503 = vpop.f32.mrf.mxu0
        %v504 = vadd.f32 0.0, %v503
        %505 = vdwg.mxu0
        %506 = vmatpush.msra.mxu0 0.0
        %507 = vmatpush.msra.mxu0 0.0
        %508 = vmatpush.msra.mxu0 0.0
        %509 = vmatpush.msra.mxu0 0.0
        %510 = vmatpush.msra.mxu0 0.0
        %511 = vmatpush.msra.mxu0 0.0
        %512 = vmatpush.msra.mxu0 0.0
        %513 = vmatpush.msra.mxu0 0.0
        %514 = vmatpush.msra.mxu0 0.0
        %515 = vmatpush.msra.mxu0 0.0
        %516 = vmatpush.msra.mxu0 0.0
        %517 = vmatpush.msra.mxu0 0.0
        %518 = vmatpush.msra.mxu0 0.0
        %519 = vmatpush.msra.mxu0 0.0
        %v520 = vsub.f32 %v273, %v273
        %v521 = vand.u32 %v520, 4294901760
        %v522 = vsub.f32 %v520, %v521
        %v523 = vand.u32 %v522, 4294901760
        %524 = vmatpush.msra.mxu0 %v523
        %v525 = vsub.f32 %v272, %v272
        %v526 = vand.u32 %v525, 4294901760
        %v527 = vsub.f32 %v525, %v526
        %v528 = vand.u32 %v527, 4294901760
        %529 = vmatpush.msra.mxu0 %v528
        %v530 = vand.u32 %v468, 4294901760
        %531 = vmatmul.f32.gmra.mxu0 %v530
        %v532 = vpop.f32.mrf.mxu0
        %v533 = vadd.f32 %v496, %v532
        %v534 = vand.u32 %v471, 4294901760
        %535 = vmatmul.f32.gmra.mxu0 %v534
        %v536 = vpop.f32.mrf.mxu0
        %v537 = vadd.f32 %v504, %v536
        %538 = vdwg.mxu0
        %539 = vmatpush.msra.mxu0 0.0
        %540 = vmatpush.msra.mxu0 0.0
        %541 = vmatpush.msra.mxu0 0.0
        %542 = vmatpush.msra.mxu0 0.0
        %543 = vmatpush.msra.mxu0 0.0
        %544 = vmatpush.msra.mxu0 0.0
        %545 = vmatpush.msra.mxu0 0.0
        %546 = vmatpush.msra.mxu0 0.0
        %547 = vmatpush.msra.mxu0 0.0
        %548 = vmatpush.msra.mxu0 0.0
        %549 = vmatpush.msra.mxu0 0.0
        %550 = vmatpush.msra.mxu0 0.0
        %551 = vmatpush.msra.mxu0 0.0
        %552 = vmatpush.msra.mxu0 0.0
        %v553 = vsub.f32 %v273, %v273
        %554 = vmatpush.msra.mxu0 %v553
        %v555 = vsub.f32 %v272, %v272
        %556 = vmatpush.msra.mxu0 %v555
        %v557 = vand.u32 %v468, 4294901760
        %v558 = vsub.f32 %v468, %v557
        %559 = vmatmul.f32.gmra.mxu0 %v558
        %v560 = vpop.f32.mrf.mxu0
        %v561 = vadd.f32 %v533, %v560
        %v562 = vand.u32 %v471, 4294901760
        %v563 = vsub.f32 %v471, %v562
        %564 = vmatmul.f32.gmra.mxu0 %v563
        %v565 = vpop.f32.mrf.mxu0
        %v566 = vadd.f32 %v537, %v565
        %567 = vdwg.mxu0
        %568 = vmatpush.msra.mxu0 0.0
        %569 = vmatpush.msra.mxu0 0.0
        %570 = vmatpush.msra.mxu0 0.0
        %571 = vmatpush.msra.mxu0 0.0
        %572 = vmatpush.msra.mxu0 0.0
        %573 = vmatpush.msra.mxu0 0.0
        %574 = vmatpush.msra.mxu0 0.0
        %575 = vmatpush.msra.mxu0 0.0
        %576 = vmatpush.msra.mxu0 0.0
        %577 = vmatpush.msra.mxu0 0.0
        %578 = vmatpush.msra.mxu0 0.0
        %579 = vmatpush.msra.mxu0 0.0
        %580 = vmatpush.msra.mxu0 0.0
        %581 = vmatpush.msra.mxu0 0.0
        %582 = vmatpush.msra.mxu0 %v273
        %583 = vmatpush.msra.mxu0 %v272
        %v584 = vand.u32 %v468, 4294901760
        %v585 = vsub.f32 %v468, %v584
        %v586 = vand.u32 %v585, 4294901760
        %587 = vmatmul.f32.gmra.mxu0 %v586
        %v588 = vpop.f32.mrf.mxu0
        %v589 = vadd.f32 %v561, %v588
        %v590 = vand.u32 %v471, 4294901760
        %v591 = vsub.f32 %v471, %v590
        %v592 = vand.u32 %v591, 4294901760
        %593 = vmatmul.f32.gmra.mxu0 %v592
        %v594 = vpop.f32.mrf.mxu0
        %v595 = vadd.f32 %v566, %v594
        %596 = vdwg.mxu0
        %597 = vmatpush.msra.mxu0 0.0
        %598 = vmatpush.msra.mxu0 0.0
        %599 = vmatpush.msra.mxu0 0.0
        %600 = vmatpush.msra.mxu0 0.0
        %601 = vmatpush.msra.mxu0 0.0
        %602 = vmatpush.msra.mxu0 0.0
        %603 = vmatpush.msra.mxu0 0.0
        %604 = vmatpush.msra.mxu0 0.0
        %605 = vmatpush.msra.mxu0 0.0
        %606 = vmatpush.msra.mxu0 0.0
        %607 = vmatpush.msra.mxu0 0.0
        %608 = vmatpush.msra.mxu0 0.0
        %609 = vmatpush.msra.mxu0 0.0
        %610 = vmatpush.msra.mxu0 0.0
        %v611 = vsub.f32 %v273, %v273
        %v612 = vand.u32 %v611, 4294901760
        %613 = vmatpush.msra.mxu0 %v612
        %v614 = vsub.f32 %v272, %v272
        %v615 = vand.u32 %v614, 4294901760
        %616 = vmatpush.msra.mxu0 %v615
        %v617 = vand.u32 %v468, 4294901760
        %618 = vmatmul.f32.gmra.mxu0 %v617
        %v619 = vpop.f32.mrf.mxu0
        %v620 = vadd.f32 %v589, %v619
        %v621 = vand.u32 %v471, 4294901760
        %622 = vmatmul.f32.gmra.mxu0 %v621
        %v623 = vpop.f32.mrf.mxu0
        %v624 = vadd.f32 %v595, %v623
        %625 = vdwg.mxu0
        %626 = vmatpush.msra.mxu0 0.0
        %627 = vmatpush.msra.mxu0 0.0
        %628 = vmatpush.msra.mxu0 0.0
        %629 = vmatpush.msra.mxu0 0.0
        %630 = vmatpush.msra.mxu0 0.0
        %631 = vmatpush.msra.mxu0 0.0
        %632 = vmatpush.msra.mxu0 0.0
        %633 = vmatpush.msra.mxu0 0.0
        %634 = vmatpush.msra.mxu0 0.0
        %635 = vmatpush.msra.mxu0 0.0
        %636 = vmatpush.msra.mxu0 0.0
        %637 = vmatpush.msra.mxu0 0.0
        %638 = vmatpush.msra.mxu0 0.0
        %639 = vmatpush.msra.mxu0 0.0
        %640 = vmatpush.msra.mxu0 %v273
        %641 = vmatpush.msra.mxu0 %v272
        %v642 = vand.u32 %v468, 4294901760
        %643 = vmatmul.f32.gmra.mxu0 %v642
        %v644 = vpop.f32.mrf.mxu0
        %v645 = vadd.f32 %v620, %v644
        %v646 = vand.u32 %v471, 4294901760
        %647 = vmatmul.f32.gmra.mxu0 %v646
        %v648 = vpop.f32.mrf.mxu0
        %v649 = vadd.f32 %v624, %v648
        %650 = vdwg.mxu0
        %v652 = vsel %vm282, %v253, 0
        %v655 = vsel %vm282, %v254, 0
        %657 = vmatpush.msra.mxu0 0.0
        %658 = vmatpush.msra.mxu0 0.0
        %659 = vmatpush.msra.mxu0 0.0
        %660 = vmatpush.msra.mxu0 0.0
        %661 = vmatpush.msra.mxu0 0.0
        %662 = vmatpush.msra.mxu0 0.0
        %663 = vmatpush.msra.mxu0 0.0
        %664 = vmatpush.msra.mxu0 0.0
        %665 = vmatpush.msra.mxu0 0.0
        %666 = vmatpush.msra.mxu0 0.0
        %667 = vmatpush.msra.mxu0 0.0
        %668 = vmatpush.msra.mxu0 0.0
        %669 = vmatpush.msra.mxu0 0.0
        %670 = vmatpush.msra.mxu0 0.0
        %671 = vmatpush.msra.mxu0 %v273
        %672 = vmatpush.msra.mxu0 %v272
        %v673 = vand.u32 %v652, 4294901760
        %v674 = vsub.f32 %v652, %v673
        %v675 = vand.u32 %v674, 4294901760
        %v676 = vsub.f32 %v674, %v675
        %v677 = vand.u32 %v676, 4294901760
        %678 = vmatmul.f32.gmra.mxu0 %v677
        %v679 = vpop.f32.mrf.mxu0
        %v680 = vadd.f32 0.0, %v679
        %v681 = vand.u32 %v655, 4294901760
        %v682 = vsub.f32 %v655, %v681
        %v683 = vand.u32 %v682, 4294901760
        %v684 = vsub.f32 %v682, %v683
        %v685 = vand.u32 %v684, 4294901760
        %686 = vmatmul.f32.gmra.mxu0 %v685
        %v687 = vpop.f32.mrf.mxu0
        %v688 = vadd.f32 0.0, %v687
        %689 = vdwg.mxu0
        %690 = vmatpush.msra.mxu0 0.0
        %691 = vmatpush.msra.mxu0 0.0
        %692 = vmatpush.msra.mxu0 0.0
        %693 = vmatpush.msra.mxu0 0.0
        %694 = vmatpush.msra.mxu0 0.0
        %695 = vmatpush.msra.mxu0 0.0
        %696 = vmatpush.msra.mxu0 0.0
        %697 = vmatpush.msra.mxu0 0.0
        %698 = vmatpush.msra.mxu0 0.0
        %699 = vmatpush.msra.mxu0 0.0
        %700 = vmatpush.msra.mxu0 0.0
        %701 = vmatpush.msra.mxu0 0.0
        %702 = vmatpush.msra.mxu0 0.0
        %703 = vmatpush.msra.mxu0 0.0
        %v704 = vsub.f32 %v273, %v273
        %v705 = vand.u32 %v704, 4294901760
        %v706 = vsub.f32 %v704, %v705
        %v707 = vand.u32 %v706, 4294901760
        %708 = vmatpush.msra.mxu0 %v707
        %v709 = vsub.f32 %v272, %v272
        %v710 = vand.u32 %v709, 4294901760
        %v711 = vsub.f32 %v709, %v710
        %v712 = vand.u32 %v711, 4294901760
        %713 = vmatpush.msra.mxu0 %v712
        %v714 = vand.u32 %v652, 4294901760
        %715 = vmatmul.f32.gmra.mxu0 %v714
        %v716 = vpop.f32.mrf.mxu0
        %v717 = vadd.f32 %v680, %v716
        %v718 = vand.u32 %v655, 4294901760
        %719 = vmatmul.f32.gmra.mxu0 %v718
        %v720 = vpop.f32.mrf.mxu0
        %v721 = vadd.f32 %v688, %v720
        %722 = vdwg.mxu0
        %723 = vmatpush.msra.mxu0 0.0
        %724 = vmatpush.msra.mxu0 0.0
        %725 = vmatpush.msra.mxu0 0.0
        %726 = vmatpush.msra.mxu0 0.0
        %727 = vmatpush.msra.mxu0 0.0
        %728 = vmatpush.msra.mxu0 0.0
        %729 = vmatpush.msra.mxu0 0.0
        %730 = vmatpush.msra.mxu0 0.0
        %731 = vmatpush.msra.mxu0 0.0
        %732 = vmatpush.msra.mxu0 0.0
        %733 = vmatpush.msra.mxu0 0.0
        %734 = vmatpush.msra.mxu0 0.0
        %735 = vmatpush.msra.mxu0 0.0
        %736 = vmatpush.msra.mxu0 0.0
        %v737 = vsub.f32 %v273, %v273
        %738 = vmatpush.msra.mxu0 %v737
        %v739 = vsub.f32 %v272, %v272
        %740 = vmatpush.msra.mxu0 %v739
        %v741 = vand.u32 %v652, 4294901760
        %v742 = vsub.f32 %v652, %v741
        %743 = vmatmul.f32.gmra.mxu0 %v742
        %v744 = vpop.f32.mrf.mxu0
        %v745 = vadd.f32 %v717, %v744
        %v746 = vand.u32 %v655, 4294901760
        %v747 = vsub.f32 %v655, %v746
        %748 = vmatmul.f32.gmra.mxu0 %v747
        %v749 = vpop.f32.mrf.mxu0
        %v750 = vadd.f32 %v721, %v749
        %751 = vdwg.mxu0
        %752 = vmatpush.msra.mxu0 0.0
        %753 = vmatpush.msra.mxu0 0.0
        %754 = vmatpush.msra.mxu0 0.0
        %755 = vmatpush.msra.mxu0 0.0
        %756 = vmatpush.msra.mxu0 0.0
        %757 = vmatpush.msra.mxu0 0.0
        %758 = vmatpush.msra.mxu0 0.0
        %759 = vmatpush.msra.mxu0 0.0
        %760 = vmatpush.msra.mxu0 0.0
        %761 = vmatpush.msra.mxu0 0.0
        %762 = vmatpush.msra.mxu0 0.0
        %763 = vmatpush.msra.mxu0 0.0
        %764 = vmatpush.msra.mxu0 0.0
        %765 = vmatpush.msra.mxu0 0.0
        %766 = vmatpush.msra.mxu0 %v273
        %767 = vmatpush.msra.mxu0 %v272
        %v768 = vand.u32 %v652, 4294901760
        %v769 = vsub.f32 %v652, %v768
        %v770 = vand.u32 %v769, 4294901760
        %771 = vmatmul.f32.gmra.mxu0 %v770
        %v772 = vpop.f32.mrf.mxu0
        %v773 = vadd.f32 %v745, %v772
        %v774 = vand.u32 %v655, 4294901760
        %v775 = vsub.f32 %v655, %v774
        %v776 = vand.u32 %v775, 4294901760
        %777 = vmatmul.f32.gmra.mxu0 %v776
        %v778 = vpop.f32.mrf.mxu0
        %v779 = vadd.f32 %v750, %v778
        %780 = vdwg.mxu0
        %781 = vmatpush.msra.mxu0 0.0
        %782 = vmatpush.msra.mxu0 0.0
        %783 = vmatpush.msra.mxu0 0.0
        %784 = vmatpush.msra.mxu0 0.0
        %785 = vmatpush.msra.mxu0 0.0
        %786 = vmatpush.msra.mxu0 0.0
        %787 = vmatpush.msra.mxu0 0.0
        %788 = vmatpush.msra.mxu0 0.0
        %789 = vmatpush.msra.mxu0 0.0
        %790 = vmatpush.msra.mxu0 0.0
        %791 = vmatpush.msra.mxu0 0.0
        %792 = vmatpush.msra.mxu0 0.0
        %793 = vmatpush.msra.mxu0 0.0
        %794 = vmatpush.msra.mxu0 0.0
        %v795 = vsub.f32 %v273, %v273
        %v796 = vand.u32 %v795, 4294901760
        %797 = vmatpush.msra.mxu0 %v796
        %v798 = vsub.f32 %v272, %v272
        %v799 = vand.u32 %v798, 4294901760
        %800 = vmatpush.msra.mxu0 %v799
        %v801 = vand.u32 %v652, 4294901760
        %802 = vmatmul.f32.gmra.mxu0 %v801
        %v803 = vpop.f32.mrf.mxu0
        %v804 = vadd.f32 %v773, %v803
        %v805 = vand.u32 %v655, 4294901760
        %806 = vmatmul.f32.gmra.mxu0 %v805
        %v807 = vpop.f32.mrf.mxu0
        %v808 = vadd.f32 %v779, %v807
        %809 = vdwg.mxu0
        %810 = vmatpush.msra.mxu0 0.0
        %811 = vmatpush.msra.mxu0 0.0
        %812 = vmatpush.msra.mxu0 0.0
        %813 = vmatpush.msra.mxu0 0.0
        %814 = vmatpush.msra.mxu0 0.0
        %815 = vmatpush.msra.mxu0 0.0
        %816 = vmatpush.msra.mxu0 0.0
        %817 = vmatpush.msra.mxu0 0.0
        %818 = vmatpush.msra.mxu0 0.0
        %819 = vmatpush.msra.mxu0 0.0
        %820 = vmatpush.msra.mxu0 0.0
        %821 = vmatpush.msra.mxu0 0.0
        %822 = vmatpush.msra.mxu0 0.0
        %823 = vmatpush.msra.mxu0 0.0
        %824 = vmatpush.msra.mxu0 %v273
        %825 = vmatpush.msra.mxu0 %v272
        %v826 = vand.u32 %v652, 4294901760
        %827 = vmatmul.f32.gmra.mxu0 %v826
        %v828 = vpop.f32.mrf.mxu0
        %v829 = vadd.f32 %v804, %v828
        %v830 = vand.u32 %v655, 4294901760
        %831 = vmatmul.f32.gmra.mxu0 %v830
        %v832 = vpop.f32.mrf.mxu0
        %v833 = vadd.f32 %v808, %v832
        %834 = vdwg.mxu0
        %v836 = vsel %vm282, %v255, 0
        %v839 = vsel %vm282, %v256, 0
        %841 = vmatpush.msra.mxu0 0.0
        %842 = vmatpush.msra.mxu0 0.0
        %843 = vmatpush.msra.mxu0 0.0
        %844 = vmatpush.msra.mxu0 0.0
        %845 = vmatpush.msra.mxu0 0.0
        %846 = vmatpush.msra.mxu0 0.0
        %847 = vmatpush.msra.mxu0 0.0
        %848 = vmatpush.msra.mxu0 0.0
        %849 = vmatpush.msra.mxu0 0.0
        %850 = vmatpush.msra.mxu0 0.0
        %851 = vmatpush.msra.mxu0 0.0
        %852 = vmatpush.msra.mxu0 0.0
        %853 = vmatpush.msra.mxu0 0.0
        %854 = vmatpush.msra.mxu0 0.0
        %855 = vmatpush.msra.mxu0 %v273
        %856 = vmatpush.msra.mxu0 %v272
        %v857 = vand.u32 %v836, 4294901760
        %v858 = vsub.f32 %v836, %v857
        %v859 = vand.u32 %v858, 4294901760
        %v860 = vsub.f32 %v858, %v859
        %v861 = vand.u32 %v860, 4294901760
        %862 = vmatmul.f32.gmra.mxu0 %v861
        %v863 = vpop.f32.mrf.mxu0
        %v864 = vadd.f32 0.0, %v863
        %v865 = vand.u32 %v839, 4294901760
        %v866 = vsub.f32 %v839, %v865
        %v867 = vand.u32 %v866, 4294901760
        %v868 = vsub.f32 %v866, %v867
        %v869 = vand.u32 %v868, 4294901760
        %870 = vmatmul.f32.gmra.mxu0 %v869
        %v871 = vpop.f32.mrf.mxu0
        %v872 = vadd.f32 0.0, %v871
        %873 = vdwg.mxu0
        %874 = vmatpush.msra.mxu0 0.0
        %875 = vmatpush.msra.mxu0 0.0
        %876 = vmatpush.msra.mxu0 0.0
        %877 = vmatpush.msra.mxu0 0.0
        %878 = vmatpush.msra.mxu0 0.0
        %879 = vmatpush.msra.mxu0 0.0
        %880 = vmatpush.msra.mxu0 0.0
        %881 = vmatpush.msra.mxu0 0.0
        %882 = vmatpush.msra.mxu0 0.0
        %883 = vmatpush.msra.mxu0 0.0
        %884 = vmatpush.msra.mxu0 0.0
        %885 = vmatpush.msra.mxu0 0.0
        %886 = vmatpush.msra.mxu0 0.0
        %887 = vmatpush.msra.mxu0 0.0
        %v888 = vsub.f32 %v273, %v273
        %v889 = vand.u32 %v888, 4294901760
        %v890 = vsub.f32 %v888, %v889
        %v891 = vand.u32 %v890, 4294901760
        %892 = vmatpush.msra.mxu0 %v891
        %v893 = vsub.f32 %v272, %v272
        %v894 = vand.u32 %v893, 4294901760
        %v895 = vsub.f32 %v893, %v894
        %v896 = vand.u32 %v895, 4294901760
        %897 = vmatpush.msra.mxu0 %v896
        %v898 = vand.u32 %v836, 4294901760
        %899 = vmatmul.f32.gmra.mxu0 %v898
        %v900 = vpop.f32.mrf.mxu0
        %v901 = vadd.f32 %v864, %v900
        %v902 = vand.u32 %v839, 4294901760
        %903 = vmatmul.f32.gmra.mxu0 %v902
        %v904 = vpop.f32.mrf.mxu0
        %v905 = vadd.f32 %v872, %v904
        %906 = vdwg.mxu0
        %907 = vmatpush.msra.mxu0 0.0
        %908 = vmatpush.msra.mxu0 0.0
        %909 = vmatpush.msra.mxu0 0.0
        %910 = vmatpush.msra.mxu0 0.0
        %911 = vmatpush.msra.mxu0 0.0
        %912 = vmatpush.msra.mxu0 0.0
        %913 = vmatpush.msra.mxu0 0.0
        %914 = vmatpush.msra.mxu0 0.0
        %915 = vmatpush.msra.mxu0 0.0
        %916 = vmatpush.msra.mxu0 0.0
        %917 = vmatpush.msra.mxu0 0.0
        %918 = vmatpush.msra.mxu0 0.0
        %919 = vmatpush.msra.mxu0 0.0
        %920 = vmatpush.msra.mxu0 0.0
        %v921 = vsub.f32 %v273, %v273
        %922 = vmatpush.msra.mxu0 %v921
        %v923 = vsub.f32 %v272, %v272
        %924 = vmatpush.msra.mxu0 %v923
        %v925 = vand.u32 %v836, 4294901760
        %v926 = vsub.f32 %v836, %v925
        %927 = vmatmul.f32.gmra.mxu0 %v926
        %v928 = vpop.f32.mrf.mxu0
        %v929 = vadd.f32 %v901, %v928
        %v930 = vand.u32 %v839, 4294901760
        %v931 = vsub.f32 %v839, %v930
        %932 = vmatmul.f32.gmra.mxu0 %v931
        %v933 = vpop.f32.mrf.mxu0
        %v934 = vadd.f32 %v905, %v933
        %935 = vdwg.mxu0
        %936 = vmatpush.msra.mxu0 0.0
        %937 = vmatpush.msra.mxu0 0.0
        %938 = vmatpush.msra.mxu0 0.0
        %939 = vmatpush.msra.mxu0 0.0
        %940 = vmatpush.msra.mxu0 0.0
        %941 = vmatpush.msra.mxu0 0.0
        %942 = vmatpush.msra.mxu0 0.0
        %943 = vmatpush.msra.mxu0 0.0
        %944 = vmatpush.msra.mxu0 0.0
        %945 = vmatpush.msra.mxu0 0.0
        %946 = vmatpush.msra.mxu0 0.0
        %947 = vmatpush.msra.mxu0 0.0
        %948 = vmatpush.msra.mxu0 0.0
        %949 = vmatpush.msra.mxu0 0.0
        %950 = vmatpush.msra.mxu0 %v273
        %951 = vmatpush.msra.mxu0 %v272
        %v952 = vand.u32 %v836, 4294901760
        %v953 = vsub.f32 %v836, %v952
        %v954 = vand.u32 %v953, 4294901760
        %955 = vmatmul.f32.gmra.mxu0 %v954
        %v956 = vpop.f32.mrf.mxu0
        %v957 = vadd.f32 %v929, %v956
        %v958 = vand.u32 %v839, 4294901760
        %v959 = vsub.f32 %v839, %v958
        %v960 = vand.u32 %v959, 4294901760
        %961 = vmatmul.f32.gmra.mxu0 %v960
        %v962 = vpop.f32.mrf.mxu0
        %v963 = vadd.f32 %v934, %v962
        %964 = vdwg.mxu0
        %965 = vmatpush.msra.mxu0 0.0
        %966 = vmatpush.msra.mxu0 0.0
        %967 = vmatpush.msra.mxu0 0.0
        %968 = vmatpush.msra.mxu0 0.0
        %969 = vmatpush.msra.mxu0 0.0
        %970 = vmatpush.msra.mxu0 0.0
        %971 = vmatpush.msra.mxu0 0.0
        %972 = vmatpush.msra.mxu0 0.0
        %973 = vmatpush.msra.mxu0 0.0
        %974 = vmatpush.msra.mxu0 0.0
        %975 = vmatpush.msra.mxu0 0.0
        %976 = vmatpush.msra.mxu0 0.0
        %977 = vmatpush.msra.mxu0 0.0
        %978 = vmatpush.msra.mxu0 0.0
        %v979 = vsub.f32 %v273, %v273
        %v980 = vand.u32 %v979, 4294901760
        %981 = vmatpush.msra.mxu0 %v980
        %v982 = vsub.f32 %v272, %v272
        %v983 = vand.u32 %v982, 4294901760
        %984 = vmatpush.msra.mxu0 %v983
        %v985 = vand.u32 %v836, 4294901760
        %986 = vmatmul.f32.gmra.mxu0 %v985
        %v987 = vpop.f32.mrf.mxu0
        %v988 = vadd.f32 %v957, %v987
        %v989 = vand.u32 %v839, 4294901760
        %990 = vmatmul.f32.gmra.mxu0 %v989
        %v991 = vpop.f32.mrf.mxu0
        %v992 = vadd.f32 %v963, %v991
        %993 = vdwg.mxu0
        %994 = vmatpush.msra.mxu0 0.0
        %995 = vmatpush.msra.mxu0 0.0
        %996 = vmatpush.msra.mxu0 0.0
        %997 = vmatpush.msra.mxu0 0.0
        %998 = vmatpush.msra.mxu0 0.0
        %999 = vmatpush.msra.mxu0 0.0
        %1000 = vmatpush.msra.mxu0 0.0
        %1001 = vmatpush.msra.mxu0 0.0
        %1002 = vmatpush.msra.mxu0 0.0
        %1003 = vmatpush.msra.mxu0 0.0
        %1004 = vmatpush.msra.mxu0 0.0
        %1005 = vmatpush.msra.mxu0 0.0
        %1006 = vmatpush.msra.mxu0 0.0
        %1007 = vmatpush.msra.mxu0 0.0
        %1008 = vmatpush.msra.mxu0 %v273
        %1009 = vmatpush.msra.mxu0 %v272
        %v1010 = vand.u32 %v836, 4294901760
        %1011 = vmatmul.f32.gmra.mxu0 %v1010
        %v1012 = vpop.f32.mrf.mxu0
        %v1013 = vadd.f32 %v988, %v1012
        %v1014 = vand.u32 %v839, 4294901760
        %1015 = vmatmul.f32.gmra.mxu0 %v1014
        %v1016 = vpop.f32.mrf.mxu0
        %v1017 = vadd.f32 %v992, %v1016
        %1018 = vdwg.mxu0
        %v1020 = vsel %vm282, %v281, 0
        %1022 = vmatpush.msra.mxu0 0.0
        %1023 = vmatpush.msra.mxu0 0.0
        %1024 = vmatpush.msra.mxu0 0.0
        %1025 = vmatpush.msra.mxu0 0.0
        %1026 = vmatpush.msra.mxu0 0.0
        %1027 = vmatpush.msra.mxu0 0.0
        %1028 = vmatpush.msra.mxu0 0.0
        %1029 = vmatpush.msra.mxu0 0.0
        %1030 = vmatpush.msra.mxu0 0.0
        %1031 = vmatpush.msra.mxu0 0.0
        %1032 = vmatpush.msra.mxu0 0.0
        %1033 = vmatpush.msra.mxu0 0.0
        %1034 = vmatpush.msra.mxu0 0.0
        %1035 = vmatpush.msra.mxu0 0.0
        %v1036 = vand.u32 %v465, 4294901760
        %1037 = vmatpush.msra.mxu0 %v1036
        %v1038 = vand.u32 %v461, 4294901760
        %1039 = vmatpush.msra.mxu0 %v1038
        %v1040 = vand.u32 %v1020, 4294901760
        %v1041 = vsub.f32 %v1020, %v1040
        %v1042 = vand.u32 %v1041, 4294901760
        %v1043 = vsub.f32 %v1041, %v1042
        %v1044 = vand.u32 %v1043, 4294901760
        %1045 = vmatmul.f32.gmra.mxu0 %v1044
        %v1046 = vpop.f32.mrf.mxu0
        %v1047 = vadd.f32 0.0, %v1046
        %1048 = vdwg.mxu0
        %1049 = vmatpush.msra.mxu0 0.0
        %1050 = vmatpush.msra.mxu0 0.0
        %1051 = vmatpush.msra.mxu0 0.0
        %1052 = vmatpush.msra.mxu0 0.0
        %1053 = vmatpush.msra.mxu0 0.0
        %1054 = vmatpush.msra.mxu0 0.0
        %1055 = vmatpush.msra.mxu0 0.0
        %1056 = vmatpush.msra.mxu0 0.0
        %1057 = vmatpush.msra.mxu0 0.0
        %1058 = vmatpush.msra.mxu0 0.0
        %1059 = vmatpush.msra.mxu0 0.0
        %1060 = vmatpush.msra.mxu0 0.0
        %1061 = vmatpush.msra.mxu0 0.0
        %1062 = vmatpush.msra.mxu0 0.0
        %v1063 = vand.u32 %v465, 4294901760
        %v1064 = vsub.f32 %v465, %v1063
        %v1065 = vand.u32 %v1064, 4294901760
        %v1066 = vsub.f32 %v1064, %v1065
        %v1067 = vand.u32 %v1066, 4294901760
        %1068 = vmatpush.msra.mxu0 %v1067
        %v1069 = vand.u32 %v461, 4294901760
        %v1070 = vsub.f32 %v461, %v1069
        %v1071 = vand.u32 %v1070, 4294901760
        %v1072 = vsub.f32 %v1070, %v1071
        %v1073 = vand.u32 %v1072, 4294901760
        %1074 = vmatpush.msra.mxu0 %v1073
        %v1075 = vand.u32 %v1020, 4294901760
        %1076 = vmatmul.f32.gmra.mxu0 %v1075
        %v1077 = vpop.f32.mrf.mxu0
        %v1078 = vadd.f32 %v1047, %v1077
        %1079 = vdwg.mxu0
        %1080 = vmatpush.msra.mxu0 0.0
        %1081 = vmatpush.msra.mxu0 0.0
        %1082 = vmatpush.msra.mxu0 0.0
        %1083 = vmatpush.msra.mxu0 0.0
        %1084 = vmatpush.msra.mxu0 0.0
        %1085 = vmatpush.msra.mxu0 0.0
        %1086 = vmatpush.msra.mxu0 0.0
        %1087 = vmatpush.msra.mxu0 0.0
        %1088 = vmatpush.msra.mxu0 0.0
        %1089 = vmatpush.msra.mxu0 0.0
        %1090 = vmatpush.msra.mxu0 0.0
        %1091 = vmatpush.msra.mxu0 0.0
        %1092 = vmatpush.msra.mxu0 0.0
        %1093 = vmatpush.msra.mxu0 0.0
        %v1094 = vand.u32 %v465, 4294901760
        %v1095 = vsub.f32 %v465, %v1094
        %1096 = vmatpush.msra.mxu0 %v1095
        %v1097 = vand.u32 %v461, 4294901760
        %v1098 = vsub.f32 %v461, %v1097
        %1099 = vmatpush.msra.mxu0 %v1098
        %v1100 = vand.u32 %v1020, 4294901760
        %v1101 = vsub.f32 %v1020, %v1100
        %1102 = vmatmul.f32.gmra.mxu0 %v1101
        %v1103 = vpop.f32.mrf.mxu0
        %v1104 = vadd.f32 %v1078, %v1103
        %1105 = vdwg.mxu0
        %1106 = vmatpush.msra.mxu0 0.0
        %1107 = vmatpush.msra.mxu0 0.0
        %1108 = vmatpush.msra.mxu0 0.0
        %1109 = vmatpush.msra.mxu0 0.0
        %1110 = vmatpush.msra.mxu0 0.0
        %1111 = vmatpush.msra.mxu0 0.0
        %1112 = vmatpush.msra.mxu0 0.0
        %1113 = vmatpush.msra.mxu0 0.0
        %1114 = vmatpush.msra.mxu0 0.0
        %1115 = vmatpush.msra.mxu0 0.0
        %1116 = vmatpush.msra.mxu0 0.0
        %1117 = vmatpush.msra.mxu0 0.0
        %1118 = vmatpush.msra.mxu0 0.0
        %1119 = vmatpush.msra.mxu0 0.0
        %v1120 = vand.u32 %v465, 4294901760
        %1121 = vmatpush.msra.mxu0 %v1120
        %v1122 = vand.u32 %v461, 4294901760
        %1123 = vmatpush.msra.mxu0 %v1122
        %v1124 = vand.u32 %v1020, 4294901760
        %v1125 = vsub.f32 %v1020, %v1124
        %v1126 = vand.u32 %v1125, 4294901760
        %1127 = vmatmul.f32.gmra.mxu0 %v1126
        %v1128 = vpop.f32.mrf.mxu0
        %v1129 = vadd.f32 %v1104, %v1128
        %1130 = vdwg.mxu0
        %1131 = vmatpush.msra.mxu0 0.0
        %1132 = vmatpush.msra.mxu0 0.0
        %1133 = vmatpush.msra.mxu0 0.0
        %1134 = vmatpush.msra.mxu0 0.0
        %1135 = vmatpush.msra.mxu0 0.0
        %1136 = vmatpush.msra.mxu0 0.0
        %1137 = vmatpush.msra.mxu0 0.0
        %1138 = vmatpush.msra.mxu0 0.0
        %1139 = vmatpush.msra.mxu0 0.0
        %1140 = vmatpush.msra.mxu0 0.0
        %1141 = vmatpush.msra.mxu0 0.0
        %1142 = vmatpush.msra.mxu0 0.0
        %1143 = vmatpush.msra.mxu0 0.0
        %1144 = vmatpush.msra.mxu0 0.0
        %v1145 = vand.u32 %v465, 4294901760
        %v1146 = vsub.f32 %v465, %v1145
        %v1147 = vand.u32 %v1146, 4294901760
        %1148 = vmatpush.msra.mxu0 %v1147
        %v1149 = vand.u32 %v461, 4294901760
        %v1150 = vsub.f32 %v461, %v1149
        %v1151 = vand.u32 %v1150, 4294901760
        %1152 = vmatpush.msra.mxu0 %v1151
        %v1153 = vand.u32 %v1020, 4294901760
        %1154 = vmatmul.f32.gmra.mxu0 %v1153
        %v1155 = vpop.f32.mrf.mxu0
        %v1156 = vadd.f32 %v1129, %v1155
        %1157 = vdwg.mxu0
        %1158 = vmatpush.msra.mxu0 0.0
        %1159 = vmatpush.msra.mxu0 0.0
        %1160 = vmatpush.msra.mxu0 0.0
        %1161 = vmatpush.msra.mxu0 0.0
        %1162 = vmatpush.msra.mxu0 0.0
        %1163 = vmatpush.msra.mxu0 0.0
        %1164 = vmatpush.msra.mxu0 0.0
        %1165 = vmatpush.msra.mxu0 0.0
        %1166 = vmatpush.msra.mxu0 0.0
        %1167 = vmatpush.msra.mxu0 0.0
        %1168 = vmatpush.msra.mxu0 0.0
        %1169 = vmatpush.msra.mxu0 0.0
        %1170 = vmatpush.msra.mxu0 0.0
        %1171 = vmatpush.msra.mxu0 0.0
        %v1172 = vand.u32 %v465, 4294901760
        %1173 = vmatpush.msra.mxu0 %v1172
        %v1174 = vand.u32 %v461, 4294901760
        %1175 = vmatpush.msra.mxu0 %v1174
        %v1176 = vand.u32 %v1020, 4294901760
        %1177 = vmatmul.f32.gmra.mxu0 %v1176
        %v1178 = vpop.f32.mrf.mxu0
        %v1179 = vadd.f32 %v1156, %v1178
        %1180 = vdwg.mxu0
        %1181 = vmatpush.msra.mxu0 0.0
        %1182 = vmatpush.msra.mxu0 0.0
        %1183 = vmatpush.msra.mxu0 0.0
        %1184 = vmatpush.msra.mxu0 0.0
        %1185 = vmatpush.msra.mxu0 0.0
        %1186 = vmatpush.msra.mxu0 0.0
        %1187 = vmatpush.msra.mxu0 0.0
        %1188 = vmatpush.msra.mxu0 0.0
        %1189 = vmatpush.msra.mxu0 0.0
        %1190 = vmatpush.msra.mxu0 0.0
        %1191 = vmatpush.msra.mxu0 0.0
        %1192 = vmatpush.msra.mxu0 0.0
        %1193 = vmatpush.msra.mxu0 0.0
        %1194 = vmatpush.msra.mxu0 0.0
        %v1195 = vand.u32 %v649, 4294901760
        %1196 = vmatpush.msra.mxu0 %v1195
        %v1197 = vand.u32 %v645, 4294901760
        %1198 = vmatpush.msra.mxu0 %v1197
        %v1199 = vand.u32 %v1020, 4294901760
        %v1200 = vsub.f32 %v1020, %v1199
        %v1201 = vand.u32 %v1200, 4294901760
        %v1202 = vsub.f32 %v1200, %v1201
        %v1203 = vand.u32 %v1202, 4294901760
        %1204 = vmatmul.f32.gmra.mxu0 %v1203
        %v1205 = vpop.f32.mrf.mxu0
        %v1206 = vadd.f32 0.0, %v1205
        %1207 = vdwg.mxu0
        %1208 = vmatpush.msra.mxu0 0.0
        %1209 = vmatpush.msra.mxu0 0.0
        %1210 = vmatpush.msra.mxu0 0.0
        %1211 = vmatpush.msra.mxu0 0.0
        %1212 = vmatpush.msra.mxu0 0.0
        %1213 = vmatpush.msra.mxu0 0.0
        %1214 = vmatpush.msra.mxu0 0.0
        %1215 = vmatpush.msra.mxu0 0.0
        %1216 = vmatpush.msra.mxu0 0.0
        %1217 = vmatpush.msra.mxu0 0.0
        %1218 = vmatpush.msra.mxu0 0.0
        %1219 = vmatpush.msra.mxu0 0.0
        %1220 = vmatpush.msra.mxu0 0.0
        %1221 = vmatpush.msra.mxu0 0.0
        %v1222 = vand.u32 %v649, 4294901760
        %v1223 = vsub.f32 %v649, %v1222
        %v1224 = vand.u32 %v1223, 4294901760
        %v1225 = vsub.f32 %v1223, %v1224
        %v1226 = vand.u32 %v1225, 4294901760
        %1227 = vmatpush.msra.mxu0 %v1226
        %v1228 = vand.u32 %v645, 4294901760
        %v1229 = vsub.f32 %v645, %v1228
        %v1230 = vand.u32 %v1229, 4294901760
        %v1231 = vsub.f32 %v1229, %v1230
        %v1232 = vand.u32 %v1231, 4294901760
        %1233 = vmatpush.msra.mxu0 %v1232
        %v1234 = vand.u32 %v1020, 4294901760
        %1235 = vmatmul.f32.gmra.mxu0 %v1234
        %v1236 = vpop.f32.mrf.mxu0
        %v1237 = vadd.f32 %v1206, %v1236
        %1238 = vdwg.mxu0
        %1239 = vmatpush.msra.mxu0 0.0
        %1240 = vmatpush.msra.mxu0 0.0
        %1241 = vmatpush.msra.mxu0 0.0
        %1242 = vmatpush.msra.mxu0 0.0
        %1243 = vmatpush.msra.mxu0 0.0
        %1244 = vmatpush.msra.mxu0 0.0
        %1245 = vmatpush.msra.mxu0 0.0
        %1246 = vmatpush.msra.mxu0 0.0
        %1247 = vmatpush.msra.mxu0 0.0
        %1248 = vmatpush.msra.mxu0 0.0
        %1249 = vmatpush.msra.mxu0 0.0
        %1250 = vmatpush.msra.mxu0 0.0
        %1251 = vmatpush.msra.mxu0 0.0
        %1252 = vmatpush.msra.mxu0 0.0
        %v1253 = vand.u32 %v649, 4294901760
        %v1254 = vsub.f32 %v649, %v1253
        %1255 = vmatpush.msra.mxu0 %v1254
        %v1256 = vand.u32 %v645, 4294901760
        %v1257 = vsub.f32 %v645, %v1256
        %1258 = vmatpush.msra.mxu0 %v1257
        %v1259 = vand.u32 %v1020, 4294901760
        %v1260 = vsub.f32 %v1020, %v1259
        %1261 = vmatmul.f32.gmra.mxu0 %v1260
        %v1262 = vpop.f32.mrf.mxu0
        %v1263 = vadd.f32 %v1237, %v1262
        %1264 = vdwg.mxu0
        %1265 = vmatpush.msra.mxu0 0.0
        %1266 = vmatpush.msra.mxu0 0.0
        %1267 = vmatpush.msra.mxu0 0.0
        %1268 = vmatpush.msra.mxu0 0.0
        %1269 = vmatpush.msra.mxu0 0.0
        %1270 = vmatpush.msra.mxu0 0.0
        %1271 = vmatpush.msra.mxu0 0.0
        %1272 = vmatpush.msra.mxu0 0.0
        %1273 = vmatpush.msra.mxu0 0.0
        %1274 = vmatpush.msra.mxu0 0.0
        %1275 = vmatpush.msra.mxu0 0.0
        %1276 = vmatpush.msra.mxu0 0.0
        %1277 = vmatpush.msra.mxu0 0.0
        %1278 = vmatpush.msra.mxu0 0.0
        %v1279 = vand.u32 %v649, 4294901760
        %1280 = vmatpush.msra.mxu0 %v1279
        %v1281 = vand.u32 %v645, 4294901760
        %1282 = vmatpush.msra.mxu0 %v1281
        %v1283 = vand.u32 %v1020, 4294901760
        %v1284 = vsub.f32 %v1020, %v1283
        %v1285 = vand.u32 %v1284, 4294901760
        %1286 = vmatmul.f32.gmra.mxu0 %v1285
        %v1287 = vpop.f32.mrf.mxu0
        %v1288 = vadd.f32 %v1263, %v1287
        %1289 = vdwg.mxu0
        %1290 = vmatpush.msra.mxu0 0.0
        %1291 = vmatpush.msra.mxu0 0.0
        %1292 = vmatpush.msra.mxu0 0.0
        %1293 = vmatpush.msra.mxu0 0.0
        %1294 = vmatpush.msra.mxu0 0.0
        %1295 = vmatpush.msra.mxu0 0.0
        %1296 = vmatpush.msra.mxu0 0.0
        %1297 = vmatpush.msra.mxu0 0.0
        %1298 = vmatpush.msra.mxu0 0.0
        %1299 = vmatpush.msra.mxu0 0.0
        %1300 = vmatpush.msra.mxu0 0.0
        %1301 = vmatpush.msra.mxu0 0.0
        %1302 = vmatpush.msra.mxu0 0.0
        %1303 = vmatpush.msra.mxu0 0.0
        %v1304 = vand.u32 %v649, 4294901760
        %v1305 = vsub.f32 %v649, %v1304
        %v1306 = vand.u32 %v1305, 4294901760
        %1307 = vmatpush.msra.mxu0 %v1306
        %v1308 = vand.u32 %v645, 4294901760
        %v1309 = vsub.f32 %v645, %v1308
        %v1310 = vand.u32 %v1309, 4294901760
        %1311 = vmatpush.msra.mxu0 %v1310
        %v1312 = vand.u32 %v1020, 4294901760
        %1313 = vmatmul.f32.gmra.mxu0 %v1312
        %v1314 = vpop.f32.mrf.mxu0
        %v1315 = vadd.f32 %v1288, %v1314
        %1316 = vdwg.mxu0
        %1317 = vmatpush.msra.mxu0 0.0
        %1318 = vmatpush.msra.mxu0 0.0
        %1319 = vmatpush.msra.mxu0 0.0
        %1320 = vmatpush.msra.mxu0 0.0
        %1321 = vmatpush.msra.mxu0 0.0
        %1322 = vmatpush.msra.mxu0 0.0
        %1323 = vmatpush.msra.mxu0 0.0
        %1324 = vmatpush.msra.mxu0 0.0
        %1325 = vmatpush.msra.mxu0 0.0
        %1326 = vmatpush.msra.mxu0 0.0
        %1327 = vmatpush.msra.mxu0 0.0
        %1328 = vmatpush.msra.mxu0 0.0
        %1329 = vmatpush.msra.mxu0 0.0
        %1330 = vmatpush.msra.mxu0 0.0
        %v1331 = vand.u32 %v649, 4294901760
        %1332 = vmatpush.msra.mxu0 %v1331
        %v1333 = vand.u32 %v645, 4294901760
        %1334 = vmatpush.msra.mxu0 %v1333
        %v1335 = vand.u32 %v1020, 4294901760
        %1336 = vmatmul.f32.gmra.mxu0 %v1335
        %v1337 = vpop.f32.mrf.mxu0
        %v1338 = vadd.f32 %v1315, %v1337
        %1339 = vdwg.mxu0
        %1340 = vmatpush.msra.mxu0 0.0
        %1341 = vmatpush.msra.mxu0 0.0
        %1342 = vmatpush.msra.mxu0 0.0
        %1343 = vmatpush.msra.mxu0 0.0
        %1344 = vmatpush.msra.mxu0 0.0
        %1345 = vmatpush.msra.mxu0 0.0
        %1346 = vmatpush.msra.mxu0 0.0
        %1347 = vmatpush.msra.mxu0 0.0
        %1348 = vmatpush.msra.mxu0 0.0
        %1349 = vmatpush.msra.mxu0 0.0
        %1350 = vmatpush.msra.mxu0 0.0
        %1351 = vmatpush.msra.mxu0 0.0
        %1352 = vmatpush.msra.mxu0 0.0
        %1353 = vmatpush.msra.mxu0 0.0
        %v1354 = vand.u32 %v833, 4294901760
        %1355 = vmatpush.msra.mxu0 %v1354
        %v1356 = vand.u32 %v829, 4294901760
        %1357 = vmatpush.msra.mxu0 %v1356
        %v1358 = vand.u32 %v1020, 4294901760
        %v1359 = vsub.f32 %v1020, %v1358
        %v1360 = vand.u32 %v1359, 4294901760
        %v1361 = vsub.f32 %v1359, %v1360
        %v1362 = vand.u32 %v1361, 4294901760
        %1363 = vmatmul.f32.gmra.mxu0 %v1362
        %v1364 = vpop.f32.mrf.mxu0
        %v1365 = vadd.f32 0.0, %v1364
        %1366 = vdwg.mxu0
        %1367 = vmatpush.msra.mxu0 0.0
        %1368 = vmatpush.msra.mxu0 0.0
        %1369 = vmatpush.msra.mxu0 0.0
        %1370 = vmatpush.msra.mxu0 0.0
        %1371 = vmatpush.msra.mxu0 0.0
        %1372 = vmatpush.msra.mxu0 0.0
        %1373 = vmatpush.msra.mxu0 0.0
        %1374 = vmatpush.msra.mxu0 0.0
        %1375 = vmatpush.msra.mxu0 0.0
        %1376 = vmatpush.msra.mxu0 0.0
        %1377 = vmatpush.msra.mxu0 0.0
        %1378 = vmatpush.msra.mxu0 0.0
        %1379 = vmatpush.msra.mxu0 0.0
        %1380 = vmatpush.msra.mxu0 0.0
        %v1381 = vand.u32 %v833, 4294901760
        %v1382 = vsub.f32 %v833, %v1381
        %v1383 = vand.u32 %v1382, 4294901760
        %v1384 = vsub.f32 %v1382, %v1383
        %v1385 = vand.u32 %v1384, 4294901760
        %1386 = vmatpush.msra.mxu0 %v1385
        %v1387 = vand.u32 %v829, 4294901760
        %v1388 = vsub.f32 %v829, %v1387
        %v1389 = vand.u32 %v1388, 4294901760
        %v1390 = vsub.f32 %v1388, %v1389
        %v1391 = vand.u32 %v1390, 4294901760
        %1392 = vmatpush.msra.mxu0 %v1391
        %v1393 = vand.u32 %v1020, 4294901760
        %1394 = vmatmul.f32.gmra.mxu0 %v1393
        %v1395 = vpop.f32.mrf.mxu0
        %v1396 = vadd.f32 %v1365, %v1395
        %1397 = vdwg.mxu0
        %1398 = vmatpush.msra.mxu0 0.0
        %1399 = vmatpush.msra.mxu0 0.0
        %1400 = vmatpush.msra.mxu0 0.0
        %1401 = vmatpush.msra.mxu0 0.0
        %1402 = vmatpush.msra.mxu0 0.0
        %1403 = vmatpush.msra.mxu0 0.0
        %1404 = vmatpush.msra.mxu0 0.0
        %1405 = vmatpush.msra.mxu0 0.0
        %1406 = vmatpush.msra.mxu0 0.0
        %1407 = vmatpush.msra.mxu0 0.0
        %1408 = vmatpush.msra.mxu0 0.0
        %1409 = vmatpush.msra.mxu0 0.0
        %1410 = vmatpush.msra.mxu0 0.0
        %1411 = vmatpush.msra.mxu0 0.0
        %v1412 = vand.u32 %v833, 4294901760
        %v1413 = vsub.f32 %v833, %v1412
        %1414 = vmatpush.msra.mxu0 %v1413
        %v1415 = vand.u32 %v829, 4294901760
        %v1416 = vsub.f32 %v829, %v1415
        %1417 = vmatpush.msra.mxu0 %v1416
        %v1418 = vand.u32 %v1020, 4294901760
        %v1419 = vsub.f32 %v1020, %v1418
        %1420 = vmatmul.f32.gmra.mxu0 %v1419
        %v1421 = vpop.f32.mrf.mxu0
        %v1422 = vadd.f32 %v1396, %v1421
        %1423 = vdwg.mxu0
        %1424 = vmatpush.msra.mxu0 0.0
        %1425 = vmatpush.msra.mxu0 0.0
        %1426 = vmatpush.msra.mxu0 0.0
        %1427 = vmatpush.msra.mxu0 0.0
        %1428 = vmatpush.msra.mxu0 0.0
        %1429 = vmatpush.msra.mxu0 0.0
        %1430 = vmatpush.msra.mxu0 0.0
        %1431 = vmatpush.msra.mxu0 0.0
        %1432 = vmatpush.msra.mxu0 0.0
        %1433 = vmatpush.msra.mxu0 0.0
        %1434 = vmatpush.msra.mxu0 0.0
        %1435 = vmatpush.msra.mxu0 0.0
        %1436 = vmatpush.msra.mxu0 0.0
        %1437 = vmatpush.msra.mxu0 0.0
        %v1438 = vand.u32 %v833, 4294901760
        %1439 = vmatpush.msra.mxu0 %v1438
        %v1440 = vand.u32 %v829, 4294901760
        %1441 = vmatpush.msra.mxu0 %v1440
        %v1442 = vand.u32 %v1020, 4294901760
        %v1443 = vsub.f32 %v1020, %v1442
        %v1444 = vand.u32 %v1443, 4294901760
        %1445 = vmatmul.f32.gmra.mxu0 %v1444
        %v1446 = vpop.f32.mrf.mxu0
        %v1447 = vadd.f32 %v1422, %v1446
        %1448 = vdwg.mxu0
        %1449 = vmatpush.msra.mxu0 0.0
        %1450 = vmatpush.msra.mxu0 0.0
        %1451 = vmatpush.msra.mxu0 0.0
        %1452 = vmatpush.msra.mxu0 0.0
        %1453 = vmatpush.msra.mxu0 0.0
        %1454 = vmatpush.msra.mxu0 0.0
        %1455 = vmatpush.msra.mxu0 0.0
        %1456 = vmatpush.msra.mxu0 0.0
        %1457 = vmatpush.msra.mxu0 0.0
        %1458 = vmatpush.msra.mxu0 0.0
        %1459 = vmatpush.msra.mxu0 0.0
        %1460 = vmatpush.msra.mxu0 0.0
        %1461 = vmatpush.msra.mxu0 0.0
        %1462 = vmatpush.msra.mxu0 0.0
        %v1463 = vand.u32 %v833, 4294901760
        %v1464 = vsub.f32 %v833, %v1463
        %v1465 = vand.u32 %v1464, 4294901760
        %1466 = vmatpush.msra.mxu0 %v1465
        %v1467 = vand.u32 %v829, 4294901760
        %v1468 = vsub.f32 %v829, %v1467
        %v1469 = vand.u32 %v1468, 4294901760
        %1470 = vmatpush.msra.mxu0 %v1469
        %v1471 = vand.u32 %v1020, 4294901760
        %1472 = vmatmul.f32.gmra.mxu0 %v1471
        %v1473 = vpop.f32.mrf.mxu0
        %v1474 = vadd.f32 %v1447, %v1473
        %1475 = vdwg.mxu0
        %1476 = vmatpush.msra.mxu0 0.0
        %1477 = vmatpush.msra.mxu0 0.0
        %1478 = vmatpush.msra.mxu0 0.0
        %1479 = vmatpush.msra.mxu0 0.0
        %1480 = vmatpush.msra.mxu0 0.0
        %1481 = vmatpush.msra.mxu0 0.0
        %1482 = vmatpush.msra.mxu0 0.0
        %1483 = vmatpush.msra.mxu0 0.0
        %1484 = vmatpush.msra.mxu0 0.0
        %1485 = vmatpush.msra.mxu0 0.0
        %1486 = vmatpush.msra.mxu0 0.0
        %1487 = vmatpush.msra.mxu0 0.0
        %1488 = vmatpush.msra.mxu0 0.0
        %1489 = vmatpush.msra.mxu0 0.0
        %v1490 = vand.u32 %v833, 4294901760
        %1491 = vmatpush.msra.mxu0 %v1490
        %v1492 = vand.u32 %v829, 4294901760
        %1493 = vmatpush.msra.mxu0 %v1492
        %v1494 = vand.u32 %v1020, 4294901760
        %1495 = vmatmul.f32.gmra.mxu0 %v1494
        %v1496 = vpop.f32.mrf.mxu0
        %v1497 = vadd.f32 %v1474, %v1496
        %1498 = vdwg.mxu0
        %1499 = vmatpush.msra.mxu0 0.0
        %1500 = vmatpush.msra.mxu0 0.0
        %1501 = vmatpush.msra.mxu0 0.0
        %1502 = vmatpush.msra.mxu0 0.0
        %1503 = vmatpush.msra.mxu0 0.0
        %1504 = vmatpush.msra.mxu0 0.0
        %1505 = vmatpush.msra.mxu0 0.0
        %1506 = vmatpush.msra.mxu0 0.0
        %1507 = vmatpush.msra.mxu0 0.0
        %1508 = vmatpush.msra.mxu0 0.0
        %1509 = vmatpush.msra.mxu0 0.0
        %1510 = vmatpush.msra.mxu0 0.0
        %1511 = vmatpush.msra.mxu0 0.0
        %1512 = vmatpush.msra.mxu0 0.0
        %v1513 = vand.u32 %v1017, 4294901760
        %1514 = vmatpush.msra.mxu0 %v1513
        %v1515 = vand.u32 %v1013, 4294901760
        %1516 = vmatpush.msra.mxu0 %v1515
        %v1517 = vand.u32 %v1020, 4294901760
        %v1518 = vsub.f32 %v1020, %v1517
        %v1519 = vand.u32 %v1518, 4294901760
        %v1520 = vsub.f32 %v1518, %v1519
        %v1521 = vand.u32 %v1520, 4294901760
        %1522 = vmatmul.f32.gmra.mxu0 %v1521
        %v1523 = vpop.f32.mrf.mxu0
        %v1524 = vadd.f32 0.0, %v1523
        %1525 = vdwg.mxu0
        %1526 = vmatpush.msra.mxu0 0.0
        %1527 = vmatpush.msra.mxu0 0.0
        %1528 = vmatpush.msra.mxu0 0.0
        %1529 = vmatpush.msra.mxu0 0.0
        %1530 = vmatpush.msra.mxu0 0.0
        %1531 = vmatpush.msra.mxu0 0.0
        %1532 = vmatpush.msra.mxu0 0.0
        %1533 = vmatpush.msra.mxu0 0.0
        %1534 = vmatpush.msra.mxu0 0.0
        %1535 = vmatpush.msra.mxu0 0.0
        %1536 = vmatpush.msra.mxu0 0.0
        %1537 = vmatpush.msra.mxu0 0.0
        %1538 = vmatpush.msra.mxu0 0.0
        %1539 = vmatpush.msra.mxu0 0.0
        %v1540 = vand.u32 %v1017, 4294901760
        %v1541 = vsub.f32 %v1017, %v1540
        %v1542 = vand.u32 %v1541, 4294901760
        %v1543 = vsub.f32 %v1541, %v1542
        %v1544 = vand.u32 %v1543, 4294901760
        %1545 = vmatpush.msra.mxu0 %v1544
        %v1546 = vand.u32 %v1013, 4294901760
        %v1547 = vsub.f32 %v1013, %v1546
        %v1548 = vand.u32 %v1547, 4294901760
        %v1549 = vsub.f32 %v1547, %v1548
        %v1550 = vand.u32 %v1549, 4294901760
        %1551 = vmatpush.msra.mxu0 %v1550
        %v1552 = vand.u32 %v1020, 4294901760
        %1553 = vmatmul.f32.gmra.mxu0 %v1552
        %v1554 = vpop.f32.mrf.mxu0
        %v1555 = vadd.f32 %v1524, %v1554
        %1556 = vdwg.mxu0
        %1557 = vmatpush.msra.mxu0 0.0
        %1558 = vmatpush.msra.mxu0 0.0
        %1559 = vmatpush.msra.mxu0 0.0
        %1560 = vmatpush.msra.mxu0 0.0
        %1561 = vmatpush.msra.mxu0 0.0
        %1562 = vmatpush.msra.mxu0 0.0
        %1563 = vmatpush.msra.mxu0 0.0
        %1564 = vmatpush.msra.mxu0 0.0
        %1565 = vmatpush.msra.mxu0 0.0
        %1566 = vmatpush.msra.mxu0 0.0
        %1567 = vmatpush.msra.mxu0 0.0
        %1568 = vmatpush.msra.mxu0 0.0
        %1569 = vmatpush.msra.mxu0 0.0
        %1570 = vmatpush.msra.mxu0 0.0
        %v1571 = vand.u32 %v1017, 4294901760
        %v1572 = vsub.f32 %v1017, %v1571
        %1573 = vmatpush.msra.mxu0 %v1572
        %v1574 = vand.u32 %v1013, 4294901760
        %v1575 = vsub.f32 %v1013, %v1574
        %1576 = vmatpush.msra.mxu0 %v1575
        %v1577 = vand.u32 %v1020, 4294901760
        %v1578 = vsub.f32 %v1020, %v1577
        %1579 = vmatmul.f32.gmra.mxu0 %v1578
        %v1580 = vpop.f32.mrf.mxu0
        %v1581 = vadd.f32 %v1555, %v1580
        %1582 = vdwg.mxu0
        %1583 = vmatpush.msra.mxu0 0.0
        %1584 = vmatpush.msra.mxu0 0.0
        %1585 = vmatpush.msra.mxu0 0.0
        %1586 = vmatpush.msra.mxu0 0.0
        %1587 = vmatpush.msra.mxu0 0.0
        %1588 = vmatpush.msra.mxu0 0.0
        %1589 = vmatpush.msra.mxu0 0.0
        %1590 = vmatpush.msra.mxu0 0.0
        %1591 = vmatpush.msra.mxu0 0.0
        %1592 = vmatpush.msra.mxu0 0.0
        %1593 = vmatpush.msra.mxu0 0.0
        %1594 = vmatpush.msra.mxu0 0.0
        %1595 = vmatpush.msra.mxu0 0.0
        %1596 = vmatpush.msra.mxu0 0.0
        %v1597 = vand.u32 %v1017, 4294901760
        %1598 = vmatpush.msra.mxu0 %v1597
        %v1599 = vand.u32 %v1013, 4294901760
        %1600 = vmatpush.msra.mxu0 %v1599
        %v1601 = vand.u32 %v1020, 4294901760
        %v1602 = vsub.f32 %v1020, %v1601
        %v1603 = vand.u32 %v1602, 4294901760
        %1604 = vmatmul.f32.gmra.mxu0 %v1603
        %v1605 = vpop.f32.mrf.mxu0
        %v1606 = vadd.f32 %v1581, %v1605
        %1607 = vdwg.mxu0
        %1608 = vmatpush.msra.mxu0 0.0
        %1609 = vmatpush.msra.mxu0 0.0
        %1610 = vmatpush.msra.mxu0 0.0
        %1611 = vmatpush.msra.mxu0 0.0
        %1612 = vmatpush.msra.mxu0 0.0
        %1613 = vmatpush.msra.mxu0 0.0
        %1614 = vmatpush.msra.mxu0 0.0
        %1615 = vmatpush.msra.mxu0 0.0
        %1616 = vmatpush.msra.mxu0 0.0
        %1617 = vmatpush.msra.mxu0 0.0
        %1618 = vmatpush.msra.mxu0 0.0
        %1619 = vmatpush.msra.mxu0 0.0
        %1620 = vmatpush.msra.mxu0 0.0
        %1621 = vmatpush.msra.mxu0 0.0
        %v1622 = vand.u32 %v1017, 4294901760
        %v1623 = vsub.f32 %v1017, %v1622
        %v1624 = vand.u32 %v1623, 4294901760
        %1625 = vmatpush.msra.mxu0 %v1624
        %v1626 = vand.u32 %v1013, 4294901760
        %v1627 = vsub.f32 %v1013, %v1626
        %v1628 = vand.u32 %v1627, 4294901760
        %1629 = vmatpush.msra.mxu0 %v1628
        %v1630 = vand.u32 %v1020, 4294901760
        %1631 = vmatmul.f32.gmra.mxu0 %v1630
        %v1632 = vpop.f32.mrf.mxu0
        %v1633 = vadd.f32 %v1606, %v1632
        %1634 = vdwg.mxu0
        %1635 = vmatpush.msra.mxu0 0.0
        %1636 = vmatpush.msra.mxu0 0.0
        %1637 = vmatpush.msra.mxu0 0.0
        %1638 = vmatpush.msra.mxu0 0.0
        %1639 = vmatpush.msra.mxu0 0.0
        %1640 = vmatpush.msra.mxu0 0.0
        %1641 = vmatpush.msra.mxu0 0.0
        %1642 = vmatpush.msra.mxu0 0.0
        %1643 = vmatpush.msra.mxu0 0.0
        %1644 = vmatpush.msra.mxu0 0.0
        %1645 = vmatpush.msra.mxu0 0.0
        %1646 = vmatpush.msra.mxu0 0.0
        %1647 = vmatpush.msra.mxu0 0.0
        %1648 = vmatpush.msra.mxu0 0.0
        %v1649 = vand.u32 %v1017, 4294901760
        %1650 = vmatpush.msra.mxu0 %v1649
        %v1651 = vand.u32 %v1013, 4294901760
        %1652 = vmatpush.msra.mxu0 %v1651
        %v1653 = vand.u32 %v1020, 4294901760
        %1654 = vmatmul.f32.gmra.mxu0 %v1653
        %v1655 = vpop.f32.mrf.mxu0
        %v1656 = vadd.f32 %v1633, %v1655
        %1657 = vdwg.mxu0
        %vm1658 = vcmask 64512
        %1659 = vst.msk [vmem:[%s217] sm:$0xff] %vm1658, %v1179
        %1660 = vst.msk [vmem:[%s217 + $0x8] sm:$0xff] %vm1658, %v1338
        %1661 = vst.msk [vmem:[%s217 + $0x10] sm:$0xff] %vm1658, %v1497
        %1662 = vst.msk [vmem:[%s217 + $0x18] sm:$0xff] %vm1658, %v1656
        %vm1663 = vcmp.lt.s32.totalorder %v263, 8
        %v1664 = vsel %vm1663, 0.5, 1.0
        %v1665 = vsel %vm270, %v1664, 0.0
        %vm1666 = vcmp.lt.s32.totalorder %v275, 8
        %v1667 = vsel %vm1666, 0.5, 1.0
        %v1668 = vsel %vm280, %v1667, 0.0
        %v1670 = vsel %vm1658, %v1179, 0
        %1672 = vmatpush.msra.mxu0 0.0
        %1673 = vmatpush.msra.mxu0 0.0
        %1674 = vmatpush.msra.mxu0 0.0
        %1675 = vmatpush.msra.mxu0 0.0
        %1676 = vmatpush.msra.mxu0 0.0
        %1677 = vmatpush.msra.mxu0 0.0
        %1678 = vmatpush.msra.mxu0 0.0
        %1679 = vmatpush.msra.mxu0 0.0
        %1680 = vmatpush.msra.mxu0 0.0
        %1681 = vmatpush.msra.mxu0 0.0
        %1682 = vmatpush.msra.mxu0 0.0
        %1683 = vmatpush.msra.mxu0 0.0
        %1684 = vmatpush.msra.mxu0 0.0
        %1685 = vmatpush.msra.mxu0 0.0
        %1686 = vmatpush.msra.mxu0 0.0
        %1687 = vmatpush.msra.mxu0 %v1665
        %v1688 = vand.u32 %v1670, 4294901760
        %v1689 = vsub.f32 %v1670, %v1688
        %v1690 = vand.u32 %v1689, 4294901760
        %v1691 = vsub.f32 %v1689, %v1690
        %v1692 = vand.u32 %v1691, 4294901760
        %1693 = vmatmul.f32.gmra.mxu0 %v1692
        %v1694 = vpop.f32.mrf.mxu0
        %v1695 = vadd.f32 0.0, %v1694
        %1696 = vdwg.mxu0
        %1697 = vmatpush.msra.mxu0 0.0
        %1698 = vmatpush.msra.mxu0 0.0
        %1699 = vmatpush.msra.mxu0 0.0
        %1700 = vmatpush.msra.mxu0 0.0
        %1701 = vmatpush.msra.mxu0 0.0
        %1702 = vmatpush.msra.mxu0 0.0
        %1703 = vmatpush.msra.mxu0 0.0
        %1704 = vmatpush.msra.mxu0 0.0
        %1705 = vmatpush.msra.mxu0 0.0
        %1706 = vmatpush.msra.mxu0 0.0
        %1707 = vmatpush.msra.mxu0 0.0
        %1708 = vmatpush.msra.mxu0 0.0
        %1709 = vmatpush.msra.mxu0 0.0
        %1710 = vmatpush.msra.mxu0 0.0
        %1711 = vmatpush.msra.mxu0 0.0
        %v1712 = vsub.f32 %v1665, %v1665
        %v1713 = vand.u32 %v1712, 4294901760
        %v1714 = vsub.f32 %v1712, %v1713
        %v1715 = vand.u32 %v1714, 4294901760
        %1716 = vmatpush.msra.mxu0 %v1715
        %v1717 = vand.u32 %v1670, 4294901760
        %1718 = vmatmul.f32.gmra.mxu0 %v1717
        %v1719 = vpop.f32.mrf.mxu0
        %v1720 = vadd.f32 %v1695, %v1719
        %1721 = vdwg.mxu0
        %1722 = vmatpush.msra.mxu0 0.0
        %1723 = vmatpush.msra.mxu0 0.0
        %1724 = vmatpush.msra.mxu0 0.0
        %1725 = vmatpush.msra.mxu0 0.0
        %1726 = vmatpush.msra.mxu0 0.0
        %1727 = vmatpush.msra.mxu0 0.0
        %1728 = vmatpush.msra.mxu0 0.0
        %1729 = vmatpush.msra.mxu0 0.0
        %1730 = vmatpush.msra.mxu0 0.0
        %1731 = vmatpush.msra.mxu0 0.0
        %1732 = vmatpush.msra.mxu0 0.0
        %1733 = vmatpush.msra.mxu0 0.0
        %1734 = vmatpush.msra.mxu0 0.0
        %1735 = vmatpush.msra.mxu0 0.0
        %1736 = vmatpush.msra.mxu0 0.0
        %v1737 = vsub.f32 %v1665, %v1665
        %1738 = vmatpush.msra.mxu0 %v1737
        %v1739 = vand.u32 %v1670, 4294901760
        %v1740 = vsub.f32 %v1670, %v1739
        %1741 = vmatmul.f32.gmra.mxu0 %v1740
        %v1742 = vpop.f32.mrf.mxu0
        %v1743 = vadd.f32 %v1720, %v1742
        %1744 = vdwg.mxu0
        %1745 = vmatpush.msra.mxu0 0.0
        %1746 = vmatpush.msra.mxu0 0.0
        %1747 = vmatpush.msra.mxu0 0.0
        %1748 = vmatpush.msra.mxu0 0.0
        %1749 = vmatpush.msra.mxu0 0.0
        %1750 = vmatpush.msra.mxu0 0.0
        %1751 = vmatpush.msra.mxu0 0.0
        %1752 = vmatpush.msra.mxu0 0.0
        %1753 = vmatpush.msra.mxu0 0.0
        %1754 = vmatpush.msra.mxu0 0.0
        %1755 = vmatpush.msra.mxu0 0.0
        %1756 = vmatpush.msra.mxu0 0.0
        %1757 = vmatpush.msra.mxu0 0.0
        %1758 = vmatpush.msra.mxu0 0.0
        %1759 = vmatpush.msra.mxu0 0.0
        %1760 = vmatpush.msra.mxu0 %v1665
        %v1761 = vand.u32 %v1670, 4294901760
        %v1762 = vsub.f32 %v1670, %v1761
        %v1763 = vand.u32 %v1762, 4294901760
        %1764 = vmatmul.f32.gmra.mxu0 %v1763
        %v1765 = vpop.f32.mrf.mxu0
        %v1766 = vadd.f32 %v1743, %v1765
        %1767 = vdwg.mxu0
        %1768 = vmatpush.msra.mxu0 0.0
        %1769 = vmatpush.msra.mxu0 0.0
        %1770 = vmatpush.msra.mxu0 0.0
        %1771 = vmatpush.msra.mxu0 0.0
        %1772 = vmatpush.msra.mxu0 0.0
        %1773 = vmatpush.msra.mxu0 0.0
        %1774 = vmatpush.msra.mxu0 0.0
        %1775 = vmatpush.msra.mxu0 0.0
        %1776 = vmatpush.msra.mxu0 0.0
        %1777 = vmatpush.msra.mxu0 0.0
        %1778 = vmatpush.msra.mxu0 0.0
        %1779 = vmatpush.msra.mxu0 0.0
        %1780 = vmatpush.msra.mxu0 0.0
        %1781 = vmatpush.msra.mxu0 0.0
        %1782 = vmatpush.msra.mxu0 0.0
        %v1783 = vsub.f32 %v1665, %v1665
        %v1784 = vand.u32 %v1783, 4294901760
        %1785 = vmatpush.msra.mxu0 %v1784
        %v1786 = vand.u32 %v1670, 4294901760
        %1787 = vmatmul.f32.gmra.mxu0 %v1786
        %v1788 = vpop.f32.mrf.mxu0
        %v1789 = vadd.f32 %v1766, %v1788
        %1790 = vdwg.mxu0
        %1791 = vmatpush.msra.mxu0 0.0
        %1792 = vmatpush.msra.mxu0 0.0
        %1793 = vmatpush.msra.mxu0 0.0
        %1794 = vmatpush.msra.mxu0 0.0
        %1795 = vmatpush.msra.mxu0 0.0
        %1796 = vmatpush.msra.mxu0 0.0
        %1797 = vmatpush.msra.mxu0 0.0
        %1798 = vmatpush.msra.mxu0 0.0
        %1799 = vmatpush.msra.mxu0 0.0
        %1800 = vmatpush.msra.mxu0 0.0
        %1801 = vmatpush.msra.mxu0 0.0
        %1802 = vmatpush.msra.mxu0 0.0
        %1803 = vmatpush.msra.mxu0 0.0
        %1804 = vmatpush.msra.mxu0 0.0
        %1805 = vmatpush.msra.mxu0 0.0
        %1806 = vmatpush.msra.mxu0 %v1665
        %v1807 = vand.u32 %v1670, 4294901760
        %1808 = vmatmul.f32.gmra.mxu0 %v1807
        %v1809 = vpop.f32.mrf.mxu0
        %v1810 = vadd.f32 %v1789, %v1809
        %1811 = vdwg.mxu0
        %v1813 = vsel %vm1658, %v1338, 0
        %1815 = vmatpush.msra.mxu0 0.0
        %1816 = vmatpush.msra.mxu0 0.0
        %1817 = vmatpush.msra.mxu0 0.0
        %1818 = vmatpush.msra.mxu0 0.0
        %1819 = vmatpush.msra.mxu0 0.0
        %1820 = vmatpush.msra.mxu0 0.0
        %1821 = vmatpush.msra.mxu0 0.0
        %1822 = vmatpush.msra.mxu0 0.0
        %1823 = vmatpush.msra.mxu0 0.0
        %1824 = vmatpush.msra.mxu0 0.0
        %1825 = vmatpush.msra.mxu0 0.0
        %1826 = vmatpush.msra.mxu0 0.0
        %1827 = vmatpush.msra.mxu0 0.0
        %1828 = vmatpush.msra.mxu0 0.0
        %1829 = vmatpush.msra.mxu0 0.0
        %1830 = vmatpush.msra.mxu0 %v1665
        %v1831 = vand.u32 %v1813, 4294901760
        %v1832 = vsub.f32 %v1813, %v1831
        %v1833 = vand.u32 %v1832, 4294901760
        %v1834 = vsub.f32 %v1832, %v1833
        %v1835 = vand.u32 %v1834, 4294901760
        %1836 = vmatmul.f32.gmra.mxu0 %v1835
        %v1837 = vpop.f32.mrf.mxu0
        %v1838 = vadd.f32 0.0, %v1837
        %1839 = vdwg.mxu0
        %1840 = vmatpush.msra.mxu0 0.0
        %1841 = vmatpush.msra.mxu0 0.0
        %1842 = vmatpush.msra.mxu0 0.0
        %1843 = vmatpush.msra.mxu0 0.0
        %1844 = vmatpush.msra.mxu0 0.0
        %1845 = vmatpush.msra.mxu0 0.0
        %1846 = vmatpush.msra.mxu0 0.0
        %1847 = vmatpush.msra.mxu0 0.0
        %1848 = vmatpush.msra.mxu0 0.0
        %1849 = vmatpush.msra.mxu0 0.0
        %1850 = vmatpush.msra.mxu0 0.0
        %1851 = vmatpush.msra.mxu0 0.0
        %1852 = vmatpush.msra.mxu0 0.0
        %1853 = vmatpush.msra.mxu0 0.0
        %1854 = vmatpush.msra.mxu0 0.0
        %v1855 = vsub.f32 %v1665, %v1665
        %v1856 = vand.u32 %v1855, 4294901760
        %v1857 = vsub.f32 %v1855, %v1856
        %v1858 = vand.u32 %v1857, 4294901760
        %1859 = vmatpush.msra.mxu0 %v1858
        %v1860 = vand.u32 %v1813, 4294901760
        %1861 = vmatmul.f32.gmra.mxu0 %v1860
        %v1862 = vpop.f32.mrf.mxu0
        %v1863 = vadd.f32 %v1838, %v1862
        %1864 = vdwg.mxu0
        %1865 = vmatpush.msra.mxu0 0.0
        %1866 = vmatpush.msra.mxu0 0.0
        %1867 = vmatpush.msra.mxu0 0.0
        %1868 = vmatpush.msra.mxu0 0.0
        %1869 = vmatpush.msra.mxu0 0.0
        %1870 = vmatpush.msra.mxu0 0.0
        %1871 = vmatpush.msra.mxu0 0.0
        %1872 = vmatpush.msra.mxu0 0.0
        %1873 = vmatpush.msra.mxu0 0.0
        %1874 = vmatpush.msra.mxu0 0.0
        %1875 = vmatpush.msra.mxu0 0.0
        %1876 = vmatpush.msra.mxu0 0.0
        %1877 = vmatpush.msra.mxu0 0.0
        %1878 = vmatpush.msra.mxu0 0.0
        %1879 = vmatpush.msra.mxu0 0.0
        %v1880 = vsub.f32 %v1665, %v1665
        %1881 = vmatpush.msra.mxu0 %v1880
        %v1882 = vand.u32 %v1813, 4294901760
        %v1883 = vsub.f32 %v1813, %v1882
        %1884 = vmatmul.f32.gmra.mxu0 %v1883
        %v1885 = vpop.f32.mrf.mxu0
        %v1886 = vadd.f32 %v1863, %v1885
        %1887 = vdwg.mxu0
        %1888 = vmatpush.msra.mxu0 0.0
        %1889 = vmatpush.msra.mxu0 0.0
        %1890 = vmatpush.msra.mxu0 0.0
        %1891 = vmatpush.msra.mxu0 0.0
        %1892 = vmatpush.msra.mxu0 0.0
        %1893 = vmatpush.msra.mxu0 0.0
        %1894 = vmatpush.msra.mxu0 0.0
        %1895 = vmatpush.msra.mxu0 0.0
        %1896 = vmatpush.msra.mxu0 0.0
        %1897 = vmatpush.msra.mxu0 0.0
        %1898 = vmatpush.msra.mxu0 0.0
        %1899 = vmatpush.msra.mxu0 0.0
        %1900 = vmatpush.msra.mxu0 0.0
        %1901 = vmatpush.msra.mxu0 0.0
        %1902 = vmatpush.msra.mxu0 0.0
        %1903 = vmatpush.msra.mxu0 %v1665
        %v1904 = vand.u32 %v1813, 4294901760
        %v1905 = vsub.f32 %v1813, %v1904
        %v1906 = vand.u32 %v1905, 4294901760
        %1907 = vmatmul.f32.gmra.mxu0 %v1906
        %v1908 = vpop.f32.mrf.mxu0
        %v1909 = vadd.f32 %v1886, %v1908
        %1910 = vdwg.mxu0
        %1911 = vmatpush.msra.mxu0 0.0
        %1912 = vmatpush.msra.mxu0 0.0
        %1913 = vmatpush.msra.mxu0 0.0
        %1914 = vmatpush.msra.mxu0 0.0
        %1915 = vmatpush.msra.mxu0 0.0
        %1916 = vmatpush.msra.mxu0 0.0
        %1917 = vmatpush.msra.mxu0 0.0
        %1918 = vmatpush.msra.mxu0 0.0
        %1919 = vmatpush.msra.mxu0 0.0
        %1920 = vmatpush.msra.mxu0 0.0
        %1921 = vmatpush.msra.mxu0 0.0
        %1922 = vmatpush.msra.mxu0 0.0
        %1923 = vmatpush.msra.mxu0 0.0
        %1924 = vmatpush.msra.mxu0 0.0
        %1925 = vmatpush.msra.mxu0 0.0
        %v1926 = vsub.f32 %v1665, %v1665
        %v1927 = vand.u32 %v1926, 4294901760
        %1928 = vmatpush.msra.mxu0 %v1927
        %v1929 = vand.u32 %v1813, 4294901760
        %1930 = vmatmul.f32.gmra.mxu0 %v1929
        %v1931 = vpop.f32.mrf.mxu0
        %v1932 = vadd.f32 %v1909, %v1931
        %1933 = vdwg.mxu0
        %1934 = vmatpush.msra.mxu0 0.0
        %1935 = vmatpush.msra.mxu0 0.0
        %1936 = vmatpush.msra.mxu0 0.0
        %1937 = vmatpush.msra.mxu0 0.0
        %1938 = vmatpush.msra.mxu0 0.0
        %1939 = vmatpush.msra.mxu0 0.0
        %1940 = vmatpush.msra.mxu0 0.0
        %1941 = vmatpush.msra.mxu0 0.0
        %1942 = vmatpush.msra.mxu0 0.0
        %1943 = vmatpush.msra.mxu0 0.0
        %1944 = vmatpush.msra.mxu0 0.0
        %1945 = vmatpush.msra.mxu0 0.0
        %1946 = vmatpush.msra.mxu0 0.0
        %1947 = vmatpush.msra.mxu0 0.0
        %1948 = vmatpush.msra.mxu0 0.0
        %1949 = vmatpush.msra.mxu0 %v1665
        %v1950 = vand.u32 %v1813, 4294901760
        %1951 = vmatmul.f32.gmra.mxu0 %v1950
        %v1952 = vpop.f32.mrf.mxu0
        %v1953 = vadd.f32 %v1932, %v1952
        %1954 = vdwg.mxu0
        %v1956 = vsel %vm1658, %v1497, 0
        %1958 = vmatpush.msra.mxu0 0.0
        %1959 = vmatpush.msra.mxu0 0.0
        %1960 = vmatpush.msra.mxu0 0.0
        %1961 = vmatpush.msra.mxu0 0.0
        %1962 = vmatpush.msra.mxu0 0.0
        %1963 = vmatpush.msra.mxu0 0.0
        %1964 = vmatpush.msra.mxu0 0.0
        %1965 = vmatpush.msra.mxu0 0.0
        %1966 = vmatpush.msra.mxu0 0.0
        %1967 = vmatpush.msra.mxu0 0.0
        %1968 = vmatpush.msra.mxu0 0.0
        %1969 = vmatpush.msra.mxu0 0.0
        %1970 = vmatpush.msra.mxu0 0.0
        %1971 = vmatpush.msra.mxu0 0.0
        %1972 = vmatpush.msra.mxu0 0.0
        %1973 = vmatpush.msra.mxu0 %v1665
        %v1974 = vand.u32 %v1956, 4294901760
        %v1975 = vsub.f32 %v1956, %v1974
        %v1976 = vand.u32 %v1975, 4294901760
        %v1977 = vsub.f32 %v1975, %v1976
        %v1978 = vand.u32 %v1977, 4294901760
        %1979 = vmatmul.f32.gmra.mxu0 %v1978
        %v1980 = vpop.f32.mrf.mxu0
        %v1981 = vadd.f32 0.0, %v1980
        %1982 = vdwg.mxu0
        %1983 = vmatpush.msra.mxu0 0.0
        %1984 = vmatpush.msra.mxu0 0.0
        %1985 = vmatpush.msra.mxu0 0.0
        %1986 = vmatpush.msra.mxu0 0.0
        %1987 = vmatpush.msra.mxu0 0.0
        %1988 = vmatpush.msra.mxu0 0.0
        %1989 = vmatpush.msra.mxu0 0.0
        %1990 = vmatpush.msra.mxu0 0.0
        %1991 = vmatpush.msra.mxu0 0.0
        %1992 = vmatpush.msra.mxu0 0.0
        %1993 = vmatpush.msra.mxu0 0.0
        %1994 = vmatpush.msra.mxu0 0.0
        %1995 = vmatpush.msra.mxu0 0.0
        %1996 = vmatpush.msra.mxu0 0.0
        %1997 = vmatpush.msra.mxu0 0.0
        %v1998 = vsub.f32 %v1665, %v1665
        %v1999 = vand.u32 %v1998, 4294901760
        %v2000 = vsub.f32 %v1998, %v1999
        %v2001 = vand.u32 %v2000, 4294901760
        %2002 = vmatpush.msra.mxu0 %v2001
        %v2003 = vand.u32 %v1956, 4294901760
        %2004 = vmatmul.f32.gmra.mxu0 %v2003
        %v2005 = vpop.f32.mrf.mxu0
        %v2006 = vadd.f32 %v1981, %v2005
        %2007 = vdwg.mxu0
        %2008 = vmatpush.msra.mxu0 0.0
        %2009 = vmatpush.msra.mxu0 0.0
        %2010 = vmatpush.msra.mxu0 0.0
        %2011 = vmatpush.msra.mxu0 0.0
        %2012 = vmatpush.msra.mxu0 0.0
        %2013 = vmatpush.msra.mxu0 0.0
        %2014 = vmatpush.msra.mxu0 0.0
        %2015 = vmatpush.msra.mxu0 0.0
        %2016 = vmatpush.msra.mxu0 0.0
        %2017 = vmatpush.msra.mxu0 0.0
        %2018 = vmatpush.msra.mxu0 0.0
        %2019 = vmatpush.msra.mxu0 0.0
        %2020 = vmatpush.msra.mxu0 0.0
        %2021 = vmatpush.msra.mxu0 0.0
        %2022 = vmatpush.msra.mxu0 0.0
        %v2023 = vsub.f32 %v1665, %v1665
        %2024 = vmatpush.msra.mxu0 %v2023
        %v2025 = vand.u32 %v1956, 4294901760
        %v2026 = vsub.f32 %v1956, %v2025
        %2027 = vmatmul.f32.gmra.mxu0 %v2026
        %v2028 = vpop.f32.mrf.mxu0
        %v2029 = vadd.f32 %v2006, %v2028
        %2030 = vdwg.mxu0
        %2031 = vmatpush.msra.mxu0 0.0
        %2032 = vmatpush.msra.mxu0 0.0
        %2033 = vmatpush.msra.mxu0 0.0
        %2034 = vmatpush.msra.mxu0 0.0
        %2035 = vmatpush.msra.mxu0 0.0
        %2036 = vmatpush.msra.mxu0 0.0
        %2037 = vmatpush.msra.mxu0 0.0
        %2038 = vmatpush.msra.mxu0 0.0
        %2039 = vmatpush.msra.mxu0 0.0
        %2040 = vmatpush.msra.mxu0 0.0
        %2041 = vmatpush.msra.mxu0 0.0
        %2042 = vmatpush.msra.mxu0 0.0
        %2043 = vmatpush.msra.mxu0 0.0
        %2044 = vmatpush.msra.mxu0 0.0
        %2045 = vmatpush.msra.mxu0 0.0
        %2046 = vmatpush.msra.mxu0 %v1665
        %v2047 = vand.u32 %v1956, 4294901760
        %v2048 = vsub.f32 %v1956, %v2047
        %v2049 = vand.u32 %v2048, 4294901760
        %2050 = vmatmul.f32.gmra.mxu0 %v2049
        %v2051 = vpop.f32.mrf.mxu0
        %v2052 = vadd.f32 %v2029, %v2051
        %2053 = vdwg.mxu0
        %2054 = vmatpush.msra.mxu0 0.0
        %2055 = vmatpush.msra.mxu0 0.0
        %2056 = vmatpush.msra.mxu0 0.0
        %2057 = vmatpush.msra.mxu0 0.0
        %2058 = vmatpush.msra.mxu0 0.0
        %2059 = vmatpush.msra.mxu0 0.0
        %2060 = vmatpush.msra.mxu0 0.0
        %2061 = vmatpush.msra.mxu0 0.0
        %2062 = vmatpush.msra.mxu0 0.0
        %2063 = vmatpush.msra.mxu0 0.0
        %2064 = vmatpush.msra.mxu0 0.0
        %2065 = vmatpush.msra.mxu0 0.0
        %2066 = vmatpush.msra.mxu0 0.0
        %2067 = vmatpush.msra.mxu0 0.0
        %2068 = vmatpush.msra.mxu0 0.0
        %v2069 = vsub.f32 %v1665, %v1665
        %v2070 = vand.u32 %v2069, 4294901760
        %2071 = vmatpush.msra.mxu0 %v2070
        %v2072 = vand.u32 %v1956, 4294901760
        %2073 = vmatmul.f32.gmra.mxu0 %v2072
        %v2074 = vpop.f32.mrf.mxu0
        %v2075 = vadd.f32 %v2052, %v2074
        %2076 = vdwg.mxu0
        %2077 = vmatpush.msra.mxu0 0.0
        %2078 = vmatpush.msra.mxu0 0.0
        %2079 = vmatpush.msra.mxu0 0.0
        %2080 = vmatpush.msra.mxu0 0.0
        %2081 = vmatpush.msra.mxu0 0.0
        %2082 = vmatpush.msra.mxu0 0.0
        %2083 = vmatpush.msra.mxu0 0.0
        %2084 = vmatpush.msra.mxu0 0.0
        %2085 = vmatpush.msra.mxu0 0.0
        %2086 = vmatpush.msra.mxu0 0.0
        %2087 = vmatpush.msra.mxu0 0.0
        %2088 = vmatpush.msra.mxu0 0.0
        %2089 = vmatpush.msra.mxu0 0.0
        %2090 = vmatpush.msra.mxu0 0.0
        %2091 = vmatpush.msra.mxu0 0.0
        %2092 = vmatpush.msra.mxu0 %v1665
        %v2093 = vand.u32 %v1956, 4294901760
        %2094 = vmatmul.f32.gmra.mxu0 %v2093
        %v2095 = vpop.f32.mrf.mxu0
        %v2096 = vadd.f32 %v2075, %v2095
        %2097 = vdwg.mxu0
        %v2099 = vsel %vm1658, %v1656, 0
        %2101 = vmatpush.msra.mxu0 0.0
        %2102 = vmatpush.msra.mxu0 0.0
        %2103 = vmatpush.msra.mxu0 0.0
        %2104 = vmatpush.msra.mxu0 0.0
        %2105 = vmatpush.msra.mxu0 0.0
        %2106 = vmatpush.msra.mxu0 0.0
        %2107 = vmatpush.msra.mxu0 0.0
        %2108 = vmatpush.msra.mxu0 0.0
        %2109 = vmatpush.msra.mxu0 0.0
        %2110 = vmatpush.msra.mxu0 0.0
        %2111 = vmatpush.msra.mxu0 0.0
        %2112 = vmatpush.msra.mxu0 0.0
        %2113 = vmatpush.msra.mxu0 0.0
        %2114 = vmatpush.msra.mxu0 0.0
        %2115 = vmatpush.msra.mxu0 0.0
        %2116 = vmatpush.msra.mxu0 %v1665
        %v2117 = vand.u32 %v2099, 4294901760
        %v2118 = vsub.f32 %v2099, %v2117
        %v2119 = vand.u32 %v2118, 4294901760
        %v2120 = vsub.f32 %v2118, %v2119
        %v2121 = vand.u32 %v2120, 4294901760
        %2122 = vmatmul.f32.gmra.mxu0 %v2121
        %v2123 = vpop.f32.mrf.mxu0
        %v2124 = vadd.f32 0.0, %v2123
        %2125 = vdwg.mxu0
        %2126 = vmatpush.msra.mxu0 0.0
        %2127 = vmatpush.msra.mxu0 0.0
        %2128 = vmatpush.msra.mxu0 0.0
        %2129 = vmatpush.msra.mxu0 0.0
        %2130 = vmatpush.msra.mxu0 0.0
        %2131 = vmatpush.msra.mxu0 0.0
        %2132 = vmatpush.msra.mxu0 0.0
        %2133 = vmatpush.msra.mxu0 0.0
        %2134 = vmatpush.msra.mxu0 0.0
        %2135 = vmatpush.msra.mxu0 0.0
        %2136 = vmatpush.msra.mxu0 0.0
        %2137 = vmatpush.msra.mxu0 0.0
        %2138 = vmatpush.msra.mxu0 0.0
        %2139 = vmatpush.msra.mxu0 0.0
        %2140 = vmatpush.msra.mxu0 0.0
        %v2141 = vsub.f32 %v1665, %v1665
        %v2142 = vand.u32 %v2141, 4294901760
        %v2143 = vsub.f32 %v2141, %v2142
        %v2144 = vand.u32 %v2143, 4294901760
        %2145 = vmatpush.msra.mxu0 %v2144
        %v2146 = vand.u32 %v2099, 4294901760
        %2147 = vmatmul.f32.gmra.mxu0 %v2146
        %v2148 = vpop.f32.mrf.mxu0
        %v2149 = vadd.f32 %v2124, %v2148
        %2150 = vdwg.mxu0
        %2151 = vmatpush.msra.mxu0 0.0
        %2152 = vmatpush.msra.mxu0 0.0
        %2153 = vmatpush.msra.mxu0 0.0
        %2154 = vmatpush.msra.mxu0 0.0
        %2155 = vmatpush.msra.mxu0 0.0
        %2156 = vmatpush.msra.mxu0 0.0
        %2157 = vmatpush.msra.mxu0 0.0
        %2158 = vmatpush.msra.mxu0 0.0
        %2159 = vmatpush.msra.mxu0 0.0
        %2160 = vmatpush.msra.mxu0 0.0
        %2161 = vmatpush.msra.mxu0 0.0
        %2162 = vmatpush.msra.mxu0 0.0
        %2163 = vmatpush.msra.mxu0 0.0
        %2164 = vmatpush.msra.mxu0 0.0
        %2165 = vmatpush.msra.mxu0 0.0
        %v2166 = vsub.f32 %v1665, %v1665
        %2167 = vmatpush.msra.mxu0 %v2166
        %v2168 = vand.u32 %v2099, 4294901760
        %v2169 = vsub.f32 %v2099, %v2168
        %2170 = vmatmul.f32.gmra.mxu0 %v2169
        %v2171 = vpop.f32.mrf.mxu0
        %v2172 = vadd.f32 %v2149, %v2171
        %2173 = vdwg.mxu0
        %2174 = vmatpush.msra.mxu0 0.0
        %2175 = vmatpush.msra.mxu0 0.0
        %2176 = vmatpush.msra.mxu0 0.0
        %2177 = vmatpush.msra.mxu0 0.0
        %2178 = vmatpush.msra.mxu0 0.0
        %2179 = vmatpush.msra.mxu0 0.0
        %2180 = vmatpush.msra.mxu0 0.0
        %2181 = vmatpush.msra.mxu0 0.0
        %2182 = vmatpush.msra.mxu0 0.0
        %2183 = vmatpush.msra.mxu0 0.0
        %2184 = vmatpush.msra.mxu0 0.0
        %2185 = vmatpush.msra.mxu0 0.0
        %2186 = vmatpush.msra.mxu0 0.0
        %2187 = vmatpush.msra.mxu0 0.0
        %2188 = vmatpush.msra.mxu0 0.0
        %2189 = vmatpush.msra.mxu0 %v1665
        %v2190 = vand.u32 %v2099, 4294901760
        %v2191 = vsub.f32 %v2099, %v2190
        %v2192 = vand.u32 %v2191, 4294901760
        %2193 = vmatmul.f32.gmra.mxu0 %v2192
        %v2194 = vpop.f32.mrf.mxu0
        %v2195 = vadd.f32 %v2172, %v2194
        %2196 = vdwg.mxu0
        %2197 = vmatpush.msra.mxu0 0.0
        %2198 = vmatpush.msra.mxu0 0.0
        %2199 = vmatpush.msra.mxu0 0.0
        %2200 = vmatpush.msra.mxu0 0.0
        %2201 = vmatpush.msra.mxu0 0.0
        %2202 = vmatpush.msra.mxu0 0.0
        %2203 = vmatpush.msra.mxu0 0.0
        %2204 = vmatpush.msra.mxu0 0.0
        %2205 = vmatpush.msra.mxu0 0.0
        %2206 = vmatpush.msra.mxu0 0.0
        %2207 = vmatpush.msra.mxu0 0.0
        %2208 = vmatpush.msra.mxu0 0.0
        %2209 = vmatpush.msra.mxu0 0.0
        %2210 = vmatpush.msra.mxu0 0.0
        %2211 = vmatpush.msra.mxu0 0.0
        %v2212 = vsub.f32 %v1665, %v1665
        %v2213 = vand.u32 %v2212, 4294901760
        %2214 = vmatpush.msra.mxu0 %v2213
        %v2215 = vand.u32 %v2099, 4294901760
        %2216 = vmatmul.f32.gmra.mxu0 %v2215
        %v2217 = vpop.f32.mrf.mxu0
        %v2218 = vadd.f32 %v2195, %v2217
        %2219 = vdwg.mxu0
        %2220 = vmatpush.msra.mxu0 0.0
        %2221 = vmatpush.msra.mxu0 0.0
        %2222 = vmatpush.msra.mxu0 0.0
        %2223 = vmatpush.msra.mxu0 0.0
        %2224 = vmatpush.msra.mxu0 0.0
        %2225 = vmatpush.msra.mxu0 0.0
        %2226 = vmatpush.msra.mxu0 0.0
        %2227 = vmatpush.msra.mxu0 0.0
        %2228 = vmatpush.msra.mxu0 0.0
        %2229 = vmatpush.msra.mxu0 0.0
        %2230 = vmatpush.msra.mxu0 0.0
        %2231 = vmatpush.msra.mxu0 0.0
        %2232 = vmatpush.msra.mxu0 0.0
        %2233 = vmatpush.msra.mxu0 0.0
        %2234 = vmatpush.msra.mxu0 0.0
        %2235 = vmatpush.msra.mxu0 %v1665
        %v2236 = vand.u32 %v2099, 4294901760
        %2237 = vmatmul.f32.gmra.mxu0 %v2236
        %v2238 = vpop.f32.mrf.mxu0
        %v2239 = vadd.f32 %v2218, %v2238
        %2240 = vdwg.mxu0
        %v2242 = vsel %vm1658, %v1668, 0
        %2244 = vmatpush.msra.mxu0 0.0
        %2245 = vmatpush.msra.mxu0 0.0
        %2246 = vmatpush.msra.mxu0 0.0
        %2247 = vmatpush.msra.mxu0 0.0
        %2248 = vmatpush.msra.mxu0 0.0
        %2249 = vmatpush.msra.mxu0 0.0
        %2250 = vmatpush.msra.mxu0 0.0
        %2251 = vmatpush.msra.mxu0 0.0
        %2252 = vmatpush.msra.mxu0 0.0
        %2253 = vmatpush.msra.mxu0 0.0
        %2254 = vmatpush.msra.mxu0 0.0
        %2255 = vmatpush.msra.mxu0 0.0
        %2256 = vmatpush.msra.mxu0 0.0
        %2257 = vmatpush.msra.mxu0 0.0
        %2258 = vmatpush.msra.mxu0 0.0
        %v2259 = vand.u32 %v1810, 4294901760
        %2260 = vmatpush.msra.mxu0 %v2259
        %v2261 = vand.u32 %v2242, 4294901760
        %v2262 = vsub.f32 %v2242, %v2261
        %v2263 = vand.u32 %v2262, 4294901760
        %v2264 = vsub.f32 %v2262, %v2263
        %v2265 = vand.u32 %v2264, 4294901760
        %2266 = vmatmul.f32.gmra.mxu0 %v2265
        %v2267 = vpop.f32.mrf.mxu0
        %v2268 = vadd.f32 0.0, %v2267
        %2269 = vdwg.mxu0
        %2270 = vmatpush.msra.mxu0 0.0
        %2271 = vmatpush.msra.mxu0 0.0
        %2272 = vmatpush.msra.mxu0 0.0
        %2273 = vmatpush.msra.mxu0 0.0
        %2274 = vmatpush.msra.mxu0 0.0
        %2275 = vmatpush.msra.mxu0 0.0
        %2276 = vmatpush.msra.mxu0 0.0
        %2277 = vmatpush.msra.mxu0 0.0
        %2278 = vmatpush.msra.mxu0 0.0
        %2279 = vmatpush.msra.mxu0 0.0
        %2280 = vmatpush.msra.mxu0 0.0
        %2281 = vmatpush.msra.mxu0 0.0
        %2282 = vmatpush.msra.mxu0 0.0
        %2283 = vmatpush.msra.mxu0 0.0
        %2284 = vmatpush.msra.mxu0 0.0
        %v2285 = vand.u32 %v1810, 4294901760
        %v2286 = vsub.f32 %v1810, %v2285
        %v2287 = vand.u32 %v2286, 4294901760
        %v2288 = vsub.f32 %v2286, %v2287
        %v2289 = vand.u32 %v2288, 4294901760
        %2290 = vmatpush.msra.mxu0 %v2289
        %v2291 = vand.u32 %v2242, 4294901760
        %2292 = vmatmul.f32.gmra.mxu0 %v2291
        %v2293 = vpop.f32.mrf.mxu0
        %v2294 = vadd.f32 %v2268, %v2293
        %2295 = vdwg.mxu0
        %2296 = vmatpush.msra.mxu0 0.0
        %2297 = vmatpush.msra.mxu0 0.0
        %2298 = vmatpush.msra.mxu0 0.0
        %2299 = vmatpush.msra.mxu0 0.0
        %2300 = vmatpush.msra.mxu0 0.0
        %2301 = vmatpush.msra.mxu0 0.0
        %2302 = vmatpush.msra.mxu0 0.0
        %2303 = vmatpush.msra.mxu0 0.0
        %2304 = vmatpush.msra.mxu0 0.0
        %2305 = vmatpush.msra.mxu0 0.0
        %2306 = vmatpush.msra.mxu0 0.0
        %2307 = vmatpush.msra.mxu0 0.0
        %2308 = vmatpush.msra.mxu0 0.0
        %2309 = vmatpush.msra.mxu0 0.0
        %2310 = vmatpush.msra.mxu0 0.0
        %v2311 = vand.u32 %v1810, 4294901760
        %v2312 = vsub.f32 %v1810, %v2311
        %2313 = vmatpush.msra.mxu0 %v2312
        %v2314 = vand.u32 %v2242, 4294901760
        %v2315 = vsub.f32 %v2242, %v2314
        %2316 = vmatmul.f32.gmra.mxu0 %v2315
        %v2317 = vpop.f32.mrf.mxu0
        %v2318 = vadd.f32 %v2294, %v2317
        %2319 = vdwg.mxu0
        %2320 = vmatpush.msra.mxu0 0.0
        %2321 = vmatpush.msra.mxu0 0.0
        %2322 = vmatpush.msra.mxu0 0.0
        %2323 = vmatpush.msra.mxu0 0.0
        %2324 = vmatpush.msra.mxu0 0.0
        %2325 = vmatpush.msra.mxu0 0.0
        %2326 = vmatpush.msra.mxu0 0.0
        %2327 = vmatpush.msra.mxu0 0.0
        %2328 = vmatpush.msra.mxu0 0.0
        %2329 = vmatpush.msra.mxu0 0.0
        %2330 = vmatpush.msra.mxu0 0.0
        %2331 = vmatpush.msra.mxu0 0.0
        %2332 = vmatpush.msra.mxu0 0.0
        %2333 = vmatpush.msra.mxu0 0.0
        %2334 = vmatpush.msra.mxu0 0.0
        %v2335 = vand.u32 %v1810, 4294901760
        %2336 = vmatpush.msra.mxu0 %v2335
        %v2337 = vand.u32 %v2242, 4294901760
        %v2338 = vsub.f32 %v2242, %v2337
        %v2339 = vand.u32 %v2338, 4294901760
        %2340 = vmatmul.f32.gmra.mxu0 %v2339
        %v2341 = vpop.f32.mrf.mxu0
        %v2342 = vadd.f32 %v2318, %v2341
        %2343 = vdwg.mxu0
        %2344 = vmatpush.msra.mxu0 0.0
        %2345 = vmatpush.msra.mxu0 0.0
        %2346 = vmatpush.msra.mxu0 0.0
        %2347 = vmatpush.msra.mxu0 0.0
        %2348 = vmatpush.msra.mxu0 0.0
        %2349 = vmatpush.msra.mxu0 0.0
        %2350 = vmatpush.msra.mxu0 0.0
        %2351 = vmatpush.msra.mxu0 0.0
        %2352 = vmatpush.msra.mxu0 0.0
        %2353 = vmatpush.msra.mxu0 0.0
        %2354 = vmatpush.msra.mxu0 0.0
        %2355 = vmatpush.msra.mxu0 0.0
        %2356 = vmatpush.msra.mxu0 0.0
        %2357 = vmatpush.msra.mxu0 0.0
        %2358 = vmatpush.msra.mxu0 0.0
        %v2359 = vand.u32 %v1810, 4294901760
        %v2360 = vsub.f32 %v1810, %v2359
        %v2361 = vand.u32 %v2360, 4294901760
        %2362 = vmatpush.msra.mxu0 %v2361
        %v2363 = vand.u32 %v2242, 4294901760
        %2364 = vmatmul.f32.gmra.mxu0 %v2363
        %v2365 = vpop.f32.mrf.mxu0
        %v2366 = vadd.f32 %v2342, %v2365
        %2367 = vdwg.mxu0
        %2368 = vmatpush.msra.mxu0 0.0
        %2369 = vmatpush.msra.mxu0 0.0
        %2370 = vmatpush.msra.mxu0 0.0
        %2371 = vmatpush.msra.mxu0 0.0
        %2372 = vmatpush.msra.mxu0 0.0
        %2373 = vmatpush.msra.mxu0 0.0
        %2374 = vmatpush.msra.mxu0 0.0
        %2375 = vmatpush.msra.mxu0 0.0
        %2376 = vmatpush.msra.mxu0 0.0
        %2377 = vmatpush.msra.mxu0 0.0
        %2378 = vmatpush.msra.mxu0 0.0
        %2379 = vmatpush.msra.mxu0 0.0
        %2380 = vmatpush.msra.mxu0 0.0
        %2381 = vmatpush.msra.mxu0 0.0
        %2382 = vmatpush.msra.mxu0 0.0
        %v2383 = vand.u32 %v1810, 4294901760
        %2384 = vmatpush.msra.mxu0 %v2383
        %v2385 = vand.u32 %v2242, 4294901760
        %2386 = vmatmul.f32.gmra.mxu0 %v2385
        %v2387 = vpop.f32.mrf.mxu0
        %v2388 = vadd.f32 %v2366, %v2387
        %2389 = vdwg.mxu0
        %2390 = vmatpush.msra.mxu0 0.0
        %2391 = vmatpush.msra.mxu0 0.0
        %2392 = vmatpush.msra.mxu0 0.0
        %2393 = vmatpush.msra.mxu0 0.0
        %2394 = vmatpush.msra.mxu0 0.0
        %2395 = vmatpush.msra.mxu0 0.0
        %2396 = vmatpush.msra.mxu0 0.0
        %2397 = vmatpush.msra.mxu0 0.0
        %2398 = vmatpush.msra.mxu0 0.0
        %2399 = vmatpush.msra.mxu0 0.0
        %2400 = vmatpush.msra.mxu0 0.0
        %2401 = vmatpush.msra.mxu0 0.0
        %2402 = vmatpush.msra.mxu0 0.0
        %2403 = vmatpush.msra.mxu0 0.0
        %2404 = vmatpush.msra.mxu0 0.0
        %v2405 = vand.u32 %v1953, 4294901760
        %2406 = vmatpush.msra.mxu0 %v2405
        %v2407 = vand.u32 %v2242, 4294901760
        %v2408 = vsub.f32 %v2242, %v2407
        %v2409 = vand.u32 %v2408, 4294901760
        %v2410 = vsub.f32 %v2408, %v2409
        %v2411 = vand.u32 %v2410, 4294901760
        %2412 = vmatmul.f32.gmra.mxu0 %v2411
        %v2413 = vpop.f32.mrf.mxu0
        %v2414 = vadd.f32 0.0, %v2413
        %2415 = vdwg.mxu0
        %2416 = vmatpush.msra.mxu0 0.0
        %2417 = vmatpush.msra.mxu0 0.0
        %2418 = vmatpush.msra.mxu0 0.0
        %2419 = vmatpush.msra.mxu0 0.0
        %2420 = vmatpush.msra.mxu0 0.0
        %2421 = vmatpush.msra.mxu0 0.0
        %2422 = vmatpush.msra.mxu0 0.0
        %2423 = vmatpush.msra.mxu0 0.0
        %2424 = vmatpush.msra.mxu0 0.0
        %2425 = vmatpush.msra.mxu0 0.0
        %2426 = vmatpush.msra.mxu0 0.0
        %2427 = vmatpush.msra.mxu0 0.0
        %2428 = vmatpush.msra.mxu0 0.0
        %2429 = vmatpush.msra.mxu0 0.0
        %2430 = vmatpush.msra.mxu0 0.0
        %v2431 = vand.u32 %v1953, 4294901760
        %v2432 = vsub.f32 %v1953, %v2431
        %v2433 = vand.u32 %v2432, 4294901760
        %v2434 = vsub.f32 %v2432, %v2433
        %v2435 = vand.u32 %v2434, 4294901760
        %2436 = vmatpush.msra.mxu0 %v2435
        %v2437 = vand.u32 %v2242, 4294901760
        %2438 = vmatmul.f32.gmra.mxu0 %v2437
        %v2439 = vpop.f32.mrf.mxu0
        %v2440 = vadd.f32 %v2414, %v2439
        %2441 = vdwg.mxu0
        %2442 = vmatpush.msra.mxu0 0.0
        %2443 = vmatpush.msra.mxu0 0.0
        %2444 = vmatpush.msra.mxu0 0.0
        %2445 = vmatpush.msra.mxu0 0.0
        %2446 = vmatpush.msra.mxu0 0.0
        %2447 = vmatpush.msra.mxu0 0.0
        %2448 = vmatpush.msra.mxu0 0.0
        %2449 = vmatpush.msra.mxu0 0.0
        %2450 = vmatpush.msra.mxu0 0.0
        %2451 = vmatpush.msra.mxu0 0.0
        %2452 = vmatpush.msra.mxu0 0.0
        %2453 = vmatpush.msra.mxu0 0.0
        %2454 = vmatpush.msra.mxu0 0.0
        %2455 = vmatpush.msra.mxu0 0.0
        %2456 = vmatpush.msra.mxu0 0.0
        %v2457 = vand.u32 %v1953, 4294901760
        %v2458 = vsub.f32 %v1953, %v2457
        %2459 = vmatpush.msra.mxu0 %v2458
        %v2460 = vand.u32 %v2242, 4294901760
        %v2461 = vsub.f32 %v2242, %v2460
        %2462 = vmatmul.f32.gmra.mxu0 %v2461
        %v2463 = vpop.f32.mrf.mxu0
        %v2464 = vadd.f32 %v2440, %v2463
        %2465 = vdwg.mxu0
        %2466 = vmatpush.msra.mxu0 0.0
        %2467 = vmatpush.msra.mxu0 0.0
        %2468 = vmatpush.msra.mxu0 0.0
        %2469 = vmatpush.msra.mxu0 0.0
        %2470 = vmatpush.msra.mxu0 0.0
        %2471 = vmatpush.msra.mxu0 0.0
        %2472 = vmatpush.msra.mxu0 0.0
        %2473 = vmatpush.msra.mxu0 0.0
        %2474 = vmatpush.msra.mxu0 0.0
        %2475 = vmatpush.msra.mxu0 0.0
        %2476 = vmatpush.msra.mxu0 0.0
        %2477 = vmatpush.msra.mxu0 0.0
        %2478 = vmatpush.msra.mxu0 0.0
        %2479 = vmatpush.msra.mxu0 0.0
        %2480 = vmatpush.msra.mxu0 0.0
        %v2481 = vand.u32 %v1953, 4294901760
        %2482 = vmatpush.msra.mxu0 %v2481
        %v2483 = vand.u32 %v2242, 4294901760
        %v2484 = vsub.f32 %v2242, %v2483
        %v2485 = vand.u32 %v2484, 4294901760
        %2486 = vmatmul.f32.gmra.mxu0 %v2485
        %v2487 = vpop.f32.mrf.mxu0
        %v2488 = vadd.f32 %v2464, %v2487
        %2489 = vdwg.mxu0
        %2490 = vmatpush.msra.mxu0 0.0
        %2491 = vmatpush.msra.mxu0 0.0
        %2492 = vmatpush.msra.mxu0 0.0
        %2493 = vmatpush.msra.mxu0 0.0
        %2494 = vmatpush.msra.mxu0 0.0
        %2495 = vmatpush.msra.mxu0 0.0
        %2496 = vmatpush.msra.mxu0 0.0
        %2497 = vmatpush.msra.mxu0 0.0
        %2498 = vmatpush.msra.mxu0 0.0
        %2499 = vmatpush.msra.mxu0 0.0
        %2500 = vmatpush.msra.mxu0 0.0
        %2501 = vmatpush.msra.mxu0 0.0
        %2502 = vmatpush.msra.mxu0 0.0
        %2503 = vmatpush.msra.mxu0 0.0
        %2504 = vmatpush.msra.mxu0 0.0
        %v2505 = vand.u32 %v1953, 4294901760
        %v2506 = vsub.f32 %v1953, %v2505
        %v2507 = vand.u32 %v2506, 4294901760
        %2508 = vmatpush.msra.mxu0 %v2507
        %v2509 = vand.u32 %v2242, 4294901760
        %2510 = vmatmul.f32.gmra.mxu0 %v2509
        %v2511 = vpop.f32.mrf.mxu0
        %v2512 = vadd.f32 %v2488, %v2511
        %2513 = vdwg.mxu0
        %2514 = vmatpush.msra.mxu0 0.0
        %2515 = vmatpush.msra.mxu0 0.0
        %2516 = vmatpush.msra.mxu0 0.0
        %2517 = vmatpush.msra.mxu0 0.0
        %2518 = vmatpush.msra.mxu0 0.0
        %2519 = vmatpush.msra.mxu0 0.0
        %2520 = vmatpush.msra.mxu0 0.0
        %2521 = vmatpush.msra.mxu0 0.0
        %2522 = vmatpush.msra.mxu0 0.0
        %2523 = vmatpush.msra.mxu0 0.0
        %2524 = vmatpush.msra.mxu0 0.0
        %2525 = vmatpush.msra.mxu0 0.0
        %2526 = vmatpush.msra.mxu0 0.0
        %2527 = vmatpush.msra.mxu0 0.0
        %2528 = vmatpush.msra.mxu0 0.0
        %v2529 = vand.u32 %v1953, 4294901760
        %2530 = vmatpush.msra.mxu0 %v2529
        %v2531 = vand.u32 %v2242, 4294901760
        %2532 = vmatmul.f32.gmra.mxu0 %v2531
        %v2533 = vpop.f32.mrf.mxu0
        %v2534 = vadd.f32 %v2512, %v2533
        %2535 = vdwg.mxu0
        %2536 = vmatpush.msra.mxu0 0.0
        %2537 = vmatpush.msra.mxu0 0.0
        %2538 = vmatpush.msra.mxu0 0.0
        %2539 = vmatpush.msra.mxu0 0.0
        %2540 = vmatpush.msra.mxu0 0.0
        %2541 = vmatpush.msra.mxu0 0.0
        %2542 = vmatpush.msra.mxu0 0.0
        %2543 = vmatpush.msra.mxu0 0.0
        %2544 = vmatpush.msra.mxu0 0.0
        %2545 = vmatpush.msra.mxu0 0.0
        %2546 = vmatpush.msra.mxu0 0.0
        %2547 = vmatpush.msra.mxu0 0.0
        %2548 = vmatpush.msra.mxu0 0.0
        %2549 = vmatpush.msra.mxu0 0.0
        %2550 = vmatpush.msra.mxu0 0.0
        %v2551 = vand.u32 %v2096, 4294901760
        %2552 = vmatpush.msra.mxu0 %v2551
        %v2553 = vand.u32 %v2242, 4294901760
        %v2554 = vsub.f32 %v2242, %v2553
        %v2555 = vand.u32 %v2554, 4294901760
        %v2556 = vsub.f32 %v2554, %v2555
        %v2557 = vand.u32 %v2556, 4294901760
        %2558 = vmatmul.f32.gmra.mxu0 %v2557
        %v2559 = vpop.f32.mrf.mxu0
        %v2560 = vadd.f32 0.0, %v2559
        %2561 = vdwg.mxu0
        %2562 = vmatpush.msra.mxu0 0.0
        %2563 = vmatpush.msra.mxu0 0.0
        %2564 = vmatpush.msra.mxu0 0.0
        %2565 = vmatpush.msra.mxu0 0.0
        %2566 = vmatpush.msra.mxu0 0.0
        %2567 = vmatpush.msra.mxu0 0.0
        %2568 = vmatpush.msra.mxu0 0.0
        %2569 = vmatpush.msra.mxu0 0.0
        %2570 = vmatpush.msra.mxu0 0.0
        %2571 = vmatpush.msra.mxu0 0.0
        %2572 = vmatpush.msra.mxu0 0.0
        %2573 = vmatpush.msra.mxu0 0.0
        %2574 = vmatpush.msra.mxu0 0.0
        %2575 = vmatpush.msra.mxu0 0.0
        %2576 = vmatpush.msra.mxu0 0.0
        %v2577 = vand.u32 %v2096, 4294901760
        %v2578 = vsub.f32 %v2096, %v2577
        %v2579 = vand.u32 %v2578, 4294901760
        %v2580 = vsub.f32 %v2578, %v2579
        %v2581 = vand.u32 %v2580, 4294901760
        %2582 = vmatpush.msra.mxu0 %v2581
        %v2583 = vand.u32 %v2242, 4294901760
        %2584 = vmatmul.f32.gmra.mxu0 %v2583
        %v2585 = vpop.f32.mrf.mxu0
        %v2586 = vadd.f32 %v2560, %v2585
        %2587 = vdwg.mxu0
        %2588 = vmatpush.msra.mxu0 0.0
        %2589 = vmatpush.msra.mxu0 0.0
        %2590 = vmatpush.msra.mxu0 0.0
        %2591 = vmatpush.msra.mxu0 0.0
        %2592 = vmatpush.msra.mxu0 0.0
        %2593 = vmatpush.msra.mxu0 0.0
        %2594 = vmatpush.msra.mxu0 0.0
        %2595 = vmatpush.msra.mxu0 0.0
        %2596 = vmatpush.msra.mxu0 0.0
        %2597 = vmatpush.msra.mxu0 0.0
        %2598 = vmatpush.msra.mxu0 0.0
        %2599 = vmatpush.msra.mxu0 0.0
        %2600 = vmatpush.msra.mxu0 0.0
        %2601 = vmatpush.msra.mxu0 0.0
        %2602 = vmatpush.msra.mxu0 0.0
        %v2603 = vand.u32 %v2096, 4294901760
        %v2604 = vsub.f32 %v2096, %v2603
        %2605 = vmatpush.msra.mxu0 %v2604
        %v2606 = vand.u32 %v2242, 4294901760
        %v2607 = vsub.f32 %v2242, %v2606
        %2608 = vmatmul.f32.gmra.mxu0 %v2607
        %v2609 = vpop.f32.mrf.mxu0
        %v2610 = vadd.f32 %v2586, %v2609
        %2611 = vdwg.mxu0
        %2612 = vmatpush.msra.mxu0 0.0
        %2613 = vmatpush.msra.mxu0 0.0
        %2614 = vmatpush.msra.mxu0 0.0
        %2615 = vmatpush.msra.mxu0 0.0
        %2616 = vmatpush.msra.mxu0 0.0
        %2617 = vmatpush.msra.mxu0 0.0
        %2618 = vmatpush.msra.mxu0 0.0
        %2619 = vmatpush.msra.mxu0 0.0
        %2620 = vmatpush.msra.mxu0 0.0
        %2621 = vmatpush.msra.mxu0 0.0
        %2622 = vmatpush.msra.mxu0 0.0
        %2623 = vmatpush.msra.mxu0 0.0
        %2624 = vmatpush.msra.mxu0 0.0
        %2625 = vmatpush.msra.mxu0 0.0
        %2626 = vmatpush.msra.mxu0 0.0
        %v2627 = vand.u32 %v2096, 4294901760
        %2628 = vmatpush.msra.mxu0 %v2627
        %v2629 = vand.u32 %v2242, 4294901760
        %v2630 = vsub.f32 %v2242, %v2629
        %v2631 = vand.u32 %v2630, 4294901760
        %2632 = vmatmul.f32.gmra.mxu0 %v2631
        %v2633 = vpop.f32.mrf.mxu0
        %v2634 = vadd.f32 %v2610, %v2633
        %2635 = vdwg.mxu0
        %2636 = vmatpush.msra.mxu0 0.0
        %2637 = vmatpush.msra.mxu0 0.0
        %2638 = vmatpush.msra.mxu0 0.0
        %2639 = vmatpush.msra.mxu0 0.0
        %2640 = vmatpush.msra.mxu0 0.0
        %2641 = vmatpush.msra.mxu0 0.0
        %2642 = vmatpush.msra.mxu0 0.0
        %2643 = vmatpush.msra.mxu0 0.0
        %2644 = vmatpush.msra.mxu0 0.0
        %2645 = vmatpush.msra.mxu0 0.0
        %2646 = vmatpush.msra.mxu0 0.0
        %2647 = vmatpush.msra.mxu0 0.0
        %2648 = vmatpush.msra.mxu0 0.0
        %2649 = vmatpush.msra.mxu0 0.0
        %2650 = vmatpush.msra.mxu0 0.0
        %v2651 = vand.u32 %v2096, 4294901760
        %v2652 = vsub.f32 %v2096, %v2651
        %v2653 = vand.u32 %v2652, 4294901760
        %2654 = vmatpush.msra.mxu0 %v2653
        %v2655 = vand.u32 %v2242, 4294901760
        %2656 = vmatmul.f32.gmra.mxu0 %v2655
        %v2657 = vpop.f32.mrf.mxu0
        %v2658 = vadd.f32 %v2634, %v2657
        %2659 = vdwg.mxu0
        %2660 = vmatpush.msra.mxu0 0.0
        %2661 = vmatpush.msra.mxu0 0.0
        %2662 = vmatpush.msra.mxu0 0.0
        %2663 = vmatpush.msra.mxu0 0.0
        %2664 = vmatpush.msra.mxu0 0.0
        %2665 = vmatpush.msra.mxu0 0.0
        %2666 = vmatpush.msra.mxu0 0.0
        %2667 = vmatpush.msra.mxu0 0.0
        %2668 = vmatpush.msra.mxu0 0.0
        %2669 = vmatpush.msra.mxu0 0.0
        %2670 = vmatpush.msra.mxu0 0.0
        %2671 = vmatpush.msra.mxu0 0.0
        %2672 = vmatpush.msra.mxu0 0.0
        %2673 = vmatpush.msra.mxu0 0.0
        %2674 = vmatpush.msra.mxu0 0.0
        %v2675 = vand.u32 %v2096, 4294901760
        %2676 = vmatpush.msra.mxu0 %v2675
        %v2677 = vand.u32 %v2242, 4294901760
        %2678 = vmatmul.f32.gmra.mxu0 %v2677
        %v2679 = vpop.f32.mrf.mxu0
        %v2680 = vadd.f32 %v2658, %v2679
        %2681 = vdwg.mxu0
        %2682 = vmatpush.msra.mxu0 0.0
        %2683 = vmatpush.msra.mxu0 0.0
        %2684 = vmatpush.msra.mxu0 0.0
        %2685 = vmatpush.msra.mxu0 0.0
        %2686 = vmatpush.msra.mxu0 0.0
        %2687 = vmatpush.msra.mxu0 0.0
        %2688 = vmatpush.msra.mxu0 0.0
        %2689 = vmatpush.msra.mxu0 0.0
        %2690 = vmatpush.msra.mxu0 0.0
        %2691 = vmatpush.msra.mxu0 0.0
        %2692 = vmatpush.msra.mxu0 0.0
        %2693 = vmatpush.msra.mxu0 0.0
        %2694 = vmatpush.msra.mxu0 0.0
        %2695 = vmatpush.msra.mxu0 0.0
        %2696 = vmatpush.msra.mxu0 0.0
        %v2697 = vand.u32 %v2239, 4294901760
        %2698 = vmatpush.msra.mxu0 %v2697
        %v2699 = vand.u32 %v2242, 4294901760
        %v2700 = vsub.f32 %v2242, %v2699
        %v2701 = vand.u32 %v2700, 4294901760
        %v2702 = vsub.f32 %v2700, %v2701
        %v2703 = vand.u32 %v2702, 4294901760
        %2704 = vmatmul.f32.gmra.mxu0 %v2703
        %v2705 = vpop.f32.mrf.mxu0
        %v2706 = vadd.f32 0.0, %v2705
        %2707 = vdwg.mxu0
        %2708 = vmatpush.msra.mxu0 0.0
        %2709 = vmatpush.msra.mxu0 0.0
        %2710 = vmatpush.msra.mxu0 0.0
        %2711 = vmatpush.msra.mxu0 0.0
        %2712 = vmatpush.msra.mxu0 0.0
        %2713 = vmatpush.msra.mxu0 0.0
        %2714 = vmatpush.msra.mxu0 0.0
        %2715 = vmatpush.msra.mxu0 0.0
        %2716 = vmatpush.msra.mxu0 0.0
        %2717 = vmatpush.msra.mxu0 0.0
        %2718 = vmatpush.msra.mxu0 0.0
        %2719 = vmatpush.msra.mxu0 0.0
        %2720 = vmatpush.msra.mxu0 0.0
        %2721 = vmatpush.msra.mxu0 0.0
        %2722 = vmatpush.msra.mxu0 0.0
        %v2723 = vand.u32 %v2239, 4294901760
        %v2724 = vsub.f32 %v2239, %v2723
        %v2725 = vand.u32 %v2724, 4294901760
        %v2726 = vsub.f32 %v2724, %v2725
        %v2727 = vand.u32 %v2726, 4294901760
        %2728 = vmatpush.msra.mxu0 %v2727
        %v2729 = vand.u32 %v2242, 4294901760
        %2730 = vmatmul.f32.gmra.mxu0 %v2729
        %v2731 = vpop.f32.mrf.mxu0
        %v2732 = vadd.f32 %v2706, %v2731
        %2733 = vdwg.mxu0
        %2734 = vmatpush.msra.mxu0 0.0
        %2735 = vmatpush.msra.mxu0 0.0
        %2736 = vmatpush.msra.mxu0 0.0
        %2737 = vmatpush.msra.mxu0 0.0
        %2738 = vmatpush.msra.mxu0 0.0
        %2739 = vmatpush.msra.mxu0 0.0
        %2740 = vmatpush.msra.mxu0 0.0
        %2741 = vmatpush.msra.mxu0 0.0
        %2742 = vmatpush.msra.mxu0 0.0
        %2743 = vmatpush.msra.mxu0 0.0
        %2744 = vmatpush.msra.mxu0 0.0
        %2745 = vmatpush.msra.mxu0 0.0
        %2746 = vmatpush.msra.mxu0 0.0
        %2747 = vmatpush.msra.mxu0 0.0
        %2748 = vmatpush.msra.mxu0 0.0
        %v2749 = vand.u32 %v2239, 4294901760
        %v2750 = vsub.f32 %v2239, %v2749
        %2751 = vmatpush.msra.mxu0 %v2750
        %v2752 = vand.u32 %v2242, 4294901760
        %v2753 = vsub.f32 %v2242, %v2752
        %2754 = vmatmul.f32.gmra.mxu0 %v2753
        %v2755 = vpop.f32.mrf.mxu0
        %v2756 = vadd.f32 %v2732, %v2755
        %2757 = vdwg.mxu0
        %2758 = vmatpush.msra.mxu0 0.0
        %2759 = vmatpush.msra.mxu0 0.0
        %2760 = vmatpush.msra.mxu0 0.0
        %2761 = vmatpush.msra.mxu0 0.0
        %2762 = vmatpush.msra.mxu0 0.0
        %2763 = vmatpush.msra.mxu0 0.0
        %2764 = vmatpush.msra.mxu0 0.0
        %2765 = vmatpush.msra.mxu0 0.0
        %2766 = vmatpush.msra.mxu0 0.0
        %2767 = vmatpush.msra.mxu0 0.0
        %2768 = vmatpush.msra.mxu0 0.0
        %2769 = vmatpush.msra.mxu0 0.0
        %2770 = vmatpush.msra.mxu0 0.0
        %2771 = vmatpush.msra.mxu0 0.0
        %2772 = vmatpush.msra.mxu0 0.0
        %v2773 = vand.u32 %v2239, 4294901760
        %2774 = vmatpush.msra.mxu0 %v2773
        %v2775 = vand.u32 %v2242, 4294901760
        %v2776 = vsub.f32 %v2242, %v2775
        %v2777 = vand.u32 %v2776, 4294901760
        %2778 = vmatmul.f32.gmra.mxu0 %v2777
        %v2779 = vpop.f32.mrf.mxu0
        %v2780 = vadd.f32 %v2756, %v2779
        %2781 = vdwg.mxu0
        %2782 = vmatpush.msra.mxu0 0.0
        %2783 = vmatpush.msra.mxu0 0.0
        %2784 = vmatpush.msra.mxu0 0.0
        %2785 = vmatpush.msra.mxu0 0.0
        %2786 = vmatpush.msra.mxu0 0.0
        %2787 = vmatpush.msra.mxu0 0.0
        %2788 = vmatpush.msra.mxu0 0.0
        %2789 = vmatpush.msra.mxu0 0.0
        %2790 = vmatpush.msra.mxu0 0.0
        %2791 = vmatpush.msra.mxu0 0.0
        %2792 = vmatpush.msra.mxu0 0.0
        %2793 = vmatpush.msra.mxu0 0.0
        %2794 = vmatpush.msra.mxu0 0.0
        %2795 = vmatpush.msra.mxu0 0.0
        %2796 = vmatpush.msra.mxu0 0.0
        %v2797 = vand.u32 %v2239, 4294901760
        %v2798 = vsub.f32 %v2239, %v2797
        %v2799 = vand.u32 %v2798, 4294901760
        %2800 = vmatpush.msra.mxu0 %v2799
        %v2801 = vand.u32 %v2242, 4294901760
        %2802 = vmatmul.f32.gmra.mxu0 %v2801
        %v2803 = vpop.f32.mrf.mxu0
        %v2804 = vadd.f32 %v2780, %v2803
        %2805 = vdwg.mxu0
        %2806 = vmatpush.msra.mxu0 0.0
        %2807 = vmatpush.msra.mxu0 0.0
        %2808 = vmatpush.msra.mxu0 0.0
        %2809 = vmatpush.msra.mxu0 0.0
        %2810 = vmatpush.msra.mxu0 0.0
        %2811 = vmatpush.msra.mxu0 0.0
        %2812 = vmatpush.msra.mxu0 0.0
        %2813 = vmatpush.msra.mxu0 0.0
        %2814 = vmatpush.msra.mxu0 0.0
        %2815 = vmatpush.msra.mxu0 0.0
        %2816 = vmatpush.msra.mxu0 0.0
        %2817 = vmatpush.msra.mxu0 0.0
        %2818 = vmatpush.msra.mxu0 0.0
        %2819 = vmatpush.msra.mxu0 0.0
        %2820 = vmatpush.msra.mxu0 0.0
        %v2821 = vand.u32 %v2239, 4294901760
        %2822 = vmatpush.msra.mxu0 %v2821
        %v2823 = vand.u32 %v2242, 4294901760
        %2824 = vmatmul.f32.gmra.mxu0 %v2823
        %v2825 = vpop.f32.mrf.mxu0
        %v2826 = vadd.f32 %v2804, %v2825
        %2827 = vdwg.mxu0
        %vm2828 = vcmask 27648
        %2829 = vst.msk [vmem:[%s224] sm:$0xf] %vm2828, %v2388
        %2830 = vst.msk [vmem:[%s224 + $0x4] sm:$0xf] %vm2828, %v2534
        %2831 = vst.msk [vmem:[%s224 + $0x8] sm:$0xf] %vm2828, %v2680
        %2832 = vst.msk [vmem:[%s224 + $0xc] sm:$0xf] %vm2828, %v2826
        %vm2833 = vcmp.lt.s32.totalorder %v263, 4
        %v2834 = vsel %vm2833, 0.5, 1.0
        %v2835 = vsel %vm270, %v2834, 0.0
        %vm2836 = vcmp.lt.s32.totalorder %v275, 4
        %v2837 = vsel %vm2836, 0.5, 1.0
        %v2838 = vsel %vm280, %v2837, 0.0
        %vm2839 = vcmask 31744
        %v2841 = vsel %vm2839, %v2388, 0
        %vm2843 = vcmask 1043456
        %v2845 = vsel %vm2843, %v2835, 0
        %2847 = vmatpush.msra.mxu0 0.0
        %2848 = vmatpush.msra.mxu0 0.0
        %2849 = vmatpush.msra.mxu0 0.0
        %2850 = vmatpush.msra.mxu0 0.0
        %2851 = vmatpush.msra.mxu0 0.0
        %2852 = vmatpush.msra.mxu0 0.0
        %2853 = vmatpush.msra.mxu0 0.0
        %2854 = vmatpush.msra.mxu0 0.0
        %2855 = vmatpush.msra.mxu0 0.0
        %2856 = vmatpush.msra.mxu0 0.0
        %2857 = vmatpush.msra.mxu0 0.0
        %2858 = vmatpush.msra.mxu0 0.0
        %2859 = vmatpush.msra.mxu0 0.0
        %2860 = vmatpush.msra.mxu0 0.0
        %2861 = vmatpush.msra.mxu0 0.0
        %v2862 = vand.u32 %v2845, 4294901760
        %2863 = vmatpush.msra.mxu0 %v2862
        %v2864 = vand.u32 %v2841, 4294901760
        %v2865 = vsub.f32 %v2841, %v2864
        %v2866 = vand.u32 %v2865, 4294901760
        %v2867 = vsub.f32 %v2865, %v2866
        %v2868 = vand.u32 %v2867, 4294901760
        %2869 = vmatmul.f32.gmra.mxu0 %v2868
        %v2870 = vpop.f32.mrf.mxu0
        %v2871 = vadd.f32 0.0, %v2870
        %2872 = vdwg.mxu0
        %2873 = vmatpush.msra.mxu0 0.0
        %2874 = vmatpush.msra.mxu0 0.0
        %2875 = vmatpush.msra.mxu0 0.0
        %2876 = vmatpush.msra.mxu0 0.0
        %2877 = vmatpush.msra.mxu0 0.0
        %2878 = vmatpush.msra.mxu0 0.0
        %2879 = vmatpush.msra.mxu0 0.0
        %2880 = vmatpush.msra.mxu0 0.0
        %2881 = vmatpush.msra.mxu0 0.0
        %2882 = vmatpush.msra.mxu0 0.0
        %2883 = vmatpush.msra.mxu0 0.0
        %2884 = vmatpush.msra.mxu0 0.0
        %2885 = vmatpush.msra.mxu0 0.0
        %2886 = vmatpush.msra.mxu0 0.0
        %2887 = vmatpush.msra.mxu0 0.0
        %v2888 = vand.u32 %v2845, 4294901760
        %v2889 = vsub.f32 %v2845, %v2888
        %v2890 = vand.u32 %v2889, 4294901760
        %v2891 = vsub.f32 %v2889, %v2890
        %v2892 = vand.u32 %v2891, 4294901760
        %2893 = vmatpush.msra.mxu0 %v2892
        %v2894 = vand.u32 %v2841, 4294901760
        %2895 = vmatmul.f32.gmra.mxu0 %v2894
        %v2896 = vpop.f32.mrf.mxu0
        %v2897 = vadd.f32 %v2871, %v2896
        %2898 = vdwg.mxu0
        %2899 = vmatpush.msra.mxu0 0.0
        %2900 = vmatpush.msra.mxu0 0.0
        %2901 = vmatpush.msra.mxu0 0.0
        %2902 = vmatpush.msra.mxu0 0.0
        %2903 = vmatpush.msra.mxu0 0.0
        %2904 = vmatpush.msra.mxu0 0.0
        %2905 = vmatpush.msra.mxu0 0.0
        %2906 = vmatpush.msra.mxu0 0.0
        %2907 = vmatpush.msra.mxu0 0.0
        %2908 = vmatpush.msra.mxu0 0.0
        %2909 = vmatpush.msra.mxu0 0.0
        %2910 = vmatpush.msra.mxu0 0.0
        %2911 = vmatpush.msra.mxu0 0.0
        %2912 = vmatpush.msra.mxu0 0.0
        %2913 = vmatpush.msra.mxu0 0.0
        %v2914 = vand.u32 %v2845, 4294901760
        %v2915 = vsub.f32 %v2845, %v2914
        %2916 = vmatpush.msra.mxu0 %v2915
        %v2917 = vand.u32 %v2841, 4294901760
        %v2918 = vsub.f32 %v2841, %v2917
        %2919 = vmatmul.f32.gmra.mxu0 %v2918
        %v2920 = vpop.f32.mrf.mxu0
        %v2921 = vadd.f32 %v2897, %v2920
        %2922 = vdwg.mxu0
        %2923 = vmatpush.msra.mxu0 0.0
        %2924 = vmatpush.msra.mxu0 0.0
        %2925 = vmatpush.msra.mxu0 0.0
        %2926 = vmatpush.msra.mxu0 0.0
        %2927 = vmatpush.msra.mxu0 0.0
        %2928 = vmatpush.msra.mxu0 0.0
        %2929 = vmatpush.msra.mxu0 0.0
        %2930 = vmatpush.msra.mxu0 0.0
        %2931 = vmatpush.msra.mxu0 0.0
        %2932 = vmatpush.msra.mxu0 0.0
        %2933 = vmatpush.msra.mxu0 0.0
        %2934 = vmatpush.msra.mxu0 0.0
        %2935 = vmatpush.msra.mxu0 0.0
        %2936 = vmatpush.msra.mxu0 0.0
        %2937 = vmatpush.msra.mxu0 0.0
        %v2938 = vand.u32 %v2845, 4294901760
        %2939 = vmatpush.msra.mxu0 %v2938
        %v2940 = vand.u32 %v2841, 4294901760
        %v2941 = vsub.f32 %v2841, %v2940
        %v2942 = vand.u32 %v2941, 4294901760
        %2943 = vmatmul.f32.gmra.mxu0 %v2942
        %v2944 = vpop.f32.mrf.mxu0
        %v2945 = vadd.f32 %v2921, %v2944
        %2946 = vdwg.mxu0
        %2947 = vmatpush.msra.mxu0 0.0
        %2948 = vmatpush.msra.mxu0 0.0
        %2949 = vmatpush.msra.mxu0 0.0
        %2950 = vmatpush.msra.mxu0 0.0
        %2951 = vmatpush.msra.mxu0 0.0
        %2952 = vmatpush.msra.mxu0 0.0
        %2953 = vmatpush.msra.mxu0 0.0
        %2954 = vmatpush.msra.mxu0 0.0
        %2955 = vmatpush.msra.mxu0 0.0
        %2956 = vmatpush.msra.mxu0 0.0
        %2957 = vmatpush.msra.mxu0 0.0
        %2958 = vmatpush.msra.mxu0 0.0
        %2959 = vmatpush.msra.mxu0 0.0
        %2960 = vmatpush.msra.mxu0 0.0
        %2961 = vmatpush.msra.mxu0 0.0
        %v2962 = vand.u32 %v2845, 4294901760
        %v2963 = vsub.f32 %v2845, %v2962
        %v2964 = vand.u32 %v2963, 4294901760
        %2965 = vmatpush.msra.mxu0 %v2964
        %v2966 = vand.u32 %v2841, 4294901760
        %2967 = vmatmul.f32.gmra.mxu0 %v2966
        %v2968 = vpop.f32.mrf.mxu0
        %v2969 = vadd.f32 %v2945, %v2968
        %2970 = vdwg.mxu0
        %2971 = vmatpush.msra.mxu0 0.0
        %2972 = vmatpush.msra.mxu0 0.0
        %2973 = vmatpush.msra.mxu0 0.0
        %2974 = vmatpush.msra.mxu0 0.0
        %2975 = vmatpush.msra.mxu0 0.0
        %2976 = vmatpush.msra.mxu0 0.0
        %2977 = vmatpush.msra.mxu0 0.0
        %2978 = vmatpush.msra.mxu0 0.0
        %2979 = vmatpush.msra.mxu0 0.0
        %2980 = vmatpush.msra.mxu0 0.0
        %2981 = vmatpush.msra.mxu0 0.0
        %2982 = vmatpush.msra.mxu0 0.0
        %2983 = vmatpush.msra.mxu0 0.0
        %2984 = vmatpush.msra.mxu0 0.0
        %2985 = vmatpush.msra.mxu0 0.0
        %v2986 = vand.u32 %v2845, 4294901760
        %2987 = vmatpush.msra.mxu0 %v2986
        %v2988 = vand.u32 %v2841, 4294901760
        %2989 = vmatmul.f32.gmra.mxu0 %v2988
        %v2990 = vpop.f32.mrf.mxu0
        %v2991 = vadd.f32 %v2969, %v2990
        %2992 = vdwg.mxu0
        %v2994 = vsel %vm2839, %v2534, 0
        %2996 = vmatpush.msra.mxu0 0.0
        %2997 = vmatpush.msra.mxu0 0.0
        %2998 = vmatpush.msra.mxu0 0.0
        %2999 = vmatpush.msra.mxu0 0.0
        %3000 = vmatpush.msra.mxu0 0.0
        %3001 = vmatpush.msra.mxu0 0.0
        %3002 = vmatpush.msra.mxu0 0.0
        %3003 = vmatpush.msra.mxu0 0.0
        %3004 = vmatpush.msra.mxu0 0.0
        %3005 = vmatpush.msra.mxu0 0.0
        %3006 = vmatpush.msra.mxu0 0.0
        %3007 = vmatpush.msra.mxu0 0.0
        %3008 = vmatpush.msra.mxu0 0.0
        %3009 = vmatpush.msra.mxu0 0.0
        %3010 = vmatpush.msra.mxu0 0.0
        %v3011 = vand.u32 %v2845, 4294901760
        %3012 = vmatpush.msra.mxu0 %v3011
        %v3013 = vand.u32 %v2994, 4294901760
        %v3014 = vsub.f32 %v2994, %v3013
        %v3015 = vand.u32 %v3014, 4294901760
        %v3016 = vsub.f32 %v3014, %v3015
        %v3017 = vand.u32 %v3016, 4294901760
        %3018 = vmatmul.f32.gmra.mxu0 %v3017
        %v3019 = vpop.f32.mrf.mxu0
        %v3020 = vadd.f32 0.0, %v3019
        %3021 = vdwg.mxu0
        %3022 = vmatpush.msra.mxu0 0.0
        %3023 = vmatpush.msra.mxu0 0.0
        %3024 = vmatpush.msra.mxu0 0.0
        %3025 = vmatpush.msra.mxu0 0.0
        %3026 = vmatpush.msra.mxu0 0.0
        %3027 = vmatpush.msra.mxu0 0.0
        %3028 = vmatpush.msra.mxu0 0.0
        %3029 = vmatpush.msra.mxu0 0.0
        %3030 = vmatpush.msra.mxu0 0.0
        %3031 = vmatpush.msra.mxu0 0.0
        %3032 = vmatpush.msra.mxu0 0.0
        %3033 = vmatpush.msra.mxu0 0.0
        %3034 = vmatpush.msra.mxu0 0.0
        %3035 = vmatpush.msra.mxu0 0.0
        %3036 = vmatpush.msra.mxu0 0.0
        %v3037 = vand.u32 %v2845, 4294901760
        %v3038 = vsub.f32 %v2845, %v3037
        %v3039 = vand.u32 %v3038, 4294901760
        %v3040 = vsub.f32 %v3038, %v3039
        %v3041 = vand.u32 %v3040, 4294901760
        %3042 = vmatpush.msra.mxu0 %v3041
        %v3043 = vand.u32 %v2994, 4294901760
        %3044 = vmatmul.f32.gmra.mxu0 %v3043
        %v3045 = vpop.f32.mrf.mxu0
        %v3046 = vadd.f32 %v3020, %v3045
        %3047 = vdwg.mxu0
        %3048 = vmatpush.msra.mxu0 0.0
        %3049 = vmatpush.msra.mxu0 0.0
        %3050 = vmatpush.msra.mxu0 0.0
        %3051 = vmatpush.msra.mxu0 0.0
        %3052 = vmatpush.msra.mxu0 0.0
        %3053 = vmatpush.msra.mxu0 0.0
        %3054 = vmatpush.msra.mxu0 0.0
        %3055 = vmatpush.msra.mxu0 0.0
        %3056 = vmatpush.msra.mxu0 0.0
        %3057 = vmatpush.msra.mxu0 0.0
        %3058 = vmatpush.msra.mxu0 0.0
        %3059 = vmatpush.msra.mxu0 0.0
        %3060 = vmatpush.msra.mxu0 0.0
        %3061 = vmatpush.msra.mxu0 0.0
        %3062 = vmatpush.msra.mxu0 0.0
        %v3063 = vand.u32 %v2845, 4294901760
        %v3064 = vsub.f32 %v2845, %v3063
        %3065 = vmatpush.msra.mxu0 %v3064
        %v3066 = vand.u32 %v2994, 4294901760
        %v3067 = vsub.f32 %v2994, %v3066
        %3068 = vmatmul.f32.gmra.mxu0 %v3067
        %v3069 = vpop.f32.mrf.mxu0
        %v3070 = vadd.f32 %v3046, %v3069
        %3071 = vdwg.mxu0
        %3072 = vmatpush.msra.mxu0 0.0
        %3073 = vmatpush.msra.mxu0 0.0
        %3074 = vmatpush.msra.mxu0 0.0
        %3075 = vmatpush.msra.mxu0 0.0
        %3076 = vmatpush.msra.mxu0 0.0
        %3077 = vmatpush.msra.mxu0 0.0
        %3078 = vmatpush.msra.mxu0 0.0
        %3079 = vmatpush.msra.mxu0 0.0
        %3080 = vmatpush.msra.mxu0 0.0
        %3081 = vmatpush.msra.mxu0 0.0
        %3082 = vmatpush.msra.mxu0 0.0
        %3083 = vmatpush.msra.mxu0 0.0
        %3084 = vmatpush.msra.mxu0 0.0
        %3085 = vmatpush.msra.mxu0 0.0
        %3086 = vmatpush.msra.mxu0 0.0
        %v3087 = vand.u32 %v2845, 4294901760
        %3088 = vmatpush.msra.mxu0 %v3087
        %v3089 = vand.u32 %v2994, 4294901760
        %v3090 = vsub.f32 %v2994, %v3089
        %v3091 = vand.u32 %v3090, 4294901760
        %3092 = vmatmul.f32.gmra.mxu0 %v3091
        %v3093 = vpop.f32.mrf.mxu0
        %v3094 = vadd.f32 %v3070, %v3093
        %3095 = vdwg.mxu0
        %3096 = vmatpush.msra.mxu0 0.0
        %3097 = vmatpush.msra.mxu0 0.0
        %3098 = vmatpush.msra.mxu0 0.0
        %3099 = vmatpush.msra.mxu0 0.0
        %3100 = vmatpush.msra.mxu0 0.0
        %3101 = vmatpush.msra.mxu0 0.0
        %3102 = vmatpush.msra.mxu0 0.0
        %3103 = vmatpush.msra.mxu0 0.0
        %3104 = vmatpush.msra.mxu0 0.0
        %3105 = vmatpush.msra.mxu0 0.0
        %3106 = vmatpush.msra.mxu0 0.0
        %3107 = vmatpush.msra.mxu0 0.0
        %3108 = vmatpush.msra.mxu0 0.0
        %3109 = vmatpush.msra.mxu0 0.0
        %3110 = vmatpush.msra.mxu0 0.0
        %v3111 = vand.u32 %v2845, 4294901760
        %v3112 = vsub.f32 %v2845, %v3111
        %v3113 = vand.u32 %v3112, 4294901760
        %3114 = vmatpush.msra.mxu0 %v3113
        %v3115 = vand.u32 %v2994, 4294901760
        %3116 = vmatmul.f32.gmra.mxu0 %v3115
        %v3117 = vpop.f32.mrf.mxu0
        %v3118 = vadd.f32 %v3094, %v3117
        %3119 = vdwg.mxu0
        %3120 = vmatpush.msra.mxu0 0.0
        %3121 = vmatpush.msra.mxu0 0.0
        %3122 = vmatpush.msra.mxu0 0.0
        %3123 = vmatpush.msra.mxu0 0.0
        %3124 = vmatpush.msra.mxu0 0.0
        %3125 = vmatpush.msra.mxu0 0.0
        %3126 = vmatpush.msra.mxu0 0.0
        %3127 = vmatpush.msra.mxu0 0.0
        %3128 = vmatpush.msra.mxu0 0.0
        %3129 = vmatpush.msra.mxu0 0.0
        %3130 = vmatpush.msra.mxu0 0.0
        %3131 = vmatpush.msra.mxu0 0.0
        %3132 = vmatpush.msra.mxu0 0.0
        %3133 = vmatpush.msra.mxu0 0.0
        %3134 = vmatpush.msra.mxu0 0.0
        %v3135 = vand.u32 %v2845, 4294901760
        %3136 = vmatpush.msra.mxu0 %v3135
        %v3137 = vand.u32 %v2994, 4294901760
        %3138 = vmatmul.f32.gmra.mxu0 %v3137
        %v3139 = vpop.f32.mrf.mxu0
        %v3140 = vadd.f32 %v3118, %v3139
        %3141 = vdwg.mxu0
        %v3143 = vsel %vm2839, %v2680, 0
        %3145 = vmatpush.msra.mxu0 0.0
        %3146 = vmatpush.msra.mxu0 0.0
        %3147 = vmatpush.msra.mxu0 0.0
        %3148 = vmatpush.msra.mxu0 0.0
        %3149 = vmatpush.msra.mxu0 0.0
        %3150 = vmatpush.msra.mxu0 0.0
        %3151 = vmatpush.msra.mxu0 0.0
        %3152 = vmatpush.msra.mxu0 0.0
        %3153 = vmatpush.msra.mxu0 0.0
        %3154 = vmatpush.msra.mxu0 0.0
        %3155 = vmatpush.msra.mxu0 0.0
        %3156 = vmatpush.msra.mxu0 0.0
        %3157 = vmatpush.msra.mxu0 0.0
        %3158 = vmatpush.msra.mxu0 0.0
        %3159 = vmatpush.msra.mxu0 0.0
        %v3160 = vand.u32 %v2845, 4294901760
        %3161 = vmatpush.msra.mxu0 %v3160
        %v3162 = vand.u32 %v3143, 4294901760
        %v3163 = vsub.f32 %v3143, %v3162
        %v3164 = vand.u32 %v3163, 4294901760
        %v3165 = vsub.f32 %v3163, %v3164
        %v3166 = vand.u32 %v3165, 4294901760
        %3167 = vmatmul.f32.gmra.mxu0 %v3166
        %v3168 = vpop.f32.mrf.mxu0
        %v3169 = vadd.f32 0.0, %v3168
        %3170 = vdwg.mxu0
        %3171 = vmatpush.msra.mxu0 0.0
        %3172 = vmatpush.msra.mxu0 0.0
        %3173 = vmatpush.msra.mxu0 0.0
        %3174 = vmatpush.msra.mxu0 0.0
        %3175 = vmatpush.msra.mxu0 0.0
        %3176 = vmatpush.msra.mxu0 0.0
        %3177 = vmatpush.msra.mxu0 0.0
        %3178 = vmatpush.msra.mxu0 0.0
        %3179 = vmatpush.msra.mxu0 0.0
        %3180 = vmatpush.msra.mxu0 0.0
        %3181 = vmatpush.msra.mxu0 0.0
        %3182 = vmatpush.msra.mxu0 0.0
        %3183 = vmatpush.msra.mxu0 0.0
        %3184 = vmatpush.msra.mxu0 0.0
        %3185 = vmatpush.msra.mxu0 0.0
        %v3186 = vand.u32 %v2845, 4294901760
        %v3187 = vsub.f32 %v2845, %v3186
        %v3188 = vand.u32 %v3187, 4294901760
        %v3189 = vsub.f32 %v3187, %v3188
        %v3190 = vand.u32 %v3189, 4294901760
        %3191 = vmatpush.msra.mxu0 %v3190
        %v3192 = vand.u32 %v3143, 4294901760
        %3193 = vmatmul.f32.gmra.mxu0 %v3192
        %v3194 = vpop.f32.mrf.mxu0
        %v3195 = vadd.f32 %v3169, %v3194
        %3196 = vdwg.mxu0
        %3197 = vmatpush.msra.mxu0 0.0
        %3198 = vmatpush.msra.mxu0 0.0
        %3199 = vmatpush.msra.mxu0 0.0
        %3200 = vmatpush.msra.mxu0 0.0
        %3201 = vmatpush.msra.mxu0 0.0
        %3202 = vmatpush.msra.mxu0 0.0
        %3203 = vmatpush.msra.mxu0 0.0
        %3204 = vmatpush.msra.mxu0 0.0
        %3205 = vmatpush.msra.mxu0 0.0
        %3206 = vmatpush.msra.mxu0 0.0
        %3207 = vmatpush.msra.mxu0 0.0
        %3208 = vmatpush.msra.mxu0 0.0
        %3209 = vmatpush.msra.mxu0 0.0
        %3210 = vmatpush.msra.mxu0 0.0
        %3211 = vmatpush.msra.mxu0 0.0
        %v3212 = vand.u32 %v2845, 4294901760
        %v3213 = vsub.f32 %v2845, %v3212
        %3214 = vmatpush.msra.mxu0 %v3213
        %v3215 = vand.u32 %v3143, 4294901760
        %v3216 = vsub.f32 %v3143, %v3215
        %3217 = vmatmul.f32.gmra.mxu0 %v3216
        %v3218 = vpop.f32.mrf.mxu0
        %v3219 = vadd.f32 %v3195, %v3218
        %3220 = vdwg.mxu0
        %3221 = vmatpush.msra.mxu0 0.0
        %3222 = vmatpush.msra.mxu0 0.0
        %3223 = vmatpush.msra.mxu0 0.0
        %3224 = vmatpush.msra.mxu0 0.0
        %3225 = vmatpush.msra.mxu0 0.0
        %3226 = vmatpush.msra.mxu0 0.0
        %3227 = vmatpush.msra.mxu0 0.0
        %3228 = vmatpush.msra.mxu0 0.0
        %3229 = vmatpush.msra.mxu0 0.0
        %3230 = vmatpush.msra.mxu0 0.0
        %3231 = vmatpush.msra.mxu0 0.0
        %3232 = vmatpush.msra.mxu0 0.0
        %3233 = vmatpush.msra.mxu0 0.0
        %3234 = vmatpush.msra.mxu0 0.0
        %3235 = vmatpush.msra.mxu0 0.0
        %v3236 = vand.u32 %v2845, 4294901760
        %3237 = vmatpush.msra.mxu0 %v3236
        %v3238 = vand.u32 %v3143, 4294901760
        %v3239 = vsub.f32 %v3143, %v3238
        %v3240 = vand.u32 %v3239, 4294901760
        %3241 = vmatmul.f32.gmra.mxu0 %v3240
        %v3242 = vpop.f32.mrf.mxu0
        %v3243 = vadd.f32 %v3219, %v3242
        %3244 = vdwg.mxu0
        %3245 = vmatpush.msra.mxu0 0.0
        %3246 = vmatpush.msra.mxu0 0.0
        %3247 = vmatpush.msra.mxu0 0.0
        %3248 = vmatpush.msra.mxu0 0.0
        %3249 = vmatpush.msra.mxu0 0.0
        %3250 = vmatpush.msra.mxu0 0.0
        %3251 = vmatpush.msra.mxu0 0.0
        %3252 = vmatpush.msra.mxu0 0.0
        %3253 = vmatpush.msra.mxu0 0.0
        %3254 = vmatpush.msra.mxu0 0.0
        %3255 = vmatpush.msra.mxu0 0.0
        %3256 = vmatpush.msra.mxu0 0.0
        %3257 = vmatpush.msra.mxu0 0.0
        %3258 = vmatpush.msra.mxu0 0.0
        %3259 = vmatpush.msra.mxu0 0.0
        %v3260 = vand.u32 %v2845, 4294901760
        %v3261 = vsub.f32 %v2845, %v3260
        %v3262 = vand.u32 %v3261, 4294901760
        %3263 = vmatpush.msra.mxu0 %v3262
        %v3264 = vand.u32 %v3143, 4294901760
        %3265 = vmatmul.f32.gmra.mxu0 %v3264
        %v3266 = vpop.f32.mrf.mxu0
        %v3267 = vadd.f32 %v3243, %v3266
        %3268 = vdwg.mxu0
        %3269 = vmatpush.msra.mxu0 0.0
        %3270 = vmatpush.msra.mxu0 0.0
        %3271 = vmatpush.msra.mxu0 0.0
        %3272 = vmatpush.msra.mxu0 0.0
        %3273 = vmatpush.msra.mxu0 0.0
        %3274 = vmatpush.msra.mxu0 0.0
        %3275 = vmatpush.msra.mxu0 0.0
        %3276 = vmatpush.msra.mxu0 0.0
        %3277 = vmatpush.msra.mxu0 0.0
        %3278 = vmatpush.msra.mxu0 0.0
        %3279 = vmatpush.msra.mxu0 0.0
        %3280 = vmatpush.msra.mxu0 0.0
        %3281 = vmatpush.msra.mxu0 0.0
        %3282 = vmatpush.msra.mxu0 0.0
        %3283 = vmatpush.msra.mxu0 0.0
        %v3284 = vand.u32 %v2845, 4294901760
        %3285 = vmatpush.msra.mxu0 %v3284
        %v3286 = vand.u32 %v3143, 4294901760
        %3287 = vmatmul.f32.gmra.mxu0 %v3286
        %v3288 = vpop.f32.mrf.mxu0
        %v3289 = vadd.f32 %v3267, %v3288
        %3290 = vdwg.mxu0
        %v3292 = vsel %vm2839, %v2826, 0
        %3294 = vmatpush.msra.mxu0 0.0
        %3295 = vmatpush.msra.mxu0 0.0
        %3296 = vmatpush.msra.mxu0 0.0
        %3297 = vmatpush.msra.mxu0 0.0
        %3298 = vmatpush.msra.mxu0 0.0
        %3299 = vmatpush.msra.mxu0 0.0
        %3300 = vmatpush.msra.mxu0 0.0
        %3301 = vmatpush.msra.mxu0 0.0
        %3302 = vmatpush.msra.mxu0 0.0
        %3303 = vmatpush.msra.mxu0 0.0
        %3304 = vmatpush.msra.mxu0 0.0
        %3305 = vmatpush.msra.mxu0 0.0
        %3306 = vmatpush.msra.mxu0 0.0
        %3307 = vmatpush.msra.mxu0 0.0
        %3308 = vmatpush.msra.mxu0 0.0
        %v3309 = vand.u32 %v2845, 4294901760
        %3310 = vmatpush.msra.mxu0 %v3309
        %v3311 = vand.u32 %v3292, 4294901760
        %v3312 = vsub.f32 %v3292, %v3311
        %v3313 = vand.u32 %v3312, 4294901760
        %v3314 = vsub.f32 %v3312, %v3313
        %v3315 = vand.u32 %v3314, 4294901760
        %3316 = vmatmul.f32.gmra.mxu0 %v3315
        %v3317 = vpop.f32.mrf.mxu0
        %v3318 = vadd.f32 0.0, %v3317
        %3319 = vdwg.mxu0
        %3320 = vmatpush.msra.mxu0 0.0
        %3321 = vmatpush.msra.mxu0 0.0
        %3322 = vmatpush.msra.mxu0 0.0
        %3323 = vmatpush.msra.mxu0 0.0
        %3324 = vmatpush.msra.mxu0 0.0
        %3325 = vmatpush.msra.mxu0 0.0
        %3326 = vmatpush.msra.mxu0 0.0
        %3327 = vmatpush.msra.mxu0 0.0
        %3328 = vmatpush.msra.mxu0 0.0
        %3329 = vmatpush.msra.mxu0 0.0
        %3330 = vmatpush.msra.mxu0 0.0
        %3331 = vmatpush.msra.mxu0 0.0
        %3332 = vmatpush.msra.mxu0 0.0
        %3333 = vmatpush.msra.mxu0 0.0
        %3334 = vmatpush.msra.mxu0 0.0
        %v3335 = vand.u32 %v2845, 4294901760
        %v3336 = vsub.f32 %v2845, %v3335
        %v3337 = vand.u32 %v3336, 4294901760
        %v3338 = vsub.f32 %v3336, %v3337
        %v3339 = vand.u32 %v3338, 4294901760
        %3340 = vmatpush.msra.mxu0 %v3339
        %v3341 = vand.u32 %v3292, 4294901760
        %3342 = vmatmul.f32.gmra.mxu0 %v3341
        %v3343 = vpop.f32.mrf.mxu0
        %v3344 = vadd.f32 %v3318, %v3343
        %3345 = vdwg.mxu0
        %3346 = vmatpush.msra.mxu0 0.0
        %3347 = vmatpush.msra.mxu0 0.0
        %3348 = vmatpush.msra.mxu0 0.0
        %3349 = vmatpush.msra.mxu0 0.0
        %3350 = vmatpush.msra.mxu0 0.0
        %3351 = vmatpush.msra.mxu0 0.0
        %3352 = vmatpush.msra.mxu0 0.0
        %3353 = vmatpush.msra.mxu0 0.0
        %3354 = vmatpush.msra.mxu0 0.0
        %3355 = vmatpush.msra.mxu0 0.0
        %3356 = vmatpush.msra.mxu0 0.0
        %3357 = vmatpush.msra.mxu0 0.0
        %3358 = vmatpush.msra.mxu0 0.0
        %3359 = vmatpush.msra.mxu0 0.0
        %3360 = vmatpush.msra.mxu0 0.0
        %v3361 = vand.u32 %v2845, 4294901760
        %v3362 = vsub.f32 %v2845, %v3361
        %3363 = vmatpush.msra.mxu0 %v3362
        %v3364 = vand.u32 %v3292, 4294901760
        %v3365 = vsub.f32 %v3292, %v3364
        %3366 = vmatmul.f32.gmra.mxu0 %v3365
        %v3367 = vpop.f32.mrf.mxu0
        %v3368 = vadd.f32 %v3344, %v3367
        %3369 = vdwg.mxu0
        %3370 = vmatpush.msra.mxu0 0.0
        %3371 = vmatpush.msra.mxu0 0.0
        %3372 = vmatpush.msra.mxu0 0.0
        %3373 = vmatpush.msra.mxu0 0.0
        %3374 = vmatpush.msra.mxu0 0.0
        %3375 = vmatpush.msra.mxu0 0.0
        %3376 = vmatpush.msra.mxu0 0.0
        %3377 = vmatpush.msra.mxu0 0.0
        %3378 = vmatpush.msra.mxu0 0.0
        %3379 = vmatpush.msra.mxu0 0.0
        %3380 = vmatpush.msra.mxu0 0.0
        %3381 = vmatpush.msra.mxu0 0.0
        %3382 = vmatpush.msra.mxu0 0.0
        %3383 = vmatpush.msra.mxu0 0.0
        %3384 = vmatpush.msra.mxu0 0.0
        %v3385 = vand.u32 %v2845, 4294901760
        %3386 = vmatpush.msra.mxu0 %v3385
        %v3387 = vand.u32 %v3292, 4294901760
        %v3388 = vsub.f32 %v3292, %v3387
        %v3389 = vand.u32 %v3388, 4294901760
        %3390 = vmatmul.f32.gmra.mxu0 %v3389
        %v3391 = vpop.f32.mrf.mxu0
        %v3392 = vadd.f32 %v3368, %v3391
        %3393 = vdwg.mxu0
        %3394 = vmatpush.msra.mxu0 0.0
        %3395 = vmatpush.msra.mxu0 0.0
        %3396 = vmatpush.msra.mxu0 0.0
        %3397 = vmatpush.msra.mxu0 0.0
        %3398 = vmatpush.msra.mxu0 0.0
        %3399 = vmatpush.msra.mxu0 0.0
        %3400 = vmatpush.msra.mxu0 0.0
        %3401 = vmatpush.msra.mxu0 0.0
        %3402 = vmatpush.msra.mxu0 0.0
        %3403 = vmatpush.msra.mxu0 0.0
        %3404 = vmatpush.msra.mxu0 0.0
        %3405 = vmatpush.msra.mxu0 0.0
        %3406 = vmatpush.msra.mxu0 0.0
        %3407 = vmatpush.msra.mxu0 0.0
        %3408 = vmatpush.msra.mxu0 0.0
        %v3409 = vand.u32 %v2845, 4294901760
        %v3410 = vsub.f32 %v2845, %v3409
        %v3411 = vand.u32 %v3410, 4294901760
        %3412 = vmatpush.msra.mxu0 %v3411
        %v3413 = vand.u32 %v3292, 4294901760
        %3414 = vmatmul.f32.gmra.mxu0 %v3413
        %v3415 = vpop.f32.mrf.mxu0
        %v3416 = vadd.f32 %v3392, %v3415
        %3417 = vdwg.mxu0
        %3418 = vmatpush.msra.mxu0 0.0
        %3419 = vmatpush.msra.mxu0 0.0
        %3420 = vmatpush.msra.mxu0 0.0
        %3421 = vmatpush.msra.mxu0 0.0
        %3422 = vmatpush.msra.mxu0 0.0
        %3423 = vmatpush.msra.mxu0 0.0
        %3424 = vmatpush.msra.mxu0 0.0
        %3425 = vmatpush.msra.mxu0 0.0
        %3426 = vmatpush.msra.mxu0 0.0
        %3427 = vmatpush.msra.mxu0 0.0
        %3428 = vmatpush.msra.mxu0 0.0
        %3429 = vmatpush.msra.mxu0 0.0
        %3430 = vmatpush.msra.mxu0 0.0
        %3431 = vmatpush.msra.mxu0 0.0
        %3432 = vmatpush.msra.mxu0 0.0
        %v3433 = vand.u32 %v2845, 4294901760
        %3434 = vmatpush.msra.mxu0 %v3433
        %v3435 = vand.u32 %v3292, 4294901760
        %3436 = vmatmul.f32.gmra.mxu0 %v3435
        %v3437 = vpop.f32.mrf.mxu0
        %v3438 = vadd.f32 %v3416, %v3437
        %3439 = vdwg.mxu0
        %v3441 = vsel %vm2839, %v2838, 0
        %v3444 = vsel %vm2843, %v2991, 0
        %3446 = vmatpush.msra.mxu0 0.0
        %3447 = vmatpush.msra.mxu0 0.0
        %3448 = vmatpush.msra.mxu0 0.0
        %3449 = vmatpush.msra.mxu0 0.0
        %3450 = vmatpush.msra.mxu0 0.0
        %3451 = vmatpush.msra.mxu0 0.0
        %3452 = vmatpush.msra.mxu0 0.0
        %3453 = vmatpush.msra.mxu0 0.0
        %3454 = vmatpush.msra.mxu0 0.0
        %3455 = vmatpush.msra.mxu0 0.0
        %3456 = vmatpush.msra.mxu0 0.0
        %3457 = vmatpush.msra.mxu0 0.0
        %3458 = vmatpush.msra.mxu0 0.0
        %3459 = vmatpush.msra.mxu0 0.0
        %3460 = vmatpush.msra.mxu0 0.0
        %v3461 = vand.u32 %v3444, 4294901760
        %3462 = vmatpush.msra.mxu0 %v3461
        %v3463 = vand.u32 %v3441, 4294901760
        %v3464 = vsub.f32 %v3441, %v3463
        %v3465 = vand.u32 %v3464, 4294901760
        %v3466 = vsub.f32 %v3464, %v3465
        %v3467 = vand.u32 %v3466, 4294901760
        %3468 = vmatmul.f32.gmra.mxu0 %v3467
        %v3469 = vpop.f32.mrf.mxu0
        %v3470 = vadd.f32 0.0, %v3469
        %3471 = vdwg.mxu0
        %3472 = vmatpush.msra.mxu0 0.0
        %3473 = vmatpush.msra.mxu0 0.0
        %3474 = vmatpush.msra.mxu0 0.0
        %3475 = vmatpush.msra.mxu0 0.0
        %3476 = vmatpush.msra.mxu0 0.0
        %3477 = vmatpush.msra.mxu0 0.0
        %3478 = vmatpush.msra.mxu0 0.0
        %3479 = vmatpush.msra.mxu0 0.0
        %3480 = vmatpush.msra.mxu0 0.0
        %3481 = vmatpush.msra.mxu0 0.0
        %3482 = vmatpush.msra.mxu0 0.0
        %3483 = vmatpush.msra.mxu0 0.0
        %3484 = vmatpush.msra.mxu0 0.0
        %3485 = vmatpush.msra.mxu0 0.0
        %3486 = vmatpush.msra.mxu0 0.0
        %v3487 = vand.u32 %v3444, 4294901760
        %v3488 = vsub.f32 %v3444, %v3487
        %v3489 = vand.u32 %v3488, 4294901760
        %v3490 = vsub.f32 %v3488, %v3489
        %v3491 = vand.u32 %v3490, 4294901760
        %3492 = vmatpush.msra.mxu0 %v3491
        %v3493 = vand.u32 %v3441, 4294901760
        %3494 = vmatmul.f32.gmra.mxu0 %v3493
        %v3495 = vpop.f32.mrf.mxu0
        %v3496 = vadd.f32 %v3470, %v3495
        %3497 = vdwg.mxu0
        %3498 = vmatpush.msra.mxu0 0.0
        %3499 = vmatpush.msra.mxu0 0.0
        %3500 = vmatpush.msra.mxu0 0.0
        %3501 = vmatpush.msra.mxu0 0.0
        %3502 = vmatpush.msra.mxu0 0.0
        %3503 = vmatpush.msra.mxu0 0.0
        %3504 = vmatpush.msra.mxu0 0.0
        %3505 = vmatpush.msra.mxu0 0.0
        %3506 = vmatpush.msra.mxu0 0.0
        %3507 = vmatpush.msra.mxu0 0.0
        %3508 = vmatpush.msra.mxu0 0.0
        %3509 = vmatpush.msra.mxu0 0.0
        %3510 = vmatpush.msra.mxu0 0.0
        %3511 = vmatpush.msra.mxu0 0.0
        %3512 = vmatpush.msra.mxu0 0.0
        %v3513 = vand.u32 %v3444, 4294901760
        %v3514 = vsub.f32 %v3444, %v3513
        %3515 = vmatpush.msra.mxu0 %v3514
        %v3516 = vand.u32 %v3441, 4294901760
        %v3517 = vsub.f32 %v3441, %v3516
        %3518 = vmatmul.f32.gmra.mxu0 %v3517
        %v3519 = vpop.f32.mrf.mxu0
        %v3520 = vadd.f32 %v3496, %v3519
        %3521 = vdwg.mxu0
        %3522 = vmatpush.msra.mxu0 0.0
        %3523 = vmatpush.msra.mxu0 0.0
        %3524 = vmatpush.msra.mxu0 0.0
        %3525 = vmatpush.msra.mxu0 0.0
        %3526 = vmatpush.msra.mxu0 0.0
        %3527 = vmatpush.msra.mxu0 0.0
        %3528 = vmatpush.msra.mxu0 0.0
        %3529 = vmatpush.msra.mxu0 0.0
        %3530 = vmatpush.msra.mxu0 0.0
        %3531 = vmatpush.msra.mxu0 0.0
        %3532 = vmatpush.msra.mxu0 0.0
        %3533 = vmatpush.msra.mxu0 0.0
        %3534 = vmatpush.msra.mxu0 0.0
        %3535 = vmatpush.msra.mxu0 0.0
        %3536 = vmatpush.msra.mxu0 0.0
        %v3537 = vand.u32 %v3444, 4294901760
        %3538 = vmatpush.msra.mxu0 %v3537
        %v3539 = vand.u32 %v3441, 4294901760
        %v3540 = vsub.f32 %v3441, %v3539
        %v3541 = vand.u32 %v3540, 4294901760
        %3542 = vmatmul.f32.gmra.mxu0 %v3541
        %v3543 = vpop.f32.mrf.mxu0
        %v3544 = vadd.f32 %v3520, %v3543
        %3545 = vdwg.mxu0
        %3546 = vmatpush.msra.mxu0 0.0
        %3547 = vmatpush.msra.mxu0 0.0
        %3548 = vmatpush.msra.mxu0 0.0
        %3549 = vmatpush.msra.mxu0 0.0
        %3550 = vmatpush.msra.mxu0 0.0
        %3551 = vmatpush.msra.mxu0 0.0
        %3552 = vmatpush.msra.mxu0 0.0
        %3553 = vmatpush.msra.mxu0 0.0
        %3554 = vmatpush.msra.mxu0 0.0
        %3555 = vmatpush.msra.mxu0 0.0
        %3556 = vmatpush.msra.mxu0 0.0
        %3557 = vmatpush.msra.mxu0 0.0
        %3558 = vmatpush.msra.mxu0 0.0
        %3559 = vmatpush.msra.mxu0 0.0
        %3560 = vmatpush.msra.mxu0 0.0
        %v3561 = vand.u32 %v3444, 4294901760
        %v3562 = vsub.f32 %v3444, %v3561
        %v3563 = vand.u32 %v3562, 4294901760
        %3564 = vmatpush.msra.mxu0 %v3563
        %v3565 = vand.u32 %v3441, 4294901760
        %3566 = vmatmul.f32.gmra.mxu0 %v3565
        %v3567 = vpop.f32.mrf.mxu0
        %v3568 = vadd.f32 %v3544, %v3567
        %3569 = vdwg.mxu0
        %3570 = vmatpush.msra.mxu0 0.0
        %3571 = vmatpush.msra.mxu0 0.0
        %3572 = vmatpush.msra.mxu0 0.0
        %3573 = vmatpush.msra.mxu0 0.0
        %3574 = vmatpush.msra.mxu0 0.0
        %3575 = vmatpush.msra.mxu0 0.0
        %3576 = vmatpush.msra.mxu0 0.0
        %3577 = vmatpush.msra.mxu0 0.0
        %3578 = vmatpush.msra.mxu0 0.0
        %3579 = vmatpush.msra.mxu0 0.0
        %3580 = vmatpush.msra.mxu0 0.0
        %3581 = vmatpush.msra.mxu0 0.0
        %3582 = vmatpush.msra.mxu0 0.0
        %3583 = vmatpush.msra.mxu0 0.0
        %3584 = vmatpush.msra.mxu0 0.0
        %v3585 = vand.u32 %v3444, 4294901760
        %3586 = vmatpush.msra.mxu0 %v3585
        %v3587 = vand.u32 %v3441, 4294901760
        %3588 = vmatmul.f32.gmra.mxu0 %v3587
        %v3589 = vpop.f32.mrf.mxu0
        %v3590 = vadd.f32 %v3568, %v3589
        %3591 = vdwg.mxu0
        %v3593 = vsel %vm2843, %v3140, 0
        %3595 = vmatpush.msra.mxu0 0.0
        %3596 = vmatpush.msra.mxu0 0.0
        %3597 = vmatpush.msra.mxu0 0.0
        %3598 = vmatpush.msra.mxu0 0.0
        %3599 = vmatpush.msra.mxu0 0.0
        %3600 = vmatpush.msra.mxu0 0.0
        %3601 = vmatpush.msra.mxu0 0.0
        %3602 = vmatpush.msra.mxu0 0.0
        %3603 = vmatpush.msra.mxu0 0.0
        %3604 = vmatpush.msra.mxu0 0.0
        %3605 = vmatpush.msra.mxu0 0.0
        %3606 = vmatpush.msra.mxu0 0.0
        %3607 = vmatpush.msra.mxu0 0.0
        %3608 = vmatpush.msra.mxu0 0.0
        %3609 = vmatpush.msra.mxu0 0.0
        %v3610 = vand.u32 %v3593, 4294901760
        %3611 = vmatpush.msra.mxu0 %v3610
        %v3612 = vand.u32 %v3441, 4294901760
        %v3613 = vsub.f32 %v3441, %v3612
        %v3614 = vand.u32 %v3613, 4294901760
        %v3615 = vsub.f32 %v3613, %v3614
        %v3616 = vand.u32 %v3615, 4294901760
        %3617 = vmatmul.f32.gmra.mxu0 %v3616
        %v3618 = vpop.f32.mrf.mxu0
        %v3619 = vadd.f32 0.0, %v3618
        %3620 = vdwg.mxu0
        %3621 = vmatpush.msra.mxu0 0.0
        %3622 = vmatpush.msra.mxu0 0.0
        %3623 = vmatpush.msra.mxu0 0.0
        %3624 = vmatpush.msra.mxu0 0.0
        %3625 = vmatpush.msra.mxu0 0.0
        %3626 = vmatpush.msra.mxu0 0.0
        %3627 = vmatpush.msra.mxu0 0.0
        %3628 = vmatpush.msra.mxu0 0.0
        %3629 = vmatpush.msra.mxu0 0.0
        %3630 = vmatpush.msra.mxu0 0.0
        %3631 = vmatpush.msra.mxu0 0.0
        %3632 = vmatpush.msra.mxu0 0.0
        %3633 = vmatpush.msra.mxu0 0.0
        %3634 = vmatpush.msra.mxu0 0.0
        %3635 = vmatpush.msra.mxu0 0.0
        %v3636 = vand.u32 %v3593, 4294901760
        %v3637 = vsub.f32 %v3593, %v3636
        %v3638 = vand.u32 %v3637, 4294901760
        %v3639 = vsub.f32 %v3637, %v3638
        %v3640 = vand.u32 %v3639, 4294901760
        %3641 = vmatpush.msra.mxu0 %v3640
        %v3642 = vand.u32 %v3441, 4294901760
        %3643 = vmatmul.f32.gmra.mxu0 %v3642
        %v3644 = vpop.f32.mrf.mxu0
        %v3645 = vadd.f32 %v3619, %v3644
        %3646 = vdwg.mxu0
        %3647 = vmatpush.msra.mxu0 0.0
        %3648 = vmatpush.msra.mxu0 0.0
        %3649 = vmatpush.msra.mxu0 0.0
        %3650 = vmatpush.msra.mxu0 0.0
        %3651 = vmatpush.msra.mxu0 0.0
        %3652 = vmatpush.msra.mxu0 0.0
        %3653 = vmatpush.msra.mxu0 0.0
        %3654 = vmatpush.msra.mxu0 0.0
        %3655 = vmatpush.msra.mxu0 0.0
        %3656 = vmatpush.msra.mxu0 0.0
        %3657 = vmatpush.msra.mxu0 0.0
        %3658 = vmatpush.msra.mxu0 0.0
        %3659 = vmatpush.msra.mxu0 0.0
        %3660 = vmatpush.msra.mxu0 0.0
        %3661 = vmatpush.msra.mxu0 0.0
        %v3662 = vand.u32 %v3593, 4294901760
        %v3663 = vsub.f32 %v3593, %v3662
        %3664 = vmatpush.msra.mxu0 %v3663
        %v3665 = vand.u32 %v3441, 4294901760
        %v3666 = vsub.f32 %v3441, %v3665
        %3667 = vmatmul.f32.gmra.mxu0 %v3666
        %v3668 = vpop.f32.mrf.mxu0
        %v3669 = vadd.f32 %v3645, %v3668
        %3670 = vdwg.mxu0
        %3671 = vmatpush.msra.mxu0 0.0
        %3672 = vmatpush.msra.mxu0 0.0
        %3673 = vmatpush.msra.mxu0 0.0
        %3674 = vmatpush.msra.mxu0 0.0
        %3675 = vmatpush.msra.mxu0 0.0
        %3676 = vmatpush.msra.mxu0 0.0
        %3677 = vmatpush.msra.mxu0 0.0
        %3678 = vmatpush.msra.mxu0 0.0
        %3679 = vmatpush.msra.mxu0 0.0
        %3680 = vmatpush.msra.mxu0 0.0
        %3681 = vmatpush.msra.mxu0 0.0
        %3682 = vmatpush.msra.mxu0 0.0
        %3683 = vmatpush.msra.mxu0 0.0
        %3684 = vmatpush.msra.mxu0 0.0
        %3685 = vmatpush.msra.mxu0 0.0
        %v3686 = vand.u32 %v3593, 4294901760
        %3687 = vmatpush.msra.mxu0 %v3686
        %v3688 = vand.u32 %v3441, 4294901760
        %v3689 = vsub.f32 %v3441, %v3688
        %v3690 = vand.u32 %v3689, 4294901760
        %3691 = vmatmul.f32.gmra.mxu0 %v3690
        %v3692 = vpop.f32.mrf.mxu0
        %v3693 = vadd.f32 %v3669, %v3692
        %3694 = vdwg.mxu0
        %3695 = vmatpush.msra.mxu0 0.0
        %3696 = vmatpush.msra.mxu0 0.0
        %3697 = vmatpush.msra.mxu0 0.0
        %3698 = vmatpush.msra.mxu0 0.0
        %3699 = vmatpush.msra.mxu0 0.0
        %3700 = vmatpush.msra.mxu0 0.0
        %3701 = vmatpush.msra.mxu0 0.0
        %3702 = vmatpush.msra.mxu0 0.0
        %3703 = vmatpush.msra.mxu0 0.0
        %3704 = vmatpush.msra.mxu0 0.0
        %3705 = vmatpush.msra.mxu0 0.0
        %3706 = vmatpush.msra.mxu0 0.0
        %3707 = vmatpush.msra.mxu0 0.0
        %3708 = vmatpush.msra.mxu0 0.0
        %3709 = vmatpush.msra.mxu0 0.0
        %v3710 = vand.u32 %v3593, 4294901760
        %v3711 = vsub.f32 %v3593, %v3710
        %v3712 = vand.u32 %v3711, 4294901760
        %3713 = vmatpush.msra.mxu0 %v3712
        %v3714 = vand.u32 %v3441, 4294901760
        %3715 = vmatmul.f32.gmra.mxu0 %v3714
        %v3716 = vpop.f32.mrf.mxu0
        %v3717 = vadd.f32 %v3693, %v3716
        %3718 = vdwg.mxu0
        %3719 = vmatpush.msra.mxu0 0.0
        %3720 = vmatpush.msra.mxu0 0.0
        %3721 = vmatpush.msra.mxu0 0.0
        %3722 = vmatpush.msra.mxu0 0.0
        %3723 = vmatpush.msra.mxu0 0.0
        %3724 = vmatpush.msra.mxu0 0.0
        %3725 = vmatpush.msra.mxu0 0.0
        %3726 = vmatpush.msra.mxu0 0.0
        %3727 = vmatpush.msra.mxu0 0.0
        %3728 = vmatpush.msra.mxu0 0.0
        %3729 = vmatpush.msra.mxu0 0.0
        %3730 = vmatpush.msra.mxu0 0.0
        %3731 = vmatpush.msra.mxu0 0.0
        %3732 = vmatpush.msra.mxu0 0.0
        %3733 = vmatpush.msra.mxu0 0.0
        %v3734 = vand.u32 %v3593, 4294901760
        %3735 = vmatpush.msra.mxu0 %v3734
        %v3736 = vand.u32 %v3441, 4294901760
        %3737 = vmatmul.f32.gmra.mxu0 %v3736
        %v3738 = vpop.f32.mrf.mxu0
        %v3739 = vadd.f32 %v3717, %v3738
        %3740 = vdwg.mxu0
        %v3742 = vsel %vm2843, %v3289, 0
        %3744 = vmatpush.msra.mxu0 0.0
        %3745 = vmatpush.msra.mxu0 0.0
        %3746 = vmatpush.msra.mxu0 0.0
        %3747 = vmatpush.msra.mxu0 0.0
        %3748 = vmatpush.msra.mxu0 0.0
        %3749 = vmatpush.msra.mxu0 0.0
        %3750 = vmatpush.msra.mxu0 0.0
        %3751 = vmatpush.msra.mxu0 0.0
        %3752 = vmatpush.msra.mxu0 0.0
        %3753 = vmatpush.msra.mxu0 0.0
        %3754 = vmatpush.msra.mxu0 0.0
        %3755 = vmatpush.msra.mxu0 0.0
        %3756 = vmatpush.msra.mxu0 0.0
        %3757 = vmatpush.msra.mxu0 0.0
        %3758 = vmatpush.msra.mxu0 0.0
        %v3759 = vand.u32 %v3742, 4294901760
        %3760 = vmatpush.msra.mxu0 %v3759
        %v3761 = vand.u32 %v3441, 4294901760
        %v3762 = vsub.f32 %v3441, %v3761
        %v3763 = vand.u32 %v3762, 4294901760
        %v3764 = vsub.f32 %v3762, %v3763
        %v3765 = vand.u32 %v3764, 4294901760
        %3766 = vmatmul.f32.gmra.mxu0 %v3765
        %v3767 = vpop.f32.mrf.mxu0
        %v3768 = vadd.f32 0.0, %v3767
        %3769 = vdwg.mxu0
        %3770 = vmatpush.msra.mxu0 0.0
        %3771 = vmatpush.msra.mxu0 0.0
        %3772 = vmatpush.msra.mxu0 0.0
        %3773 = vmatpush.msra.mxu0 0.0
        %3774 = vmatpush.msra.mxu0 0.0
        %3775 = vmatpush.msra.mxu0 0.0
        %3776 = vmatpush.msra.mxu0 0.0
        %3777 = vmatpush.msra.mxu0 0.0
        %3778 = vmatpush.msra.mxu0 0.0
        %3779 = vmatpush.msra.mxu0 0.0
        %3780 = vmatpush.msra.mxu0 0.0
        %3781 = vmatpush.msra.mxu0 0.0
        %3782 = vmatpush.msra.mxu0 0.0
        %3783 = vmatpush.msra.mxu0 0.0
        %3784 = vmatpush.msra.mxu0 0.0
        %v3785 = vand.u32 %v3742, 4294901760
        %v3786 = vsub.f32 %v3742, %v3785
        %v3787 = vand.u32 %v3786, 4294901760
        %v3788 = vsub.f32 %v3786, %v3787
        %v3789 = vand.u32 %v3788, 4294901760
        %3790 = vmatpush.msra.mxu0 %v3789
        %v3791 = vand.u32 %v3441, 4294901760
        %3792 = vmatmul.f32.gmra.mxu0 %v3791
        %v3793 = vpop.f32.mrf.mxu0
        %v3794 = vadd.f32 %v3768, %v3793
        %3795 = vdwg.mxu0
        %3796 = vmatpush.msra.mxu0 0.0
        %3797 = vmatpush.msra.mxu0 0.0
        %3798 = vmatpush.msra.mxu0 0.0
        %3799 = vmatpush.msra.mxu0 0.0
        %3800 = vmatpush.msra.mxu0 0.0
        %3801 = vmatpush.msra.mxu0 0.0
        %3802 = vmatpush.msra.mxu0 0.0
        %3803 = vmatpush.msra.mxu0 0.0
        %3804 = vmatpush.msra.mxu0 0.0
        %3805 = vmatpush.msra.mxu0 0.0
        %3806 = vmatpush.msra.mxu0 0.0
        %3807 = vmatpush.msra.mxu0 0.0
        %3808 = vmatpush.msra.mxu0 0.0
        %3809 = vmatpush.msra.mxu0 0.0
        %3810 = vmatpush.msra.mxu0 0.0
        %v3811 = vand.u32 %v3742, 4294901760
        %v3812 = vsub.f32 %v3742, %v3811
        %3813 = vmatpush.msra.mxu0 %v3812
        %v3814 = vand.u32 %v3441, 4294901760
        %v3815 = vsub.f32 %v3441, %v3814
        %3816 = vmatmul.f32.gmra.mxu0 %v3815
        %v3817 = vpop.f32.mrf.mxu0
        %v3818 = vadd.f32 %v3794, %v3817
        %3819 = vdwg.mxu0
        %3820 = vmatpush.msra.mxu0 0.0
        %3821 = vmatpush.msra.mxu0 0.0
        %3822 = vmatpush.msra.mxu0 0.0
        %3823 = vmatpush.msra.mxu0 0.0
        %3824 = vmatpush.msra.mxu0 0.0
        %3825 = vmatpush.msra.mxu0 0.0
        %3826 = vmatpush.msra.mxu0 0.0
        %3827 = vmatpush.msra.mxu0 0.0
        %3828 = vmatpush.msra.mxu0 0.0
        %3829 = vmatpush.msra.mxu0 0.0
        %3830 = vmatpush.msra.mxu0 0.0
        %3831 = vmatpush.msra.mxu0 0.0
        %3832 = vmatpush.msra.mxu0 0.0
        %3833 = vmatpush.msra.mxu0 0.0
        %3834 = vmatpush.msra.mxu0 0.0
        %v3835 = vand.u32 %v3742, 4294901760
        %3836 = vmatpush.msra.mxu0 %v3835
        %v3837 = vand.u32 %v3441, 4294901760
        %v3838 = vsub.f32 %v3441, %v3837
        %v3839 = vand.u32 %v3838, 4294901760
        %3840 = vmatmul.f32.gmra.mxu0 %v3839
        %v3841 = vpop.f32.mrf.mxu0
        %v3842 = vadd.f32 %v3818, %v3841
        %3843 = vdwg.mxu0
        %3844 = vmatpush.msra.mxu0 0.0
        %3845 = vmatpush.msra.mxu0 0.0
        %3846 = vmatpush.msra.mxu0 0.0
        %3847 = vmatpush.msra.mxu0 0.0
        %3848 = vmatpush.msra.mxu0 0.0
        %3849 = vmatpush.msra.mxu0 0.0
        %3850 = vmatpush.msra.mxu0 0.0
        %3851 = vmatpush.msra.mxu0 0.0
        %3852 = vmatpush.msra.mxu0 0.0
        %3853 = vmatpush.msra.mxu0 0.0
        %3854 = vmatpush.msra.mxu0 0.0
        %3855 = vmatpush.msra.mxu0 0.0
        %3856 = vmatpush.msra.mxu0 0.0
        %3857 = vmatpush.msra.mxu0 0.0
        %3858 = vmatpush.msra.mxu0 0.0
        %v3859 = vand.u32 %v3742, 4294901760
        %v3860 = vsub.f32 %v3742, %v3859
        %v3861 = vand.u32 %v3860, 4294901760
        %3862 = vmatpush.msra.mxu0 %v3861
        %v3863 = vand.u32 %v3441, 4294901760
        %3864 = vmatmul.f32.gmra.mxu0 %v3863
        %v3865 = vpop.f32.mrf.mxu0
        %v3866 = vadd.f32 %v3842, %v3865
        %3867 = vdwg.mxu0
        %3868 = vmatpush.msra.mxu0 0.0
        %3869 = vmatpush.msra.mxu0 0.0
        %3870 = vmatpush.msra.mxu0 0.0
        %3871 = vmatpush.msra.mxu0 0.0
        %3872 = vmatpush.msra.mxu0 0.0
        %3873 = vmatpush.msra.mxu0 0.0
        %3874 = vmatpush.msra.mxu0 0.0
        %3875 = vmatpush.msra.mxu0 0.0
        %3876 = vmatpush.msra.mxu0 0.0
        %3877 = vmatpush.msra.mxu0 0.0
        %3878 = vmatpush.msra.mxu0 0.0
        %3879 = vmatpush.msra.mxu0 0.0
        %3880 = vmatpush.msra.mxu0 0.0
        %3881 = vmatpush.msra.mxu0 0.0
        %3882 = vmatpush.msra.mxu0 0.0
        %v3883 = vand.u32 %v3742, 4294901760
        %3884 = vmatpush.msra.mxu0 %v3883
        %v3885 = vand.u32 %v3441, 4294901760
        %3886 = vmatmul.f32.gmra.mxu0 %v3885
        %v3887 = vpop.f32.mrf.mxu0
        %v3888 = vadd.f32 %v3866, %v3887
        %3889 = vdwg.mxu0
        %v3891 = vsel %vm2843, %v3438, 0
        %3893 = vmatpush.msra.mxu0 0.0
        %3894 = vmatpush.msra.mxu0 0.0
        %3895 = vmatpush.msra.mxu0 0.0
        %3896 = vmatpush.msra.mxu0 0.0
        %3897 = vmatpush.msra.mxu0 0.0
        %3898 = vmatpush.msra.mxu0 0.0
        %3899 = vmatpush.msra.mxu0 0.0
        %3900 = vmatpush.msra.mxu0 0.0
        %3901 = vmatpush.msra.mxu0 0.0
        %3902 = vmatpush.msra.mxu0 0.0
        %3903 = vmatpush.msra.mxu0 0.0
        %3904 = vmatpush.msra.mxu0 0.0
        %3905 = vmatpush.msra.mxu0 0.0
        %3906 = vmatpush.msra.mxu0 0.0
        %3907 = vmatpush.msra.mxu0 0.0
        %v3908 = vand.u32 %v3891, 4294901760
        %3909 = vmatpush.msra.mxu0 %v3908
        %v3910 = vand.u32 %v3441, 4294901760
        %v3911 = vsub.f32 %v3441, %v3910
        %v3912 = vand.u32 %v3911, 4294901760
        %v3913 = vsub.f32 %v3911, %v3912
        %v3914 = vand.u32 %v3913, 4294901760
        %3915 = vmatmul.f32.gmra.mxu0 %v3914
        %v3916 = vpop.f32.mrf.mxu0
        %v3917 = vadd.f32 0.0, %v3916
        %3918 = vdwg.mxu0
        %3919 = vmatpush.msra.mxu0 0.0
        %3920 = vmatpush.msra.mxu0 0.0
        %3921 = vmatpush.msra.mxu0 0.0
        %3922 = vmatpush.msra.mxu0 0.0
        %3923 = vmatpush.msra.mxu0 0.0
        %3924 = vmatpush.msra.mxu0 0.0
        %3925 = vmatpush.msra.mxu0 0.0
        %3926 = vmatpush.msra.mxu0 0.0
        %3927 = vmatpush.msra.mxu0 0.0
        %3928 = vmatpush.msra.mxu0 0.0
        %3929 = vmatpush.msra.mxu0 0.0
        %3930 = vmatpush.msra.mxu0 0.0
        %3931 = vmatpush.msra.mxu0 0.0
        %3932 = vmatpush.msra.mxu0 0.0
        %3933 = vmatpush.msra.mxu0 0.0
        %v3934 = vand.u32 %v3891, 4294901760
        %v3935 = vsub.f32 %v3891, %v3934
        %v3936 = vand.u32 %v3935, 4294901760
        %v3937 = vsub.f32 %v3935, %v3936
        %v3938 = vand.u32 %v3937, 4294901760
        %3939 = vmatpush.msra.mxu0 %v3938
        %v3940 = vand.u32 %v3441, 4294901760
        %3941 = vmatmul.f32.gmra.mxu0 %v3940
        %v3942 = vpop.f32.mrf.mxu0
        %v3943 = vadd.f32 %v3917, %v3942
        %3944 = vdwg.mxu0
        %3945 = vmatpush.msra.mxu0 0.0
        %3946 = vmatpush.msra.mxu0 0.0
        %3947 = vmatpush.msra.mxu0 0.0
        %3948 = vmatpush.msra.mxu0 0.0
        %3949 = vmatpush.msra.mxu0 0.0
        %3950 = vmatpush.msra.mxu0 0.0
        %3951 = vmatpush.msra.mxu0 0.0
        %3952 = vmatpush.msra.mxu0 0.0
        %3953 = vmatpush.msra.mxu0 0.0
        %3954 = vmatpush.msra.mxu0 0.0
        %3955 = vmatpush.msra.mxu0 0.0
        %3956 = vmatpush.msra.mxu0 0.0
        %3957 = vmatpush.msra.mxu0 0.0
        %3958 = vmatpush.msra.mxu0 0.0
        %3959 = vmatpush.msra.mxu0 0.0
        %v3960 = vand.u32 %v3891, 4294901760
        %v3961 = vsub.f32 %v3891, %v3960
        %3962 = vmatpush.msra.mxu0 %v3961
        %v3963 = vand.u32 %v3441, 4294901760
        %v3964 = vsub.f32 %v3441, %v3963
        %3965 = vmatmul.f32.gmra.mxu0 %v3964
        %v3966 = vpop.f32.mrf.mxu0
        %v3967 = vadd.f32 %v3943, %v3966
        %3968 = vdwg.mxu0
        %3969 = vmatpush.msra.mxu0 0.0
        %3970 = vmatpush.msra.mxu0 0.0
        %3971 = vmatpush.msra.mxu0 0.0
        %3972 = vmatpush.msra.mxu0 0.0
        %3973 = vmatpush.msra.mxu0 0.0
        %3974 = vmatpush.msra.mxu0 0.0
        %3975 = vmatpush.msra.mxu0 0.0
        %3976 = vmatpush.msra.mxu0 0.0
        %3977 = vmatpush.msra.mxu0 0.0
        %3978 = vmatpush.msra.mxu0 0.0
        %3979 = vmatpush.msra.mxu0 0.0
        %3980 = vmatpush.msra.mxu0 0.0
        %3981 = vmatpush.msra.mxu0 0.0
        %3982 = vmatpush.msra.mxu0 0.0
        %3983 = vmatpush.msra.mxu0 0.0
        %v3984 = vand.u32 %v3891, 4294901760
        %3985 = vmatpush.msra.mxu0 %v3984
        %v3986 = vand.u32 %v3441, 4294901760
        %v3987 = vsub.f32 %v3441, %v3986
        %v3988 = vand.u32 %v3987, 4294901760
        %3989 = vmatmul.f32.gmra.mxu0 %v3988
        %v3990 = vpop.f32.mrf.mxu0
        %v3991 = vadd.f32 %v3967, %v3990
        %3992 = vdwg.mxu0
        %3993 = vmatpush.msra.mxu0 0.0
        %3994 = vmatpush.msra.mxu0 0.0
        %3995 = vmatpush.msra.mxu0 0.0
        %3996 = vmatpush.msra.mxu0 0.0
        %3997 = vmatpush.msra.mxu0 0.0
        %3998 = vmatpush.msra.mxu0 0.0
        %3999 = vmatpush.msra.mxu0 0.0
        %4000 = vmatpush.msra.mxu0 0.0
        %4001 = vmatpush.msra.mxu0 0.0
        %4002 = vmatpush.msra.mxu0 0.0
        %4003 = vmatpush.msra.mxu0 0.0
        %4004 = vmatpush.msra.mxu0 0.0
        %4005 = vmatpush.msra.mxu0 0.0
        %4006 = vmatpush.msra.mxu0 0.0
        %4007 = vmatpush.msra.mxu0 0.0
        %v4008 = vand.u32 %v3891, 4294901760
        %v4009 = vsub.f32 %v3891, %v4008
        %v4010 = vand.u32 %v4009, 4294901760
        %4011 = vmatpush.msra.mxu0 %v4010
        %v4012 = vand.u32 %v3441, 4294901760
        %4013 = vmatmul.f32.gmra.mxu0 %v4012
        %v4014 = vpop.f32.mrf.mxu0
        %v4015 = vadd.f32 %v3991, %v4014
        %4016 = vdwg.mxu0
        %4017 = vmatpush.msra.mxu0 0.0
        %4018 = vmatpush.msra.mxu0 0.0
        %4019 = vmatpush.msra.mxu0 0.0
        %4020 = vmatpush.msra.mxu0 0.0
        %4021 = vmatpush.msra.mxu0 0.0
        %4022 = vmatpush.msra.mxu0 0.0
        %4023 = vmatpush.msra.mxu0 0.0
        %4024 = vmatpush.msra.mxu0 0.0
        %4025 = vmatpush.msra.mxu0 0.0
        %4026 = vmatpush.msra.mxu0 0.0
        %4027 = vmatpush.msra.mxu0 0.0
        %4028 = vmatpush.msra.mxu0 0.0
        %4029 = vmatpush.msra.mxu0 0.0
        %4030 = vmatpush.msra.mxu0 0.0
        %4031 = vmatpush.msra.mxu0 0.0
        %v4032 = vand.u32 %v3891, 4294901760
        %4033 = vmatpush.msra.mxu0 %v4032
        %v4034 = vand.u32 %v3441, 4294901760
        %4035 = vmatmul.f32.gmra.mxu0 %v4034
        %v4036 = vpop.f32.mrf.mxu0
        %v4037 = vadd.f32 %v4015, %v4036
        %4038 = vdwg.mxu0
        %vm4039 = vcmask 9216
        %4040 = vst.msk [vmem:[%s247] sm:$0x3] %vm4039, %v3590
        %4041 = vst.msk [vmem:[%s247 + $0x2] sm:$0x3] %vm4039, %v3739
        %4042 = vst.msk [vmem:[%s247 + $0x4] sm:$0x3] %vm4039, %v3888
        %4043 = vst.msk [vmem:[%s247 + $0x6] sm:$0x3] %vm4039, %v4037
        %s4044 = sand.u32 %s74, 1
        %s4045 = scalar_lea.sflag [#allocation4], %s4044
        %s4046 = sand.u32 %s74, 1
        %s4047 = smul.addr %s4046, 32
        %s4048 = scalar_lea.vmem [#allocation5], %s4047
        %s4049 = sand.u32 %s102, 1
        %s4050 = scalar_lea.sflag [#allocation7], %s4049
        %s4051 = sand.u32 %s102, 1
        %s4052 = smul.addr %s4051, 16
        %s4053 = scalar_lea.vmem [#allocation6], %s4052
        %s4054 = smul.u32 4, %s29
        %p4055 = scmp.lt.s32.totalorder %s28, 1
        %s4056 = scalar_select %p4055, %s28, 1
        %p4057 = scmp.lt.s32.totalorder %s4054, 3
        %s4058 = scalar_select %p4057, %s4054, 3
        %s4059 = smul.addr %s4056, 4
        %s4060 = sadd.s32 %s4058, %s4059
        %s4061 = smul.addr %s4060, 2
        %s4062 = scalar_lea.vmem %s3, %s4061
        // Predicated region
        $region29: #{tpu_custom_call.1} parent=23 // pred_check
          %p4063 = pneg %p84
        $region30: #{tpu_custom_call.1} parent=23 // pred_check_branch
          %4065 = sbr.rel (%p4063) target = $region32
        $region31: #{tpu_custom_call.1} parent=23 // pred_region
          %s4066 = smul.u32 4, %s29
          %4068 = vsyncadd %s4045, 0
          %s4069 = smul.addr %s28, 4
          %s4070 = sadd.s32 %s4066, %s4069
          %s4071 = smul.addr %s4070, 8
          %s4072 = scalar_lea.hbm %s1, %s4071
          %s4073 = sshll.u32 %s4048, 4
          %s4074 = int_to_ptr.vmem [resolvable:$true] %s4073
          %s4075 = sshll.u32 %s4072, 4
          %s4076 = int_to_ptr.hbm [resolvable:$true] %s4075
          %4081 = dma.vmem_to_hbm [thread:$0]  %s4074, 512, %s4076, %s4045, 128, 128, 8
        $region32: #{tpu_custom_call.1} parent=23 // pred_fallthru
          _
        // Predicated region
        $region33: #{tpu_custom_call.1} parent=23 // pred_check
          %p4082 = pneg %p112
        $region34: #{tpu_custom_call.1} parent=23 // pred_check_branch
          %4084 = sbr.rel (%p4082) target = $region36
        $region35: #{tpu_custom_call.1} parent=23 // pred_region
          %s4085 = smul.u32 4, %s29
          %4087 = vsyncadd %s4050, 0
          %s4088 = smul.addr %s28, 4
          %s4089 = sadd.s32 %s4085, %s4088
          %s4090 = smul.addr %s4089, 4
          %s4091 = scalar_lea.hbm %s2, %s4090
          %s4092 = sshll.u32 %s4053, 4
          %s4093 = int_to_ptr.vmem [resolvable:$true] %s4092
          %s4094 = sshll.u32 %s4091, 4
          %s4095 = int_to_ptr.hbm [resolvable:$true] %s4094
          %4100 = dma.vmem_to_hbm [thread:$0]  %s4093, 256, %s4095, %s4050, 64, 64, 4
        $region36: #{tpu_custom_call.1} parent=23 // pred_fallthru
          _
        // Predicated region
        $region37: #{tpu_custom_call.1} parent=23 // pred_check
          %p4101 = pneg %p140
        $region38: #{tpu_custom_call.1} parent=23 // pred_check_branch
          %4103 = sbr.rel (%p4101) target = $region40
        $region39: #{tpu_custom_call.1} parent=23 // pred_region
          %s4104 = smul.u32 4, %s29
        $region40: #{tpu_custom_call.1} parent=23 // pred_fallthru
          _
      $region24: #{tpu_custom_call.1} parent=5 // pred_fallthru
        _
      %p4105 = scmp.le.s32.totalorder 2, %s19
      // Predicated region
      $region41: #{tpu_custom_call.1} parent=5 // pred_check
        %p4106 = pneg %p4105
      $region42: #{tpu_custom_call.1} parent=5 // pred_check_branch
        %4108 = sbr.rel (%p4106) target = $region44
      $region43: #{tpu_custom_call.1} parent=5 // pred_region
        %s4109 = ssub.s32 %s19, 2
        // Predicated region
        $region45: #{tpu_custom_call.1} parent=43 // pred_check
          %p4110 = pneg %p90
        $region46: #{tpu_custom_call.1} parent=43 // pred_check_branch
          %4112 = sbr.rel (%p4110) target = $region48
        $region47: #{tpu_custom_call.1} parent=43 // pred_region
          %s4113 = sand.u32 %s75, 1
          %s4114 = scalar_lea.sflag [#allocation4], %s4113
          %s4115 = sand.u32 %s75, 1
          %s4116 = smul.addr %s4115, 32
          %s4117 = scalar_lea.vmem [#allocation5], %s4116
          %4119 = dma.done %s4114, 512
        $region48: #{tpu_custom_call.1} parent=43 // pred_fallthru
          _
        // Predicated region
        $region49: #{tpu_custom_call.1} parent=43 // pred_check
          %p4120 = pneg %p118
        $region50: #{tpu_custom_call.1} parent=43 // pred_check_branch
          %4122 = sbr.rel (%p4120) target = $region52
        $region51: #{tpu_custom_call.1} parent=43 // pred_region
          %s4123 = sand.u32 %s103, 1
          %s4124 = scalar_lea.sflag [#allocation7], %s4123
          %s4125 = sand.u32 %s103, 1
          %s4126 = smul.addr %s4125, 16
          %s4127 = scalar_lea.vmem [#allocation6], %s4126
          %4129 = dma.done %s4124, 256
        $region52: #{tpu_custom_call.1} parent=43 // pred_fallthru
          _
        // Predicated region
        $region53: #{tpu_custom_call.1} parent=43 // pred_check
          %p4130 = pneg %p146
        $region54: #{tpu_custom_call.1} parent=43 // pred_check_branch
          %4132 = sbr.rel (%p4130) target = $region56
        $region55: #{tpu_custom_call.1} parent=43 // pred_region
          %s4133 = smul.u32 4, %s31
          %p4134 = scmp.lt.s32.totalorder %s30, 1
          %s4135 = scalar_select %p4134, %s30, 1
          %p4136 = scmp.lt.s32.totalorder %s4133, 3
          %s4137 = scalar_select %p4136, %s4133, 3
          %s4138 = smul.addr %s4135, 4
          %s4139 = sadd.s32 %s4137, %s4138
          %s4140 = smul.addr %s4139, 2
          %s4141 = scalar_lea.vmem %s3, %s4140
        $region56: #{tpu_custom_call.1} parent=43 // pred_fallthru
          _
      $region44: #{tpu_custom_call.1} parent=5 // pred_fallthru
        _
    $region6: #{tpu_custom_call.1} parent=1 // loop_footer
      %s23 = sadd.s32 1, %s19
    $region7: #{tpu_custom_call.1} parent=1 // loop_footer_branch
      %18 = sbr.rel target = $region3
    $region8: #{tpu_custom_call.1} parent=1 // loop_exit
      _
    %4142 = vsyncpa [#allocation3], 1
    %s4143 = scalar_lea.sflag [#allocation3], 1
    %4144 = vsyncpa %s4143, 1
    %4145 = vsyncpa [#allocation4], 1
    %s4146 = scalar_lea.sflag [#allocation4], 1
    %4147 = vsyncpa %s4146, 1
    %4148 = vsyncpa [#allocation7], 1
    %s4149 = scalar_lea.sflag [#allocation7], 1
    %4150 = vsyncpa %s4149, 1

</llo_original>
